<compile_context>
chip_gen: v5e
topology: v5e:2x2
jax: 0.10.0
libtpu: 0.0.40
codegen_flags: <defaults>
</compile_context>

<pallas_src>
import jax
import jax.numpy as jnp
from jax.experimental import pallas as pl
from jax.experimental.pallas import tpu as pltpu

HIDE = 8                  # hide_state
SEQ = 18                  # flatten gives 18*hide_state = 144 features
IN_DIM = 3 * 12           # 36
FEAT = SEQ * HIDE         # 144
MID = FEAT // 2           # 72
OUT = 3
GATES = 4 * HIDE          # 32

# Row/lane offsets inside the single packed (NROWS, 128) parameter block.
_R_WIH0 = 0               # rows   0:36,  lanes 0:32   wih0       (gate-prescaled)
_R_B0 = 40                # row    40,    lanes 0:32   b_ih0+b_hh0 (prescaled)
_R_WREC = 48              # rows  48:64,  lanes 0:64   [whh0 wih1 ; 0 whh1] (prescaled)
_R_B1 = 64                # row    64,    lanes 0:32   b_ih1+b_hh1 (prescaled)
_R_W1 = 72                # rows  72:216, lanes 0:72   linear_1 weight (144,72)
_R_W2 = 72                # rows  72:144, lanes 72:75  linear_2 weight (72,3)
_R_B1D = 216              # row   216,    lanes 0:72   linear_1 bias
_R_B2D = 216              # row   216,    lanes 72:75  linear_2 bias
_NROWS = 224


def lstm_skill_kernel(x_ref, p_ref, out_ref):
    # x_ref: (SEQ*B, IN_DIM) time-major, pre-flattened; B is a multiple of 8.
    B = x_ref.shape[0] // SEQ
    H = HIDE

    # Parameter views (one packed VMEM block -> a single prologue DMA).
    wih0 = p_ref[_R_WIH0:_R_WIH0 + IN_DIM, 0:GATES]
    b0 = p_ref[_R_B0:_R_B0 + 1, 0:GATES]
    wrec = p_ref[_R_WREC:_R_WREC + 2 * H, 0:2 * GATES]
    b1 = p_ref[_R_B1:_R_B1 + 1, 0:GATES]
    b1d = p_ref[_R_B1D:_R_B1D + 1, 0:MID]
    w2 = p_ref[_R_W2:_R_W2 + MID, MID:MID + OUT]
    b2d = p_ref[_R_B2D:_R_B2D + 1, MID:MID + OUT]

    def cell(g, c):
        # i, f, o columns were pre-scaled by 0.5 at pack time, so
        # sigmoid(x) == 0.5*tanh(x/2) + 0.5 == 0.5*tg + 0.5.
        # Exactly two dependent EUP pushes per cell: tanh(g), tanh(c_new).
        tg = jnp.tanh(g)
        s = 0.5 * tg + 0.5
        i = s[:, 0 * H:1 * H]
        f = s[:, 1 * H:2 * H]
        gg = tg[:, 2 * H:3 * H]
        o = s[:, 3 * H:4 * H]
        c_new = f * c + i * gg
        h_new = o * jnp.tanh(c_new)
        return h_new, c_new

    # Hoisted layer-0 input projection: one (SEQ*B,36)x(36,32) matmul.
    # Kept as a value (vregs), never round-tripped through scratch.
    g0_all = jnp.dot(x_ref[...], wih0, preferred_element_type=jnp.float32) + b0

    h0 = jnp.zeros((B, H), jnp.float32)
    c0 = jnp.zeros((B, H), jnp.float32)
    h1 = jnp.zeros((B, H), jnp.float32)
    c1 = jnp.zeros((B, H), jnp.float32)
    # Head accumulator replaces flatten + 18-way lane concat.
    z1 = jnp.broadcast_to(b1d, (B, MID))

    # Skewed wavefront: iteration t runs layer-0 step t and layer-1 step t-1.
    # Layer-1 step t-1 needs h0_{t-1} (the CURRENT h0) and h1_{t-2} (CURRENT h1),
    # layer-0 step t needs h0_{t-1} as well -> one block matmul feeds both:
    #   [h0 | h1] (B,16) @ [whh0 wih1 ; 0 whh1] (16,64)
    for t in range(SEQ + 1):          # static unroll: tiny fixed-length recurrence
        rec = jnp.dot(jnp.concatenate([h0, h1], axis=1), wrec,
                      preferred_element_type=jnp.float32)
        if t >= 1:                    # layer-1 cell at time step t-1
            h1, c1 = cell(rec[:, GATES:2 * GATES] + b1, c1)
            w1_t = p_ref[_R_W1 + (t - 1) * H:_R_W1 + t * H, 0:MID]
            z1 = z1 + jnp.dot(h1, w1_t, preferred_element_type=jnp.float32)
        if t < SEQ:                   # layer-0 cell at time step t
            h0, c0 = cell(g0_all[t * B:(t + 1) * B, :] + rec[:, 0:GATES], c0)

    # Dense head (dropout layers are identity in eval mode).
    z1 = jnp.maximum(z1, 0.0)
    z2 = jnp.dot(z1, w2, preferred_element_type=jnp.float32) + b2d

    # Softmax over dim=1 (exact division kept to stay within 1e-3 tolerance).
    z2 = z2 - jnp.max(z2, axis=1, keepdims=True)
    e = jnp.exp(z2)
    out_ref[...] = e / jnp.sum(e, axis=1, keepdims=True)


def pack_params(p):
    """Pack all 10 parameter arrays into ONE lane-dense (224,128) block.

    The i/f/o gate columns of the LSTM weights/biases are pre-scaled by 0.5
    so the kernel can evaluate sigmoid via the exact tanh identity.
    """
    scale = jnp.concatenate([jnp.full((2 * HIDE,), 0.5),   # i, f
                             jnp.ones((HIDE,)),            # g
                             jnp.full((HIDE,), 0.5)]       # o
                            ).astype(jnp.float32)

    wih0 = p["wih0"] * scale
    whh0 = p["whh0"] * scale
    b0 = p["b0"] * scale
    wih1 = p["wih1"] * scale
    whh1 = p["whh1"] * scale
    b1 = p["b1"] * scale

    blk = jnp.zeros((_NROWS, 128), jnp.float32)
    blk = blk.at[_R_WIH0:_R_WIH0 + IN_DIM, 0:GATES].set(wih0)
    blk = blk.at[_R_B0, 0:GATES].set(b0[0])
    # Block recurrent matrix: [whh0 | wih1 ; 0 | whh1]  (16, 64)
    blk = blk.at[_R_WREC:_R_WREC + HIDE, 0:GATES].set(whh0)
    blk = blk.at[_R_WREC:_R_WREC + HIDE, GATES:2 * GATES].set(wih1)
    blk = blk.at[_R_WREC + HIDE:_R_WREC + 2 * HIDE, GATES:2 * GATES].set(whh1)
    blk = blk.at[_R_B1, 0:GATES].set(b1[0])
    # Dense head: linear_1 (144,72)+bias in lanes 0:72, linear_2 (72,3)+bias in lanes 72:75.
    blk = blk.at[_R_W1:_R_W1 + FEAT, 0:MID].set(p["w1"])
    blk = blk.at[_R_B1D, 0:MID].set(p["b1d"][0])
    blk = blk.at[_R_W2:_R_W2 + MID, MID:MID + OUT].set(p["w2"])
    blk = blk.at[_R_B2D, MID:MID + OUT].set(p["b2d"][0])
    return blk


def lstm_skill_forward(x, param_block):
    B = x.shape[0]
    b_pad = max(8, ((B + 7) // 8) * 8)       # pad batch to full sublane groups
    if b_pad != B:
        x = jnp.pad(x, ((0, b_pad - B), (0, 0), (0, 0)))
    # Layout plumbing: time-major, pre-flattened (no in-kernel reshape).
    # TODO(synk): fold this transpose into upstream storage (keep x time-major
    # on disk / in HBM) so no pre-kernel HLO copy is needed at all.
    x_tm = jnp.transpose(x, (1, 0, 2)).reshape(SEQ * b_pad, IN_DIM).astype(jnp.float32)

    vmem = pl.BlockSpec(memory_space=pltpu.MemorySpace.VMEM)
    out = pl.pallas_call(
        lstm_skill_kernel,
        out_shape=jax.ShapeDtypeStruct((b_pad, OUT), jnp.float32),
        in_specs=[vmem, vmem],               # exactly 2 prologue DMAs: x + params
        out_specs=vmem,
    )(x_tm, param_block)
    return out[:B]
    # TODO(synk): for B >= ~16 on v7x, add a batch-parallel grid
    # (grid over batch tiles, dimension_semantics=("parallel",)) to use both
    # TensorCores; at B <= 8 the ~0.35 us per-grid-step overhead makes it a loss.


def init_params(key):
    """Deterministic init mimicking PyTorch's uniform(-1/sqrt(fan), 1/sqrt(fan))."""
    ks = jax.random.split(key, 12)
    kl = 1.0 / jnp.sqrt(HIDE)          # LSTM: 1/sqrt(hidden_size)
    k1 = 1.0 / jnp.sqrt(FEAT)          # linear_1 fan_in = 144
    k2 = 1.0 / jnp.sqrt(MID)           # linear_2 fan_in = 72

    def u(k, shape, bound):
        return jax.random.uniform(k, shape, jnp.float32, -bound, bound)

    return {
        # layer 0: input 36 -> 4*H gates
        "wih0": u(ks[0], (IN_DIM, 4 * HIDE), kl),
        "whh0": u(ks[1], (HIDE, 4 * HIDE), kl),
        "b0":   u(ks[2], (1, 4 * HIDE), kl) + u(ks[3], (1, 4 * HIDE), kl),  # b_ih + b_hh
        # layer 1: input H -> 4*H gates
        "wih1": u(ks[4], (HIDE, 4 * HIDE), kl),
        "whh1": u(ks[5], (HIDE, 4 * HIDE), kl),
        "b1":   u(ks[6], (1, 4 * HIDE), kl) + u(ks[7], (1, 4 * HIDE), kl),
        # dense head
        "w1":  u(ks[8], (FEAT, MID), k1),
        "b1d": u(ks[9], (1, MID), k1),
        "w2":  u(ks[10], (MID, OUT), k2),
        "b2d": u(ks[11], (1, OUT), k2),
    }


def reference_forward(x, p):
    """Pure-JAX reference of the same forward pass (eval-mode PyTorch semantics)."""
    B, T, _ = x.shape
    H = HIDE

    def run_layer(inp, wih, whh, b):
        h = jnp.zeros((B, H), jnp.float32)
        c = jnp.zeros((B, H), jnp.float32)
        hs = []
        for t in range(T):
            g = inp[:, t, :] @ wih + h @ whh + b
            i = jax.nn.sigmoid(g[:, :H])
            f = jax.nn.sigmoid(g[:, H:2 * H])
            gg = jnp.tanh(g[:, 2 * H:3 * H])
            o = jax.nn.sigmoid(g[:, 3 * H:])
            c = f * c + i * gg
            h = o * jnp.tanh(c)
            hs.append(h)
        return jnp.stack(hs, axis=1)

    h = run_layer(x, p["wih0"], p["whh0"], p["b0"])
    h = run_layer(h, p["wih1"], p["whh1"], p["b1"])
    feat = h.reshape(B, -1)
    z1 = jnp.maximum(feat @ p["w1"] + p["b1d"], 0.0)
    z2 = z1 @ p["w2"] + p["b2d"]
    return jax.nn.softmax(z2, axis=1)


if __name__ == "__main__":
    key = jax.random.PRNGKey(0)
    kx, kp = jax.random.split(key)

    B = 8                                # multiple of 8 -> wrapper pad is a no-op
    x = jax.random.normal(kx, (B, SEQ, IN_DIM), jnp.float32)
    params = init_params(kp)
    packed = pack_params(params)

    out = lstm_skill_forward(x, packed)
    out = jax.block_until_ready(out)

    ref = reference_forward(x, params)
    assert out.shape == (B, OUT)
    assert jnp.allclose(jnp.sum(out, axis=1), 1.0, atol=1e-5)
    assert jnp.allclose(out, ref, rtol=1e-3, atol=1e-3)

    # TODO(synk): dropout layers (incl. LSTM inter-layer dropout) are identity
    # (eval mode); training-mode stochastic dropout is not reproduced.
    print("KERNEL_OK")
</pallas_src>

<mosaic_0001>
module attributes {stable_mosaic.version = 11 : i64} {
  func.func @lstm_skill_kernel(%arg0: memref<144x36xf32, #tpu.memory_space<vmem>>, %arg1: memref<224x128xf32, #tpu.memory_space<vmem>>, %arg2: memref<8x3xf32, #tpu.memory_space<vmem>>) attributes {dimension_semantics = [], scalar_prefetch = 0 : i64, scratch_operands = 0 : i64, tpu.core_type = #tpu.core_type<tc>} {
    %c0 = arith.constant 0 : index
    %c0_0 = arith.constant 0 : index
    %0 = vector.load %arg1[%c0, %c0_0] : memref<224x128xf32, #tpu.memory_space<vmem>>, vector<36x32xf32>
    %c40 = arith.constant 40 : index
    %c0_1 = arith.constant 0 : index
    %1 = vector.load %arg1[%c40, %c0_1] : memref<224x128xf32, #tpu.memory_space<vmem>>, vector<1x32xf32>
    %c48 = arith.constant 48 : index
    %c0_2 = arith.constant 0 : index
    %2 = vector.load %arg1[%c48, %c0_2] : memref<224x128xf32, #tpu.memory_space<vmem>>, vector<16x64xf32>
    %c64 = arith.constant 64 : index
    %c0_3 = arith.constant 0 : index
    %3 = vector.load %arg1[%c64, %c0_3] : memref<224x128xf32, #tpu.memory_space<vmem>>, vector<1x32xf32>
    %c216 = arith.constant 216 : index
    %c0_4 = arith.constant 0 : index
    %4 = vector.load %arg1[%c216, %c0_4] : memref<224x128xf32, #tpu.memory_space<vmem>>, vector<1x72xf32>
    %c72 = arith.constant 72 : index
    %c72_5 = arith.constant 72 : index
    %5 = vector.load %arg1[%c72, %c72_5] : memref<224x128xf32, #tpu.memory_space<vmem>>, vector<72x3xf32>
    %c216_6 = arith.constant 216 : index
    %c72_7 = arith.constant 72 : index
    %6 = vector.load %arg1[%c216_6, %c72_7] : memref<224x128xf32, #tpu.memory_space<vmem>>, vector<1x3xf32>
    %c0_8 = arith.constant 0 : index
    %c0_9 = arith.constant 0 : index
    %7 = vector.load %arg0[%c0_8, %c0_9] : memref<144x36xf32, #tpu.memory_space<vmem>>, vector<144x36xf32>
    %cst = arith.constant dense<0.000000e+00> : vector<144x32xf32>
    %8 = tpu.matmul %7, %0, %cst {dimension_numbers = #tpu.dot_dimension_numbers<[1], [0], [0], [1], [0, 0, 1, 1], [], []>} : vector<144x36xf32>, vector<36x32xf32>, vector<144x32xf32> -> vector<144x32xf32>
    %9 = vector.broadcast %1 : vector<1x32xf32> to vector<144x32xf32>
    %10 = arith.addf %8, %9 : vector<144x32xf32>
    %cst_10 = arith.constant 0.000000e+00 : f32
    %11 = vector.broadcast %cst_10 : f32 to vector<8x8xf32>
    %cst_11 = arith.constant 0.000000e+00 : f32
    %12 = vector.broadcast %cst_11 : f32 to vector<8x8xf32>
    %cst_12 = arith.constant 0.000000e+00 : f32
    %13 = vector.broadcast %cst_12 : f32 to vector<8x8xf32>
    %cst_13 = arith.constant 0.000000e+00 : f32
    %14 = vector.broadcast %cst_13 : f32 to vector<8x8xf32>
    %15 = vector.shape_cast %4 : vector<1x72xf32> to vector<1x72xf32>
    %16 = vector.broadcast %15 : vector<1x72xf32> to vector<8x72xf32>
    %17 = tpu.concatenate %11, %13 in 1 : vector<8x8xf32>, vector<8x8xf32> -> vector<8x16xf32>
    %cst_14 = arith.constant dense<0.000000e+00> : vector<8x64xf32>
    %18 = tpu.matmul %17, %2, %cst_14 {dimension_numbers = #tpu.dot_dimension_numbers<[1], [0], [0], [1], [0, 0, 1, 1], [], []>} : vector<8x16xf32>, vector<16x64xf32>, vector<8x64xf32> -> vector<8x64xf32>
    %19 = vector.extract_strided_slice %10 {offsets = [0, 0], sizes = [8, 32], strides = [1, 1]} : vector<144x32xf32> to vector<8x32xf32>
    %20 = vector.extract_strided_slice %18 {offsets = [0, 0], sizes = [8, 32], strides = [1, 1]} : vector<8x64xf32> to vector<8x32xf32>
    %21 = arith.addf %19, %20 : vector<8x32xf32>
    %22 = math.tanh %21 : vector<8x32xf32>
    %cst_15 = arith.constant 5.000000e-01 : f32
    %23 = vector.broadcast %cst_15 : f32 to vector<8x32xf32>
    %24 = arith.mulf %23, %22 : vector<8x32xf32>
    %cst_16 = arith.constant 5.000000e-01 : f32
    %25 = vector.broadcast %cst_16 : f32 to vector<8x32xf32>
    %26 = arith.addf %24, %25 : vector<8x32xf32>
    %27 = vector.extract_strided_slice %26 {offsets = [0, 0], sizes = [8, 8], strides = [1, 1]} : vector<8x32xf32> to vector<8x8xf32>
    %28 = vector.extract_strided_slice %26 {offsets = [0, 8], sizes = [8, 8], strides = [1, 1]} : vector<8x32xf32> to vector<8x8xf32>
    %29 = vector.extract_strided_slice %22 {offsets = [0, 16], sizes = [8, 8], strides = [1, 1]} : vector<8x32xf32> to vector<8x8xf32>
    %30 = vector.extract_strided_slice %26 {offsets = [0, 24], sizes = [8, 8], strides = [1, 1]} : vector<8x32xf32> to vector<8x8xf32>
    %31 = arith.mulf %28, %12 : vector<8x8xf32>
    %32 = arith.mulf %27, %29 : vector<8x8xf32>
    %33 = arith.addf %31, %32 : vector<8x8xf32>
    %34 = math.tanh %33 : vector<8x8xf32>
    %35 = arith.mulf %30, %34 : vector<8x8xf32>
    %36 = tpu.concatenate %35, %13 in 1 : vector<8x8xf32>, vector<8x8xf32> -> vector<8x16xf32>
    %cst_17 = arith.constant dense<0.000000e+00> : vector<8x64xf32>
    %37 = tpu.matmul %36, %2, %cst_17 {dimension_numbers = #tpu.dot_dimension_numbers<[1], [0], [0], [1], [0, 0, 1, 1], [], []>} : vector<8x16xf32>, vector<16x64xf32>, vector<8x64xf32> -> vector<8x64xf32>
    %38 = vector.extract_strided_slice %37 {offsets = [0, 32], sizes = [8, 32], strides = [1, 1]} : vector<8x64xf32> to vector<8x32xf32>
    %39 = vector.broadcast %3 : vector<1x32xf32> to vector<8x32xf32>
    %40 = arith.addf %38, %39 : vector<8x32xf32>
    %41 = math.tanh %40 : vector<8x32xf32>
    %cst_18 = arith.constant 5.000000e-01 : f32
    %42 = vector.broadcast %cst_18 : f32 to vector<8x32xf32>
    %43 = arith.mulf %42, %41 : vector<8x32xf32>
    %cst_19 = arith.constant 5.000000e-01 : f32
    %44 = vector.broadcast %cst_19 : f32 to vector<8x32xf32>
    %45 = arith.addf %43, %44 : vector<8x32xf32>
    %46 = vector.extract_strided_slice %45 {offsets = [0, 0], sizes = [8, 8], strides = [1, 1]} : vector<8x32xf32> to vector<8x8xf32>
    %47 = vector.extract_strided_slice %45 {offsets = [0, 8], sizes = [8, 8], strides = [1, 1]} : vector<8x32xf32> to vector<8x8xf32>
    %48 = vector.extract_strided_slice %41 {offsets = [0, 16], sizes = [8, 8], strides = [1, 1]} : vector<8x32xf32> to vector<8x8xf32>
    %49 = vector.extract_strided_slice %45 {offsets = [0, 24], sizes = [8, 8], strides = [1, 1]} : vector<8x32xf32> to vector<8x8xf32>
    %50 = arith.mulf %47, %14 : vector<8x8xf32>
    %51 = arith.mulf %46, %48 : vector<8x8xf32>
    %52 = arith.addf %50, %51 : vector<8x8xf32>
    %53 = math.tanh %52 : vector<8x8xf32>
    %54 = arith.mulf %49, %53 : vector<8x8xf32>
    %c72_20 = arith.constant 72 : index
    %c0_21 = arith.constant 0 : index
    %55 = vector.load %arg1[%c72_20, %c0_21] : memref<224x128xf32, #tpu.memory_space<vmem>>, vector<8x72xf32>
    %cst_22 = arith.constant dense<0.000000e+00> : vector<8x72xf32>
    %56 = tpu.matmul %54, %55, %cst_22 {dimension_numbers = #tpu.dot_dimension_numbers<[1], [0], [0], [1], [0, 0, 1, 1], [], []>} : vector<8x8xf32>, vector<8x72xf32>, vector<8x72xf32> -> vector<8x72xf32>
    %57 = arith.addf %16, %56 : vector<8x72xf32>
    %58 = vector.extract_strided_slice %10 {offsets = [8, 0], sizes = [8, 32], strides = [1, 1]} : vector<144x32xf32> to vector<8x32xf32>
    %59 = vector.extract_strided_slice %37 {offsets = [0, 0], sizes = [8, 32], strides = [1, 1]} : vector<8x64xf32> to vector<8x32xf32>
    %60 = arith.addf %58, %59 : vector<8x32xf32>
    %61 = math.tanh %60 : vector<8x32xf32>
    %cst_23 = arith.constant 5.000000e-01 : f32
    %62 = vector.broadcast %cst_23 : f32 to vector<8x32xf32>
    %63 = arith.mulf %62, %61 : vector<8x32xf32>
    %cst_24 = arith.constant 5.000000e-01 : f32
    %64 = vector.broadcast %cst_24 : f32 to vector<8x32xf32>
    %65 = arith.addf %63, %64 : vector<8x32xf32>
    %66 = vector.extract_strided_slice %65 {offsets = [0, 0], sizes = [8, 8], strides = [1, 1]} : vector<8x32xf32> to vector<8x8xf32>
    %67 = vector.extract_strided_slice %65 {offsets = [0, 8], sizes = [8, 8], strides = [1, 1]} : vector<8x32xf32> to vector<8x8xf32>
    %68 = vector.extract_strided_slice %61 {offsets = [0, 16], sizes = [8, 8], strides = [1, 1]} : vector<8x32xf32> to vector<8x8xf32>
    %69 = vector.extract_strided_slice %65 {offsets = [0, 24], sizes = [8, 8], strides = [1, 1]} : vector<8x32xf32> to vector<8x8xf32>
    %70 = arith.mulf %67, %33 : vector<8x8xf32>
    %71 = arith.mulf %66, %68 : vector<8x8xf32>
    %72 = arith.addf %70, %71 : vector<8x8xf32>
    %73 = math.tanh %72 : vector<8x8xf32>
    %74 = arith.mulf %69, %73 : vector<8x8xf32>
    %75 = tpu.concatenate %74, %54 in 1 : vector<8x8xf32>, vector<8x8xf32> -> vector<8x16xf32>
    %cst_25 = arith.constant dense<0.000000e+00> : vector<8x64xf32>
    %76 = tpu.matmul %75, %2, %cst_25 {dimension_numbers = #tpu.dot_dimension_numbers<[1], [0], [0], [1], [0, 0, 1, 1], [], []>} : vector<8x16xf32>, vector<16x64xf32>, vector<8x64xf32> -> vector<8x64xf32>
    %77 = vector.extract_strided_slice %76 {offsets = [0, 32], sizes = [8, 32], strides = [1, 1]} : vector<8x64xf32> to vector<8x32xf32>
    %78 = vector.broadcast %3 : vector<1x32xf32> to vector<8x32xf32>
    %79 = arith.addf %77, %78 : vector<8x32xf32>
    %80 = math.tanh %79 : vector<8x32xf32>
    %cst_26 = arith.constant 5.000000e-01 : f32
    %81 = vector.broadcast %cst_26 : f32 to vector<8x32xf32>
    %82 = arith.mulf %81, %80 : vector<8x32xf32>
    %cst_27 = arith.constant 5.000000e-01 : f32
    %83 = vector.broadcast %cst_27 : f32 to vector<8x32xf32>
    %84 = arith.addf %82, %83 : vector<8x32xf32>
    %85 = vector.extract_strided_slice %84 {offsets = [0, 0], sizes = [8, 8], strides = [1, 1]} : vector<8x32xf32> to vector<8x8xf32>
    %86 = vector.extract_strided_slice %84 {offsets = [0, 8], sizes = [8, 8], strides = [1, 1]} : vector<8x32xf32> to vector<8x8xf32>
    %87 = vector.extract_strided_slice %80 {offsets = [0, 16], sizes = [8, 8], strides = [1, 1]} : vector<8x32xf32> to vector<8x8xf32>
    %88 = vector.extract_strided_slice %84 {offsets = [0, 24], sizes = [8, 8], strides = [1, 1]} : vector<8x32xf32> to vector<8x8xf32>
    %89 = arith.mulf %86, %52 : vector<8x8xf32>
    %90 = arith.mulf %85, %87 : vector<8x8xf32>
    %91 = arith.addf %89, %90 : vector<8x8xf32>
    %92 = math.tanh %91 : vector<8x8xf32>
    %93 = arith.mulf %88, %92 : vector<8x8xf32>
    %c80 = arith.constant 80 : index
    %c0_28 = arith.constant 0 : index
    %94 = vector.load %arg1[%c80, %c0_28] : memref<224x128xf32, #tpu.memory_space<vmem>>, vector<8x72xf32>
    %cst_29 = arith.constant dense<0.000000e+00> : vector<8x72xf32>
    %95 = tpu.matmul %93, %94, %cst_29 {dimension_numbers = #tpu.dot_dimension_numbers<[1], [0], [0], [1], [0, 0, 1, 1], [], []>} : vector<8x8xf32>, vector<8x72xf32>, vector<8x72xf32> -> vector<8x72xf32>
    %96 = arith.addf %57, %95 : vector<8x72xf32>
    %97 = vector.extract_strided_slice %10 {offsets = [16, 0], sizes = [8, 32], strides = [1, 1]} : vector<144x32xf32> to vector<8x32xf32>
    %98 = vector.extract_strided_slice %76 {offsets = [0, 0], sizes = [8, 32], strides = [1, 1]} : vector<8x64xf32> to vector<8x32xf32>
    %99 = arith.addf %97, %98 : vector<8x32xf32>
    %100 = math.tanh %99 : vector<8x32xf32>
    %cst_30 = arith.constant 5.000000e-01 : f32
    %101 = vector.broadcast %cst_30 : f32 to vector<8x32xf32>
    %102 = arith.mulf %101, %100 : vector<8x32xf32>
    %cst_31 = arith.constant 5.000000e-01 : f32
    %103 = vector.broadcast %cst_31 : f32 to vector<8x32xf32>
    %104 = arith.addf %102, %103 : vector<8x32xf32>
    %105 = vector.extract_strided_slice %104 {offsets = [0, 0], sizes = [8, 8], strides = [1, 1]} : vector<8x32xf32> to vector<8x8xf32>
    %106 = vector.extract_strided_slice %104 {offsets = [0, 8], sizes = [8, 8], strides = [1, 1]} : vector<8x32xf32> to vector<8x8xf32>
    %107 = vector.extract_strided_slice %100 {offsets = [0, 16], sizes = [8, 8], strides = [1, 1]} : vector<8x32xf32> to vector<8x8xf32>
    %108 = vector.extract_strided_slice %104 {offsets = [0, 24], sizes = [8, 8], strides = [1, 1]} : vector<8x32xf32> to vector<8x8xf32>
    %109 = arith.mulf %106, %72 : vector<8x8xf32>
    %110 = arith.mulf %105, %107 : vector<8x8xf32>
    %111 = arith.addf %109, %110 : vector<8x8xf32>
    %112 = math.tanh %111 : vector<8x8xf32>
    %113 = arith.mulf %108, %112 : vector<8x8xf32>
    %114 = tpu.concatenate %113, %93 in 1 : vector<8x8xf32>, vector<8x8xf32> -> vector<8x16xf32>
    %cst_32 = arith.constant dense<0.000000e+00> : vector<8x64xf32>
    %115 = tpu.matmul %114, %2, %cst_32 {dimension_numbers = #tpu.dot_dimension_numbers<[1], [0], [0], [1], [0, 0, 1, 1], [], []>} : vector<8x16xf32>, vector<16x64xf32>, vector<8x64xf32> -> vector<8x64xf32>
    %116 = vector.extract_strided_slice %115 {offsets = [0, 32], sizes = [8, 32], strides = [1, 1]} : vector<8x64xf32> to vector<8x32xf32>
    %117 = vector.broadcast %3 : vector<1x32xf32> to vector<8x32xf32>
    %118 = arith.addf %116, %117 : vector<8x32xf32>
    %119 = math.tanh %118 : vector<8x32xf32>
    %cst_33 = arith.constant 5.000000e-01 : f32
    %120 = vector.broadcast %cst_33 : f32 to vector<8x32xf32>
    %121 = arith.mulf %120, %119 : vector<8x32xf32>
    %cst_34 = arith.constant 5.000000e-01 : f32
    %122 = vector.broadcast %cst_34 : f32 to vector<8x32xf32>
    %123 = arith.addf %121, %122 : vector<8x32xf32>
    %124 = vector.extract_strided_slice %123 {offsets = [0, 0], sizes = [8, 8], strides = [1, 1]} : vector<8x32xf32> to vector<8x8xf32>
    %125 = vector.extract_strided_slice %123 {offsets = [0, 8], sizes = [8, 8], strides = [1, 1]} : vector<8x32xf32> to vector<8x8xf32>
    %126 = vector.extract_strided_slice %119 {offsets = [0, 16], sizes = [8, 8], strides = [1, 1]} : vector<8x32xf32> to vector<8x8xf32>
    %127 = vector.extract_strided_slice %123 {offsets = [0, 24], sizes = [8, 8], strides = [1, 1]} : vector<8x32xf32> to vector<8x8xf32>
    %128 = arith.mulf %125, %91 : vector<8x8xf32>
    %129 = arith.mulf %124, %126 : vector<8x8xf32>
    %130 = arith.addf %128, %129 : vector<8x8xf32>
    %131 = math.tanh %130 : vector<8x8xf32>
    %132 = arith.mulf %127, %131 : vector<8x8xf32>
    %c88 = arith.constant 88 : index
    %c0_35 = arith.constant 0 : index
    %133 = vector.load %arg1[%c88, %c0_35] : memref<224x128xf32, #tpu.memory_space<vmem>>, vector<8x72xf32>
    %cst_36 = arith.constant dense<0.000000e+00> : vector<8x72xf32>
    %134 = tpu.matmul %132, %133, %cst_36 {dimension_numbers = #tpu.dot_dimension_numbers<[1], [0], [0], [1], [0, 0, 1, 1], [], []>} : vector<8x8xf32>, vector<8x72xf32>, vector<8x72xf32> -> vector<8x72xf32>
    %135 = arith.addf %96, %134 : vector<8x72xf32>
    %136 = vector.extract_strided_slice %10 {offsets = [24, 0], sizes = [8, 32], strides = [1, 1]} : vector<144x32xf32> to vector<8x32xf32>
    %137 = vector.extract_strided_slice %115 {offsets = [0, 0], sizes = [8, 32], strides = [1, 1]} : vector<8x64xf32> to vector<8x32xf32>
    %138 = arith.addf %136, %137 : vector<8x32xf32>
    %139 = math.tanh %138 : vector<8x32xf32>
    %cst_37 = arith.constant 5.000000e-01 : f32
    %140 = vector.broadcast %cst_37 : f32 to vector<8x32xf32>
    %141 = arith.mulf %140, %139 : vector<8x32xf32>
    %cst_38 = arith.constant 5.000000e-01 : f32
    %142 = vector.broadcast %cst_38 : f32 to vector<8x32xf32>
    %143 = arith.addf %141, %142 : vector<8x32xf32>
    %144 = vector.extract_strided_slice %143 {offsets = [0, 0], sizes = [8, 8], strides = [1, 1]} : vector<8x32xf32> to vector<8x8xf32>
    %145 = vector.extract_strided_slice %143 {offsets = [0, 8], sizes = [8, 8], strides = [1, 1]} : vector<8x32xf32> to vector<8x8xf32>
    %146 = vector.extract_strided_slice %139 {offsets = [0, 16], sizes = [8, 8], strides = [1, 1]} : vector<8x32xf32> to vector<8x8xf32>
    %147 = vector.extract_strided_slice %143 {offsets = [0, 24], sizes = [8, 8], strides = [1, 1]} : vector<8x32xf32> to vector<8x8xf32>
    %148 = arith.mulf %145, %111 : vector<8x8xf32>
    %149 = arith.mulf %144, %146 : vector<8x8xf32>
    %150 = arith.addf %148, %149 : vector<8x8xf32>
    %151 = math.tanh %150 : vector<8x8xf32>
    %152 = arith.mulf %147, %151 : vector<8x8xf32>
    %153 = tpu.concatenate %152, %132 in 1 : vector<8x8xf32>, vector<8x8xf32> -> vector<8x16xf32>
    %cst_39 = arith.constant dense<0.000000e+00> : vector<8x64xf32>
    %154 = tpu.matmul %153, %2, %cst_39 {dimension_numbers = #tpu.dot_dimension_numbers<[1], [0], [0], [1], [0, 0, 1, 1], [], []>} : vector<8x16xf32>, vector<16x64xf32>, vector<8x64xf32> -> vector<8x64xf32>
    %155 = vector.extract_strided_slice %154 {offsets = [0, 32], sizes = [8, 32], strides = [1, 1]} : vector<8x64xf32> to vector<8x32xf32>
    %156 = vector.broadcast %3 : vector<1x32xf32> to vector<8x32xf32>
    %157 = arith.addf %155, %156 : vector<8x32xf32>
    %158 = math.tanh %157 : vector<8x32xf32>
    %cst_40 = arith.constant 5.000000e-01 : f32
    %159 = vector.broadcast %cst_40 : f32 to vector<8x32xf32>
    %160 = arith.mulf %159, %158 : vector<8x32xf32>
    %cst_41 = arith.constant 5.000000e-01 : f32
    %161 = vector.broadcast %cst_41 : f32 to vector<8x32xf32>
    %162 = arith.addf %160, %161 : vector<8x32xf32>
    %163 = vector.extract_strided_slice %162 {offsets = [0, 0], sizes = [8, 8], strides = [1, 1]} : vector<8x32xf32> to vector<8x8xf32>
    %164 = vector.extract_strided_slice %162 {offsets = [0, 8], sizes = [8, 8], strides = [1, 1]} : vector<8x32xf32> to vector<8x8xf32>
    %165 = vector.extract_strided_slice %158 {offsets = [0, 16], sizes = [8, 8], strides = [1, 1]} : vector<8x32xf32> to vector<8x8xf32>
    %166 = vector.extract_strided_slice %162 {offsets = [0, 24], sizes = [8, 8], strides = [1, 1]} : vector<8x32xf32> to vector<8x8xf32>
    %167 = arith.mulf %164, %130 : vector<8x8xf32>
    %168 = arith.mulf %163, %165 : vector<8x8xf32>
    %169 = arith.addf %167, %168 : vector<8x8xf32>
    %170 = math.tanh %169 : vector<8x8xf32>
    %171 = arith.mulf %166, %170 : vector<8x8xf32>
    %c96 = arith.constant 96 : index
    %c0_42 = arith.constant 0 : index
    %172 = vector.load %arg1[%c96, %c0_42] : memref<224x128xf32, #tpu.memory_space<vmem>>, vector<8x72xf32>
    %cst_43 = arith.constant dense<0.000000e+00> : vector<8x72xf32>
    %173 = tpu.matmul %171, %172, %cst_43 {dimension_numbers = #tpu.dot_dimension_numbers<[1], [0], [0], [1], [0, 0, 1, 1], [], []>} : vector<8x8xf32>, vector<8x72xf32>, vector<8x72xf32> -> vector<8x72xf32>
    %174 = arith.addf %135, %173 : vector<8x72xf32>
    %175 = vector.extract_strided_slice %10 {offsets = [32, 0], sizes = [8, 32], strides = [1, 1]} : vector<144x32xf32> to vector<8x32xf32>
    %176 = vector.extract_strided_slice %154 {offsets = [0, 0], sizes = [8, 32], strides = [1, 1]} : vector<8x64xf32> to vector<8x32xf32>
    %177 = arith.addf %175, %176 : vector<8x32xf32>
    %178 = math.tanh %177 : vector<8x32xf32>
    %cst_44 = arith.constant 5.000000e-01 : f32
    %179 = vector.broadcast %cst_44 : f32 to vector<8x32xf32>
    %180 = arith.mulf %179, %178 : vector<8x32xf32>
    %cst_45 = arith.constant 5.000000e-01 : f32
    %181 = vector.broadcast %cst_45 : f32 to vector<8x32xf32>
    %182 = arith.addf %180, %181 : vector<8x32xf32>
    %183 = vector.extract_strided_slice %182 {offsets = [0, 0], sizes = [8, 8], strides = [1, 1]} : vector<8x32xf32> to vector<8x8xf32>
    %184 = vector.extract_strided_slice %182 {offsets = [0, 8], sizes = [8, 8], strides = [1, 1]} : vector<8x32xf32> to vector<8x8xf32>
    %185 = vector.extract_strided_slice %178 {offsets = [0, 16], sizes = [8, 8], strides = [1, 1]} : vector<8x32xf32> to vector<8x8xf32>
    %186 = vector.extract_strided_slice %182 {offsets = [0, 24], sizes = [8, 8], strides = [1, 1]} : vector<8x32xf32> to vector<8x8xf32>
    %187 = arith.mulf %184, %150 : vector<8x8xf32>
    %188 = arith.mulf %183, %185 : vector<8x8xf32>
    %189 = arith.addf %187, %188 : vector<8x8xf32>
    %190 = math.tanh %189 : vector<8x8xf32>
    %191 = arith.mulf %186, %190 : vector<8x8xf32>
    %192 = tpu.concatenate %191, %171 in 1 : vector<8x8xf32>, vector<8x8xf32> -> vector<8x16xf32>
    %cst_46 = arith.constant dense<0.000000e+00> : vector<8x64xf32>
    %193 = tpu.matmul %192, %2, %cst_46 {dimension_numbers = #tpu.dot_dimension_numbers<[1], [0], [0], [1], [0, 0, 1, 1], [], []>} : vector<8x16xf32>, vector<16x64xf32>, vector<8x64xf32> -> vector<8x64xf32>
    %194 = vector.extract_strided_slice %193 {offsets = [0, 32], sizes = [8, 32], strides = [1, 1]} : vector<8x64xf32> to vector<8x32xf32>
    %195 = vector.broadcast %3 : vector<1x32xf32> to vector<8x32xf32>
    %196 = arith.addf %194, %195 : vector<8x32xf32>
    %197 = math.tanh %196 : vector<8x32xf32>
    %cst_47 = arith.constant 5.000000e-01 : f32
    %198 = vector.broadcast %cst_47 : f32 to vector<8x32xf32>
    %199 = arith.mulf %198, %197 : vector<8x32xf32>
    %cst_48 = arith.constant 5.000000e-01 : f32
    %200 = vector.broadcast %cst_48 : f32 to vector<8x32xf32>
    %201 = arith.addf %199, %200 : vector<8x32xf32>
    %202 = vector.extract_strided_slice %201 {offsets = [0, 0], sizes = [8, 8], strides = [1, 1]} : vector<8x32xf32> to vector<8x8xf32>
    %203 = vector.extract_strided_slice %201 {offsets = [0, 8], sizes = [8, 8], strides = [1, 1]} : vector<8x32xf32> to vector<8x8xf32>
    %204 = vector.extract_strided_slice %197 {offsets = [0, 16], sizes = [8, 8], strides = [1, 1]} : vector<8x32xf32> to vector<8x8xf32>
    %205 = vector.extract_strided_slice %201 {offsets = [0, 24], sizes = [8, 8], strides = [1, 1]} : vector<8x32xf32> to vector<8x8xf32>
    %206 = arith.mulf %203, %169 : vector<8x8xf32>
    %207 = arith.mulf %202, %204 : vector<8x8xf32>
    %208 = arith.addf %206, %207 : vector<8x8xf32>
    %209 = math.tanh %208 : vector<8x8xf32>
    %210 = arith.mulf %205, %209 : vector<8x8xf32>
    %c104 = arith.constant 104 : index
    %c0_49 = arith.constant 0 : index
    %211 = vector.load %arg1[%c104, %c0_49] : memref<224x128xf32, #tpu.memory_space<vmem>>, vector<8x72xf32>
    %cst_50 = arith.constant dense<0.000000e+00> : vector<8x72xf32>
    %212 = tpu.matmul %210, %211, %cst_50 {dimension_numbers = #tpu.dot_dimension_numbers<[1], [0], [0], [1], [0, 0, 1, 1], [], []>} : vector<8x8xf32>, vector<8x72xf32>, vector<8x72xf32> -> vector<8x72xf32>
    %213 = arith.addf %174, %212 : vector<8x72xf32>
    %214 = vector.extract_strided_slice %10 {offsets = [40, 0], sizes = [8, 32], strides = [1, 1]} : vector<144x32xf32> to vector<8x32xf32>
    %215 = vector.extract_strided_slice %193 {offsets = [0, 0], sizes = [8, 32], strides = [1, 1]} : vector<8x64xf32> to vector<8x32xf32>
    %216 = arith.addf %214, %215 : vector<8x32xf32>
    %217 = math.tanh %216 : vector<8x32xf32>
    %cst_51 = arith.constant 5.000000e-01 : f32
    %218 = vector.broadcast %cst_51 : f32 to vector<8x32xf32>
    %219 = arith.mulf %218, %217 : vector<8x32xf32>
    %cst_52 = arith.constant 5.000000e-01 : f32
    %220 = vector.broadcast %cst_52 : f32 to vector<8x32xf32>
    %221 = arith.addf %219, %220 : vector<8x32xf32>
    %222 = vector.extract_strided_slice %221 {offsets = [0, 0], sizes = [8, 8], strides = [1, 1]} : vector<8x32xf32> to vector<8x8xf32>
    %223 = vector.extract_strided_slice %221 {offsets = [0, 8], sizes = [8, 8], strides = [1, 1]} : vector<8x32xf32> to vector<8x8xf32>
    %224 = vector.extract_strided_slice %217 {offsets = [0, 16], sizes = [8, 8], strides = [1, 1]} : vector<8x32xf32> to vector<8x8xf32>
    %225 = vector.extract_strided_slice %221 {offsets = [0, 24], sizes = [8, 8], strides = [1, 1]} : vector<8x32xf32> to vector<8x8xf32>
    %226 = arith.mulf %223, %189 : vector<8x8xf32>
    %227 = arith.mulf %222, %224 : vector<8x8xf32>
    %228 = arith.addf %226, %227 : vector<8x8xf32>
    %229 = math.tanh %228 : vector<8x8xf32>
    %230 = arith.mulf %225, %229 : vector<8x8xf32>
    %231 = tpu.concatenate %230, %210 in 1 : vector<8x8xf32>, vector<8x8xf32> -> vector<8x16xf32>
    %cst_53 = arith.constant dense<0.000000e+00> : vector<8x64xf32>
    %232 = tpu.matmul %231, %2, %cst_53 {dimension_numbers = #tpu.dot_dimension_numbers<[1], [0], [0], [1], [0, 0, 1, 1], [], []>} : vector<8x16xf32>, vector<16x64xf32>, vector<8x64xf32> -> vector<8x64xf32>
    %233 = vector.extract_strided_slice %232 {offsets = [0, 32], sizes = [8, 32], strides = [1, 1]} : vector<8x64xf32> to vector<8x32xf32>
    %234 = vector.broadcast %3 : vector<1x32xf32> to vector<8x32xf32>
    %235 = arith.addf %233, %234 : vector<8x32xf32>
    %236 = math.tanh %235 : vector<8x32xf32>
    %cst_54 = arith.constant 5.000000e-01 : f32
    %237 = vector.broadcast %cst_54 : f32 to vector<8x32xf32>
    %238 = arith.mulf %237, %236 : vector<8x32xf32>
    %cst_55 = arith.constant 5.000000e-01 : f32
    %239 = vector.broadcast %cst_55 : f32 to vector<8x32xf32>
    %240 = arith.addf %238, %239 : vector<8x32xf32>
    %241 = vector.extract_strided_slice %240 {offsets = [0, 0], sizes = [8, 8], strides = [1, 1]} : vector<8x32xf32> to vector<8x8xf32>
    %242 = vector.extract_strided_slice %240 {offsets = [0, 8], sizes = [8, 8], strides = [1, 1]} : vector<8x32xf32> to vector<8x8xf32>
    %243 = vector.extract_strided_slice %236 {offsets = [0, 16], sizes = [8, 8], strides = [1, 1]} : vector<8x32xf32> to vector<8x8xf32>
    %244 = vector.extract_strided_slice %240 {offsets = [0, 24], sizes = [8, 8], strides = [1, 1]} : vector<8x32xf32> to vector<8x8xf32>
    %245 = arith.mulf %242, %208 : vector<8x8xf32>
    %246 = arith.mulf %241, %243 : vector<8x8xf32>
    %247 = arith.addf %245, %246 : vector<8x8xf32>
    %248 = math.tanh %247 : vector<8x8xf32>
    %249 = arith.mulf %244, %248 : vector<8x8xf32>
    %c112 = arith.constant 112 : index
    %c0_56 = arith.constant 0 : index
    %250 = vector.load %arg1[%c112, %c0_56] : memref<224x128xf32, #tpu.memory_space<vmem>>, vector<8x72xf32>
    %cst_57 = arith.constant dense<0.000000e+00> : vector<8x72xf32>
    %251 = tpu.matmul %249, %250, %cst_57 {dimension_numbers = #tpu.dot_dimension_numbers<[1], [0], [0], [1], [0, 0, 1, 1], [], []>} : vector<8x8xf32>, vector<8x72xf32>, vector<8x72xf32> -> vector<8x72xf32>
    %252 = arith.addf %213, %251 : vector<8x72xf32>
    %253 = vector.extract_strided_slice %10 {offsets = [48, 0], sizes = [8, 32], strides = [1, 1]} : vector<144x32xf32> to vector<8x32xf32>
    %254 = vector.extract_strided_slice %232 {offsets = [0, 0], sizes = [8, 32], strides = [1, 1]} : vector<8x64xf32> to vector<8x32xf32>
    %255 = arith.addf %253, %254 : vector<8x32xf32>
    %256 = math.tanh %255 : vector<8x32xf32>
    %cst_58 = arith.constant 5.000000e-01 : f32
    %257 = vector.broadcast %cst_58 : f32 to vector<8x32xf32>
    %258 = arith.mulf %257, %256 : vector<8x32xf32>
    %cst_59 = arith.constant 5.000000e-01 : f32
    %259 = vector.broadcast %cst_59 : f32 to vector<8x32xf32>
    %260 = arith.addf %258, %259 : vector<8x32xf32>
    %261 = vector.extract_strided_slice %260 {offsets = [0, 0], sizes = [8, 8], strides = [1, 1]} : vector<8x32xf32> to vector<8x8xf32>
    %262 = vector.extract_strided_slice %260 {offsets = [0, 8], sizes = [8, 8], strides = [1, 1]} : vector<8x32xf32> to vector<8x8xf32>
    %263 = vector.extract_strided_slice %256 {offsets = [0, 16], sizes = [8, 8], strides = [1, 1]} : vector<8x32xf32> to vector<8x8xf32>
    %264 = vector.extract_strided_slice %260 {offsets = [0, 24], sizes = [8, 8], strides = [1, 1]} : vector<8x32xf32> to vector<8x8xf32>
    %265 = arith.mulf %262, %228 : vector<8x8xf32>
    %266 = arith.mulf %261, %263 : vector<8x8xf32>
    %267 = arith.addf %265, %266 : vector<8x8xf32>
    %268 = math.tanh %267 : vector<8x8xf32>
    %269 = arith.mulf %264, %268 : vector<8x8xf32>
    %270 = tpu.concatenate %269, %249 in 1 : vector<8x8xf32>, vector<8x8xf32> -> vector<8x16xf32>
    %cst_60 = arith.constant dense<0.000000e+00> : vector<8x64xf32>
    %271 = tpu.matmul %270, %2, %cst_60 {dimension_numbers = #tpu.dot_dimension_numbers<[1], [0], [0], [1], [0, 0, 1, 1], [], []>} : vector<8x16xf32>, vector<16x64xf32>, vector<8x64xf32> -> vector<8x64xf32>
    %272 = vector.extract_strided_slice %271 {offsets = [0, 32], sizes = [8, 32], strides = [1, 1]} : vector<8x64xf32> to vector<8x32xf32>
    %273 = vector.broadcast %3 : vector<1x32xf32> to vector<8x32xf32>
    %274 = arith.addf %272, %273 : vector<8x32xf32>
    %275 = math.tanh %274 : vector<8x32xf32>
    %cst_61 = arith.constant 5.000000e-01 : f32
    %276 = vector.broadcast %cst_61 : f32 to vector<8x32xf32>
    %277 = arith.mulf %276, %275 : vector<8x32xf32>
    %cst_62 = arith.constant 5.000000e-01 : f32
    %278 = vector.broadcast %cst_62 : f32 to vector<8x32xf32>
    %279 = arith.addf %277, %278 : vector<8x32xf32>
    %280 = vector.extract_strided_slice %279 {offsets = [0, 0], sizes = [8, 8], strides = [1, 1]} : vector<8x32xf32> to vector<8x8xf32>
    %281 = vector.extract_strided_slice %279 {offsets = [0, 8], sizes = [8, 8], strides = [1, 1]} : vector<8x32xf32> to vector<8x8xf32>
    %282 = vector.extract_strided_slice %275 {offsets = [0, 16], sizes = [8, 8], strides = [1, 1]} : vector<8x32xf32> to vector<8x8xf32>
    %283 = vector.extract_strided_slice %279 {offsets = [0, 24], sizes = [8, 8], strides = [1, 1]} : vector<8x32xf32> to vector<8x8xf32>
    %284 = arith.mulf %281, %247 : vector<8x8xf32>
    %285 = arith.mulf %280, %282 : vector<8x8xf32>
    %286 = arith.addf %284, %285 : vector<8x8xf32>
    %287 = math.tanh %286 : vector<8x8xf32>
    %288 = arith.mulf %283, %287 : vector<8x8xf32>
    %c120 = arith.constant 120 : index
    %c0_63 = arith.constant 0 : index
    %289 = vector.load %arg1[%c120, %c0_63] : memref<224x128xf32, #tpu.memory_space<vmem>>, vector<8x72xf32>
    %cst_64 = arith.constant dense<0.000000e+00> : vector<8x72xf32>
    %290 = tpu.matmul %288, %289, %cst_64 {dimension_numbers = #tpu.dot_dimension_numbers<[1], [0], [0], [1], [0, 0, 1, 1], [], []>} : vector<8x8xf32>, vector<8x72xf32>, vector<8x72xf32> -> vector<8x72xf32>
    %291 = arith.addf %252, %290 : vector<8x72xf32>
    %292 = vector.extract_strided_slice %10 {offsets = [56, 0], sizes = [8, 32], strides = [1, 1]} : vector<144x32xf32> to vector<8x32xf32>
    %293 = vector.extract_strided_slice %271 {offsets = [0, 0], sizes = [8, 32], strides = [1, 1]} : vector<8x64xf32> to vector<8x32xf32>
    %294 = arith.addf %292, %293 : vector<8x32xf32>
    %295 = math.tanh %294 : vector<8x32xf32>
    %cst_65 = arith.constant 5.000000e-01 : f32
    %296 = vector.broadcast %cst_65 : f32 to vector<8x32xf32>
    %297 = arith.mulf %296, %295 : vector<8x32xf32>
    %cst_66 = arith.constant 5.000000e-01 : f32
    %298 = vector.broadcast %cst_66 : f32 to vector<8x32xf32>
    %299 = arith.addf %297, %298 : vector<8x32xf32>
    %300 = vector.extract_strided_slice %299 {offsets = [0, 0], sizes = [8, 8], strides = [1, 1]} : vector<8x32xf32> to vector<8x8xf32>
    %301 = vector.extract_strided_slice %299 {offsets = [0, 8], sizes = [8, 8], strides = [1, 1]} : vector<8x32xf32> to vector<8x8xf32>
    %302 = vector.extract_strided_slice %295 {offsets = [0, 16], sizes = [8, 8], strides = [1, 1]} : vector<8x32xf32> to vector<8x8xf32>
    %303 = vector.extract_strided_slice %299 {offsets = [0, 24], sizes = [8, 8], strides = [1, 1]} : vector<8x32xf32> to vector<8x8xf32>
    %304 = arith.mulf %301, %267 : vector<8x8xf32>
    %305 = arith.mulf %300, %302 : vector<8x8xf32>
    %306 = arith.addf %304, %305 : vector<8x8xf32>
    %307 = math.tanh %306 : vector<8x8xf32>
    %308 = arith.mulf %303, %307 : vector<8x8xf32>
    %309 = tpu.concatenate %308, %288 in 1 : vector<8x8xf32>, vector<8x8xf32> -> vector<8x16xf32>
    %cst_67 = arith.constant dense<0.000000e+00> : vector<8x64xf32>
    %310 = tpu.matmul %309, %2, %cst_67 {dimension_numbers = #tpu.dot_dimension_numbers<[1], [0], [0], [1], [0, 0, 1, 1], [], []>} : vector<8x16xf32>, vector<16x64xf32>, vector<8x64xf32> -> vector<8x64xf32>
    %311 = vector.extract_strided_slice %310 {offsets = [0, 32], sizes = [8, 32], strides = [1, 1]} : vector<8x64xf32> to vector<8x32xf32>
    %312 = vector.broadcast %3 : vector<1x32xf32> to vector<8x32xf32>
    %313 = arith.addf %311, %312 : vector<8x32xf32>
    %314 = math.tanh %313 : vector<8x32xf32>
    %cst_68 = arith.constant 5.000000e-01 : f32
    %315 = vector.broadcast %cst_68 : f32 to vector<8x32xf32>
    %316 = arith.mulf %315, %314 : vector<8x32xf32>
    %cst_69 = arith.constant 5.000000e-01 : f32
    %317 = vector.broadcast %cst_69 : f32 to vector<8x32xf32>
    %318 = arith.addf %316, %317 : vector<8x32xf32>
    %319 = vector.extract_strided_slice %318 {offsets = [0, 0], sizes = [8, 8], strides = [1, 1]} : vector<8x32xf32> to vector<8x8xf32>
    %320 = vector.extract_strided_slice %318 {offsets = [0, 8], sizes = [8, 8], strides = [1, 1]} : vector<8x32xf32> to vector<8x8xf32>
    %321 = vector.extract_strided_slice %314 {offsets = [0, 16], sizes = [8, 8], strides = [1, 1]} : vector<8x32xf32> to vector<8x8xf32>
    %322 = vector.extract_strided_slice %318 {offsets = [0, 24], sizes = [8, 8], strides = [1, 1]} : vector<8x32xf32> to vector<8x8xf32>
    %323 = arith.mulf %320, %286 : vector<8x8xf32>
    %324 = arith.mulf %319, %321 : vector<8x8xf32>
    %325 = arith.addf %323, %324 : vector<8x8xf32>
    %326 = math.tanh %325 : vector<8x8xf32>
    %327 = arith.mulf %322, %326 : vector<8x8xf32>
    %c128 = arith.constant 128 : index
    %c0_70 = arith.constant 0 : index
    %328 = vector.load %arg1[%c128, %c0_70] : memref<224x128xf32, #tpu.memory_space<vmem>>, vector<8x72xf32>
    %cst_71 = arith.constant dense<0.000000e+00> : vector<8x72xf32>
    %329 = tpu.matmul %327, %328, %cst_71 {dimension_numbers = #tpu.dot_dimension_numbers<[1], [0], [0], [1], [0, 0, 1, 1], [], []>} : vector<8x8xf32>, vector<8x72xf32>, vector<8x72xf32> -> vector<8x72xf32>
    %330 = arith.addf %291, %329 : vector<8x72xf32>
    %331 = vector.extract_strided_slice %10 {offsets = [64, 0], sizes = [8, 32], strides = [1, 1]} : vector<144x32xf32> to vector<8x32xf32>
    %332 = vector.extract_strided_slice %310 {offsets = [0, 0], sizes = [8, 32], strides = [1, 1]} : vector<8x64xf32> to vector<8x32xf32>
    %333 = arith.addf %331, %332 : vector<8x32xf32>
    %334 = math.tanh %333 : vector<8x32xf32>
    %cst_72 = arith.constant 5.000000e-01 : f32
    %335 = vector.broadcast %cst_72 : f32 to vector<8x32xf32>
    %336 = arith.mulf %335, %334 : vector<8x32xf32>
    %cst_73 = arith.constant 5.000000e-01 : f32
    %337 = vector.broadcast %cst_73 : f32 to vector<8x32xf32>
    %338 = arith.addf %336, %337 : vector<8x32xf32>
    %339 = vector.extract_strided_slice %338 {offsets = [0, 0], sizes = [8, 8], strides = [1, 1]} : vector<8x32xf32> to vector<8x8xf32>
    %340 = vector.extract_strided_slice %338 {offsets = [0, 8], sizes = [8, 8], strides = [1, 1]} : vector<8x32xf32> to vector<8x8xf32>
    %341 = vector.extract_strided_slice %334 {offsets = [0, 16], sizes = [8, 8], strides = [1, 1]} : vector<8x32xf32> to vector<8x8xf32>
    %342 = vector.extract_strided_slice %338 {offsets = [0, 24], sizes = [8, 8], strides = [1, 1]} : vector<8x32xf32> to vector<8x8xf32>
    %343 = arith.mulf %340, %306 : vector<8x8xf32>
    %344 = arith.mulf %339, %341 : vector<8x8xf32>
    %345 = arith.addf %343, %344 : vector<8x8xf32>
    %346 = math.tanh %345 : vector<8x8xf32>
    %347 = arith.mulf %342, %346 : vector<8x8xf32>
    %348 = tpu.concatenate %347, %327 in 1 : vector<8x8xf32>, vector<8x8xf32> -> vector<8x16xf32>
    %cst_74 = arith.constant dense<0.000000e+00> : vector<8x64xf32>
    %349 = tpu.matmul %348, %2, %cst_74 {dimension_numbers = #tpu.dot_dimension_numbers<[1], [0], [0], [1], [0, 0, 1, 1], [], []>} : vector<8x16xf32>, vector<16x64xf32>, vector<8x64xf32> -> vector<8x64xf32>
    %350 = vector.extract_strided_slice %349 {offsets = [0, 32], sizes = [8, 32], strides = [1, 1]} : vector<8x64xf32> to vector<8x32xf32>
    %351 = vector.broadcast %3 : vector<1x32xf32> to vector<8x32xf32>
    %352 = arith.addf %350, %351 : vector<8x32xf32>
    %353 = math.tanh %352 : vector<8x32xf32>
    %cst_75 = arith.constant 5.000000e-01 : f32
    %354 = vector.broadcast %cst_75 : f32 to vector<8x32xf32>
    %355 = arith.mulf %354, %353 : vector<8x32xf32>
    %cst_76 = arith.constant 5.000000e-01 : f32
    %356 = vector.broadcast %cst_76 : f32 to vector<8x32xf32>
    %357 = arith.addf %355, %356 : vector<8x32xf32>
    %358 = vector.extract_strided_slice %357 {offsets = [0, 0], sizes = [8, 8], strides = [1, 1]} : vector<8x32xf32> to vector<8x8xf32>
    %359 = vector.extract_strided_slice %357 {offsets = [0, 8], sizes = [8, 8], strides = [1, 1]} : vector<8x32xf32> to vector<8x8xf32>
    %360 = vector.extract_strided_slice %353 {offsets = [0, 16], sizes = [8, 8], strides = [1, 1]} : vector<8x32xf32> to vector<8x8xf32>
    %361 = vector.extract_strided_slice %357 {offsets = [0, 24], sizes = [8, 8], strides = [1, 1]} : vector<8x32xf32> to vector<8x8xf32>
    %362 = arith.mulf %359, %325 : vector<8x8xf32>
    %363 = arith.mulf %358, %360 : vector<8x8xf32>
    %364 = arith.addf %362, %363 : vector<8x8xf32>
    %365 = math.tanh %364 : vector<8x8xf32>
    %366 = arith.mulf %361, %365 : vector<8x8xf32>
    %c136 = arith.constant 136 : index
    %c0_77 = arith.constant 0 : index
    %367 = vector.load %arg1[%c136, %c0_77] : memref<224x128xf32, #tpu.memory_space<vmem>>, vector<8x72xf32>
    %cst_78 = arith.constant dense<0.000000e+00> : vector<8x72xf32>
    %368 = tpu.matmul %366, %367, %cst_78 {dimension_numbers = #tpu.dot_dimension_numbers<[1], [0], [0], [1], [0, 0, 1, 1], [], []>} : vector<8x8xf32>, vector<8x72xf32>, vector<8x72xf32> -> vector<8x72xf32>
    %369 = arith.addf %330, %368 : vector<8x72xf32>
    %370 = vector.extract_strided_slice %10 {offsets = [72, 0], sizes = [8, 32], strides = [1, 1]} : vector<144x32xf32> to vector<8x32xf32>
    %371 = vector.extract_strided_slice %349 {offsets = [0, 0], sizes = [8, 32], strides = [1, 1]} : vector<8x64xf32> to vector<8x32xf32>
    %372 = arith.addf %370, %371 : vector<8x32xf32>
    %373 = math.tanh %372 : vector<8x32xf32>
    %cst_79 = arith.constant 5.000000e-01 : f32
    %374 = vector.broadcast %cst_79 : f32 to vector<8x32xf32>
    %375 = arith.mulf %374, %373 : vector<8x32xf32>
    %cst_80 = arith.constant 5.000000e-01 : f32
    %376 = vector.broadcast %cst_80 : f32 to vector<8x32xf32>
    %377 = arith.addf %375, %376 : vector<8x32xf32>
    %378 = vector.extract_strided_slice %377 {offsets = [0, 0], sizes = [8, 8], strides = [1, 1]} : vector<8x32xf32> to vector<8x8xf32>
    %379 = vector.extract_strided_slice %377 {offsets = [0, 8], sizes = [8, 8], strides = [1, 1]} : vector<8x32xf32> to vector<8x8xf32>
    %380 = vector.extract_strided_slice %373 {offsets = [0, 16], sizes = [8, 8], strides = [1, 1]} : vector<8x32xf32> to vector<8x8xf32>
    %381 = vector.extract_strided_slice %377 {offsets = [0, 24], sizes = [8, 8], strides = [1, 1]} : vector<8x32xf32> to vector<8x8xf32>
    %382 = arith.mulf %379, %345 : vector<8x8xf32>
    %383 = arith.mulf %378, %380 : vector<8x8xf32>
    %384 = arith.addf %382, %383 : vector<8x8xf32>
    %385 = math.tanh %384 : vector<8x8xf32>
    %386 = arith.mulf %381, %385 : vector<8x8xf32>
    %387 = tpu.concatenate %386, %366 in 1 : vector<8x8xf32>, vector<8x8xf32> -> vector<8x16xf32>
    %cst_81 = arith.constant dense<0.000000e+00> : vector<8x64xf32>
    %388 = tpu.matmul %387, %2, %cst_81 {dimension_numbers = #tpu.dot_dimension_numbers<[1], [0], [0], [1], [0, 0, 1, 1], [], []>} : vector<8x16xf32>, vector<16x64xf32>, vector<8x64xf32> -> vector<8x64xf32>
    %389 = vector.extract_strided_slice %388 {offsets = [0, 32], sizes = [8, 32], strides = [1, 1]} : vector<8x64xf32> to vector<8x32xf32>
    %390 = vector.broadcast %3 : vector<1x32xf32> to vector<8x32xf32>
    %391 = arith.addf %389, %390 : vector<8x32xf32>
    %392 = math.tanh %391 : vector<8x32xf32>
    %cst_82 = arith.constant 5.000000e-01 : f32
    %393 = vector.broadcast %cst_82 : f32 to vector<8x32xf32>
    %394 = arith.mulf %393, %392 : vector<8x32xf32>
    %cst_83 = arith.constant 5.000000e-01 : f32
    %395 = vector.broadcast %cst_83 : f32 to vector<8x32xf32>
    %396 = arith.addf %394, %395 : vector<8x32xf32>
    %397 = vector.extract_strided_slice %396 {offsets = [0, 0], sizes = [8, 8], strides = [1, 1]} : vector<8x32xf32> to vector<8x8xf32>
    %398 = vector.extract_strided_slice %396 {offsets = [0, 8], sizes = [8, 8], strides = [1, 1]} : vector<8x32xf32> to vector<8x8xf32>
    %399 = vector.extract_strided_slice %392 {offsets = [0, 16], sizes = [8, 8], strides = [1, 1]} : vector<8x32xf32> to vector<8x8xf32>
    %400 = vector.extract_strided_slice %396 {offsets = [0, 24], sizes = [8, 8], strides = [1, 1]} : vector<8x32xf32> to vector<8x8xf32>
    %401 = arith.mulf %398, %364 : vector<8x8xf32>
    %402 = arith.mulf %397, %399 : vector<8x8xf32>
    %403 = arith.addf %401, %402 : vector<8x8xf32>
    %404 = math.tanh %403 : vector<8x8xf32>
    %405 = arith.mulf %400, %404 : vector<8x8xf32>
    %c144 = arith.constant 144 : index
    %c0_84 = arith.constant 0 : index
    %406 = vector.load %arg1[%c144, %c0_84] : memref<224x128xf32, #tpu.memory_space<vmem>>, vector<8x72xf32>
    %cst_85 = arith.constant dense<0.000000e+00> : vector<8x72xf32>
    %407 = tpu.matmul %405, %406, %cst_85 {dimension_numbers = #tpu.dot_dimension_numbers<[1], [0], [0], [1], [0, 0, 1, 1], [], []>} : vector<8x8xf32>, vector<8x72xf32>, vector<8x72xf32> -> vector<8x72xf32>
    %408 = arith.addf %369, %407 : vector<8x72xf32>
    %409 = vector.extract_strided_slice %10 {offsets = [80, 0], sizes = [8, 32], strides = [1, 1]} : vector<144x32xf32> to vector<8x32xf32>
    %410 = vector.extract_strided_slice %388 {offsets = [0, 0], sizes = [8, 32], strides = [1, 1]} : vector<8x64xf32> to vector<8x32xf32>
    %411 = arith.addf %409, %410 : vector<8x32xf32>
    %412 = math.tanh %411 : vector<8x32xf32>
    %cst_86 = arith.constant 5.000000e-01 : f32
    %413 = vector.broadcast %cst_86 : f32 to vector<8x32xf32>
    %414 = arith.mulf %413, %412 : vector<8x32xf32>
    %cst_87 = arith.constant 5.000000e-01 : f32
    %415 = vector.broadcast %cst_87 : f32 to vector<8x32xf32>
    %416 = arith.addf %414, %415 : vector<8x32xf32>
    %417 = vector.extract_strided_slice %416 {offsets = [0, 0], sizes = [8, 8], strides = [1, 1]} : vector<8x32xf32> to vector<8x8xf32>
    %418 = vector.extract_strided_slice %416 {offsets = [0, 8], sizes = [8, 8], strides = [1, 1]} : vector<8x32xf32> to vector<8x8xf32>
    %419 = vector.extract_strided_slice %412 {offsets = [0, 16], sizes = [8, 8], strides = [1, 1]} : vector<8x32xf32> to vector<8x8xf32>
    %420 = vector.extract_strided_slice %416 {offsets = [0, 24], sizes = [8, 8], strides = [1, 1]} : vector<8x32xf32> to vector<8x8xf32>
    %421 = arith.mulf %418, %384 : vector<8x8xf32>
    %422 = arith.mulf %417, %419 : vector<8x8xf32>
    %423 = arith.addf %421, %422 : vector<8x8xf32>
    %424 = math.tanh %423 : vector<8x8xf32>
    %425 = arith.mulf %420, %424 : vector<8x8xf32>
    %426 = tpu.concatenate %425, %405 in 1 : vector<8x8xf32>, vector<8x8xf32> -> vector<8x16xf32>
    %cst_88 = arith.constant dense<0.000000e+00> : vector<8x64xf32>
    %427 = tpu.matmul %426, %2, %cst_88 {dimension_numbers = #tpu.dot_dimension_numbers<[1], [0], [0], [1], [0, 0, 1, 1], [], []>} : vector<8x16xf32>, vector<16x64xf32>, vector<8x64xf32> -> vector<8x64xf32>
    %428 = vector.extract_strided_slice %427 {offsets = [0, 32], sizes = [8, 32], strides = [1, 1]} : vector<8x64xf32> to vector<8x32xf32>
    %429 = vector.broadcast %3 : vector<1x32xf32> to vector<8x32xf32>
    %430 = arith.addf %428, %429 : vector<8x32xf32>
    %431 = math.tanh %430 : vector<8x32xf32>
    %cst_89 = arith.constant 5.000000e-01 : f32
    %432 = vector.broadcast %cst_89 : f32 to vector<8x32xf32>
    %433 = arith.mulf %432, %431 : vector<8x32xf32>
    %cst_90 = arith.constant 5.000000e-01 : f32
    %434 = vector.broadcast %cst_90 : f32 to vector<8x32xf32>
    %435 = arith.addf %433, %434 : vector<8x32xf32>
    %436 = vector.extract_strided_slice %435 {offsets = [0, 0], sizes = [8, 8], strides = [1, 1]} : vector<8x32xf32> to vector<8x8xf32>
    %437 = vector.extract_strided_slice %435 {offsets = [0, 8], sizes = [8, 8], strides = [1, 1]} : vector<8x32xf32> to vector<8x8xf32>
    %438 = vector.extract_strided_slice %431 {offsets = [0, 16], sizes = [8, 8], strides = [1, 1]} : vector<8x32xf32> to vector<8x8xf32>
    %439 = vector.extract_strided_slice %435 {offsets = [0, 24], sizes = [8, 8], strides = [1, 1]} : vector<8x32xf32> to vector<8x8xf32>
    %440 = arith.mulf %437, %403 : vector<8x8xf32>
    %441 = arith.mulf %436, %438 : vector<8x8xf32>
    %442 = arith.addf %440, %441 : vector<8x8xf32>
    %443 = math.tanh %442 : vector<8x8xf32>
    %444 = arith.mulf %439, %443 : vector<8x8xf32>
    %c152 = arith.constant 152 : index
    %c0_91 = arith.constant 0 : index
    %445 = vector.load %arg1[%c152, %c0_91] : memref<224x128xf32, #tpu.memory_space<vmem>>, vector<8x72xf32>
    %cst_92 = arith.constant dense<0.000000e+00> : vector<8x72xf32>
    %446 = tpu.matmul %444, %445, %cst_92 {dimension_numbers = #tpu.dot_dimension_numbers<[1], [0], [0], [1], [0, 0, 1, 1], [], []>} : vector<8x8xf32>, vector<8x72xf32>, vector<8x72xf32> -> vector<8x72xf32>
    %447 = arith.addf %408, %446 : vector<8x72xf32>
    %448 = vector.extract_strided_slice %10 {offsets = [88, 0], sizes = [8, 32], strides = [1, 1]} : vector<144x32xf32> to vector<8x32xf32>
    %449 = vector.extract_strided_slice %427 {offsets = [0, 0], sizes = [8, 32], strides = [1, 1]} : vector<8x64xf32> to vector<8x32xf32>
    %450 = arith.addf %448, %449 : vector<8x32xf32>
    %451 = math.tanh %450 : vector<8x32xf32>
    %cst_93 = arith.constant 5.000000e-01 : f32
    %452 = vector.broadcast %cst_93 : f32 to vector<8x32xf32>
    %453 = arith.mulf %452, %451 : vector<8x32xf32>
    %cst_94 = arith.constant 5.000000e-01 : f32
    %454 = vector.broadcast %cst_94 : f32 to vector<8x32xf32>
    %455 = arith.addf %453, %454 : vector<8x32xf32>
    %456 = vector.extract_strided_slice %455 {offsets = [0, 0], sizes = [8, 8], strides = [1, 1]} : vector<8x32xf32> to vector<8x8xf32>
    %457 = vector.extract_strided_slice %455 {offsets = [0, 8], sizes = [8, 8], strides = [1, 1]} : vector<8x32xf32> to vector<8x8xf32>
    %458 = vector.extract_strided_slice %451 {offsets = [0, 16], sizes = [8, 8], strides = [1, 1]} : vector<8x32xf32> to vector<8x8xf32>
    %459 = vector.extract_strided_slice %455 {offsets = [0, 24], sizes = [8, 8], strides = [1, 1]} : vector<8x32xf32> to vector<8x8xf32>
    %460 = arith.mulf %457, %423 : vector<8x8xf32>
    %461 = arith.mulf %456, %458 : vector<8x8xf32>
    %462 = arith.addf %460, %461 : vector<8x8xf32>
    %463 = math.tanh %462 : vector<8x8xf32>
    %464 = arith.mulf %459, %463 : vector<8x8xf32>
    %465 = tpu.concatenate %464, %444 in 1 : vector<8x8xf32>, vector<8x8xf32> -> vector<8x16xf32>
    %cst_95 = arith.constant dense<0.000000e+00> : vector<8x64xf32>
    %466 = tpu.matmul %465, %2, %cst_95 {dimension_numbers = #tpu.dot_dimension_numbers<[1], [0], [0], [1], [0, 0, 1, 1], [], []>} : vector<8x16xf32>, vector<16x64xf32>, vector<8x64xf32> -> vector<8x64xf32>
    %467 = vector.extract_strided_slice %466 {offsets = [0, 32], sizes = [8, 32], strides = [1, 1]} : vector<8x64xf32> to vector<8x32xf32>
    %468 = vector.broadcast %3 : vector<1x32xf32> to vector<8x32xf32>
    %469 = arith.addf %467, %468 : vector<8x32xf32>
    %470 = math.tanh %469 : vector<8x32xf32>
    %cst_96 = arith.constant 5.000000e-01 : f32
    %471 = vector.broadcast %cst_96 : f32 to vector<8x32xf32>
    %472 = arith.mulf %471, %470 : vector<8x32xf32>
    %cst_97 = arith.constant 5.000000e-01 : f32
    %473 = vector.broadcast %cst_97 : f32 to vector<8x32xf32>
    %474 = arith.addf %472, %473 : vector<8x32xf32>
    %475 = vector.extract_strided_slice %474 {offsets = [0, 0], sizes = [8, 8], strides = [1, 1]} : vector<8x32xf32> to vector<8x8xf32>
    %476 = vector.extract_strided_slice %474 {offsets = [0, 8], sizes = [8, 8], strides = [1, 1]} : vector<8x32xf32> to vector<8x8xf32>
    %477 = vector.extract_strided_slice %470 {offsets = [0, 16], sizes = [8, 8], strides = [1, 1]} : vector<8x32xf32> to vector<8x8xf32>
    %478 = vector.extract_strided_slice %474 {offsets = [0, 24], sizes = [8, 8], strides = [1, 1]} : vector<8x32xf32> to vector<8x8xf32>
    %479 = arith.mulf %476, %442 : vector<8x8xf32>
    %480 = arith.mulf %475, %477 : vector<8x8xf32>
    %481 = arith.addf %479, %480 : vector<8x8xf32>
    %482 = math.tanh %481 : vector<8x8xf32>
    %483 = arith.mulf %478, %482 : vector<8x8xf32>
    %c160 = arith.constant 160 : index
    %c0_98 = arith.constant 0 : index
    %484 = vector.load %arg1[%c160, %c0_98] : memref<224x128xf32, #tpu.memory_space<vmem>>, vector<8x72xf32>
    %cst_99 = arith.constant dense<0.000000e+00> : vector<8x72xf32>
    %485 = tpu.matmul %483, %484, %cst_99 {dimension_numbers = #tpu.dot_dimension_numbers<[1], [0], [0], [1], [0, 0, 1, 1], [], []>} : vector<8x8xf32>, vector<8x72xf32>, vector<8x72xf32> -> vector<8x72xf32>
    %486 = arith.addf %447, %485 : vector<8x72xf32>
    %487 = vector.extract_strided_slice %10 {offsets = [96, 0], sizes = [8, 32], strides = [1, 1]} : vector<144x32xf32> to vector<8x32xf32>
    %488 = vector.extract_strided_slice %466 {offsets = [0, 0], sizes = [8, 32], strides = [1, 1]} : vector<8x64xf32> to vector<8x32xf32>
    %489 = arith.addf %487, %488 : vector<8x32xf32>
    %490 = math.tanh %489 : vector<8x32xf32>
    %cst_100 = arith.constant 5.000000e-01 : f32
    %491 = vector.broadcast %cst_100 : f32 to vector<8x32xf32>
    %492 = arith.mulf %491, %490 : vector<8x32xf32>
    %cst_101 = arith.constant 5.000000e-01 : f32
    %493 = vector.broadcast %cst_101 : f32 to vector<8x32xf32>
    %494 = arith.addf %492, %493 : vector<8x32xf32>
    %495 = vector.extract_strided_slice %494 {offsets = [0, 0], sizes = [8, 8], strides = [1, 1]} : vector<8x32xf32> to vector<8x8xf32>
    %496 = vector.extract_strided_slice %494 {offsets = [0, 8], sizes = [8, 8], strides = [1, 1]} : vector<8x32xf32> to vector<8x8xf32>
    %497 = vector.extract_strided_slice %490 {offsets = [0, 16], sizes = [8, 8], strides = [1, 1]} : vector<8x32xf32> to vector<8x8xf32>
    %498 = vector.extract_strided_slice %494 {offsets = [0, 24], sizes = [8, 8], strides = [1, 1]} : vector<8x32xf32> to vector<8x8xf32>
    %499 = arith.mulf %496, %462 : vector<8x8xf32>
    %500 = arith.mulf %495, %497 : vector<8x8xf32>
    %501 = arith.addf %499, %500 : vector<8x8xf32>
    %502 = math.tanh %501 : vector<8x8xf32>
    %503 = arith.mulf %498, %502 : vector<8x8xf32>
    %504 = tpu.concatenate %503, %483 in 1 : vector<8x8xf32>, vector<8x8xf32> -> vector<8x16xf32>
    %cst_102 = arith.constant dense<0.000000e+00> : vector<8x64xf32>
    %505 = tpu.matmul %504, %2, %cst_102 {dimension_numbers = #tpu.dot_dimension_numbers<[1], [0], [0], [1], [0, 0, 1, 1], [], []>} : vector<8x16xf32>, vector<16x64xf32>, vector<8x64xf32> -> vector<8x64xf32>
    %506 = vector.extract_strided_slice %505 {offsets = [0, 32], sizes = [8, 32], strides = [1, 1]} : vector<8x64xf32> to vector<8x32xf32>
    %507 = vector.broadcast %3 : vector<1x32xf32> to vector<8x32xf32>
    %508 = arith.addf %506, %507 : vector<8x32xf32>
    %509 = math.tanh %508 : vector<8x32xf32>
    %cst_103 = arith.constant 5.000000e-01 : f32
    %510 = vector.broadcast %cst_103 : f32 to vector<8x32xf32>
    %511 = arith.mulf %510, %509 : vector<8x32xf32>
    %cst_104 = arith.constant 5.000000e-01 : f32
    %512 = vector.broadcast %cst_104 : f32 to vector<8x32xf32>
    %513 = arith.addf %511, %512 : vector<8x32xf32>
    %514 = vector.extract_strided_slice %513 {offsets = [0, 0], sizes = [8, 8], strides = [1, 1]} : vector<8x32xf32> to vector<8x8xf32>
    %515 = vector.extract_strided_slice %513 {offsets = [0, 8], sizes = [8, 8], strides = [1, 1]} : vector<8x32xf32> to vector<8x8xf32>
    %516 = vector.extract_strided_slice %509 {offsets = [0, 16], sizes = [8, 8], strides = [1, 1]} : vector<8x32xf32> to vector<8x8xf32>
    %517 = vector.extract_strided_slice %513 {offsets = [0, 24], sizes = [8, 8], strides = [1, 1]} : vector<8x32xf32> to vector<8x8xf32>
    %518 = arith.mulf %515, %481 : vector<8x8xf32>
    %519 = arith.mulf %514, %516 : vector<8x8xf32>
    %520 = arith.addf %518, %519 : vector<8x8xf32>
    %521 = math.tanh %520 : vector<8x8xf32>
    %522 = arith.mulf %517, %521 : vector<8x8xf32>
    %c168 = arith.constant 168 : index
    %c0_105 = arith.constant 0 : index
    %523 = vector.load %arg1[%c168, %c0_105] : memref<224x128xf32, #tpu.memory_space<vmem>>, vector<8x72xf32>
    %cst_106 = arith.constant dense<0.000000e+00> : vector<8x72xf32>
    %524 = tpu.matmul %522, %523, %cst_106 {dimension_numbers = #tpu.dot_dimension_numbers<[1], [0], [0], [1], [0, 0, 1, 1], [], []>} : vector<8x8xf32>, vector<8x72xf32>, vector<8x72xf32> -> vector<8x72xf32>
    %525 = arith.addf %486, %524 : vector<8x72xf32>
    %526 = vector.extract_strided_slice %10 {offsets = [104, 0], sizes = [8, 32], strides = [1, 1]} : vector<144x32xf32> to vector<8x32xf32>
    %527 = vector.extract_strided_slice %505 {offsets = [0, 0], sizes = [8, 32], strides = [1, 1]} : vector<8x64xf32> to vector<8x32xf32>
    %528 = arith.addf %526, %527 : vector<8x32xf32>
    %529 = math.tanh %528 : vector<8x32xf32>
    %cst_107 = arith.constant 5.000000e-01 : f32
    %530 = vector.broadcast %cst_107 : f32 to vector<8x32xf32>
    %531 = arith.mulf %530, %529 : vector<8x32xf32>
    %cst_108 = arith.constant 5.000000e-01 : f32
    %532 = vector.broadcast %cst_108 : f32 to vector<8x32xf32>
    %533 = arith.addf %531, %532 : vector<8x32xf32>
    %534 = vector.extract_strided_slice %533 {offsets = [0, 0], sizes = [8, 8], strides = [1, 1]} : vector<8x32xf32> to vector<8x8xf32>
    %535 = vector.extract_strided_slice %533 {offsets = [0, 8], sizes = [8, 8], strides = [1, 1]} : vector<8x32xf32> to vector<8x8xf32>
    %536 = vector.extract_strided_slice %529 {offsets = [0, 16], sizes = [8, 8], strides = [1, 1]} : vector<8x32xf32> to vector<8x8xf32>
    %537 = vector.extract_strided_slice %533 {offsets = [0, 24], sizes = [8, 8], strides = [1, 1]} : vector<8x32xf32> to vector<8x8xf32>
    %538 = arith.mulf %535, %501 : vector<8x8xf32>
    %539 = arith.mulf %534, %536 : vector<8x8xf32>
    %540 = arith.addf %538, %539 : vector<8x8xf32>
    %541 = math.tanh %540 : vector<8x8xf32>
    %542 = arith.mulf %537, %541 : vector<8x8xf32>
    %543 = tpu.concatenate %542, %522 in 1 : vector<8x8xf32>, vector<8x8xf32> -> vector<8x16xf32>
    %cst_109 = arith.constant dense<0.000000e+00> : vector<8x64xf32>
    %544 = tpu.matmul %543, %2, %cst_109 {dimension_numbers = #tpu.dot_dimension_numbers<[1], [0], [0], [1], [0, 0, 1, 1], [], []>} : vector<8x16xf32>, vector<16x64xf32>, vector<8x64xf32> -> vector<8x64xf32>
    %545 = vector.extract_strided_slice %544 {offsets = [0, 32], sizes = [8, 32], strides = [1, 1]} : vector<8x64xf32> to vector<8x32xf32>
    %546 = vector.broadcast %3 : vector<1x32xf32> to vector<8x32xf32>
    %547 = arith.addf %545, %546 : vector<8x32xf32>
    %548 = math.tanh %547 : vector<8x32xf32>
    %cst_110 = arith.constant 5.000000e-01 : f32
    %549 = vector.broadcast %cst_110 : f32 to vector<8x32xf32>
    %550 = arith.mulf %549, %548 : vector<8x32xf32>
    %cst_111 = arith.constant 5.000000e-01 : f32
    %551 = vector.broadcast %cst_111 : f32 to vector<8x32xf32>
    %552 = arith.addf %550, %551 : vector<8x32xf32>
    %553 = vector.extract_strided_slice %552 {offsets = [0, 0], sizes = [8, 8], strides = [1, 1]} : vector<8x32xf32> to vector<8x8xf32>
    %554 = vector.extract_strided_slice %552 {offsets = [0, 8], sizes = [8, 8], strides = [1, 1]} : vector<8x32xf32> to vector<8x8xf32>
    %555 = vector.extract_strided_slice %548 {offsets = [0, 16], sizes = [8, 8], strides = [1, 1]} : vector<8x32xf32> to vector<8x8xf32>
    %556 = vector.extract_strided_slice %552 {offsets = [0, 24], sizes = [8, 8], strides = [1, 1]} : vector<8x32xf32> to vector<8x8xf32>
    %557 = arith.mulf %554, %520 : vector<8x8xf32>
    %558 = arith.mulf %553, %555 : vector<8x8xf32>
    %559 = arith.addf %557, %558 : vector<8x8xf32>
    %560 = math.tanh %559 : vector<8x8xf32>
    %561 = arith.mulf %556, %560 : vector<8x8xf32>
    %c176 = arith.constant 176 : index
    %c0_112 = arith.constant 0 : index
    %562 = vector.load %arg1[%c176, %c0_112] : memref<224x128xf32, #tpu.memory_space<vmem>>, vector<8x72xf32>
    %cst_113 = arith.constant dense<0.000000e+00> : vector<8x72xf32>
    %563 = tpu.matmul %561, %562, %cst_113 {dimension_numbers = #tpu.dot_dimension_numbers<[1], [0], [0], [1], [0, 0, 1, 1], [], []>} : vector<8x8xf32>, vector<8x72xf32>, vector<8x72xf32> -> vector<8x72xf32>
    %564 = arith.addf %525, %563 : vector<8x72xf32>
    %565 = vector.extract_strided_slice %10 {offsets = [112, 0], sizes = [8, 32], strides = [1, 1]} : vector<144x32xf32> to vector<8x32xf32>
    %566 = vector.extract_strided_slice %544 {offsets = [0, 0], sizes = [8, 32], strides = [1, 1]} : vector<8x64xf32> to vector<8x32xf32>
    %567 = arith.addf %565, %566 : vector<8x32xf32>
    %568 = math.tanh %567 : vector<8x32xf32>
    %cst_114 = arith.constant 5.000000e-01 : f32
    %569 = vector.broadcast %cst_114 : f32 to vector<8x32xf32>
    %570 = arith.mulf %569, %568 : vector<8x32xf32>
    %cst_115 = arith.constant 5.000000e-01 : f32
    %571 = vector.broadcast %cst_115 : f32 to vector<8x32xf32>
    %572 = arith.addf %570, %571 : vector<8x32xf32>
    %573 = vector.extract_strided_slice %572 {offsets = [0, 0], sizes = [8, 8], strides = [1, 1]} : vector<8x32xf32> to vector<8x8xf32>
    %574 = vector.extract_strided_slice %572 {offsets = [0, 8], sizes = [8, 8], strides = [1, 1]} : vector<8x32xf32> to vector<8x8xf32>
    %575 = vector.extract_strided_slice %568 {offsets = [0, 16], sizes = [8, 8], strides = [1, 1]} : vector<8x32xf32> to vector<8x8xf32>
    %576 = vector.extract_strided_slice %572 {offsets = [0, 24], sizes = [8, 8], strides = [1, 1]} : vector<8x32xf32> to vector<8x8xf32>
    %577 = arith.mulf %574, %540 : vector<8x8xf32>
    %578 = arith.mulf %573, %575 : vector<8x8xf32>
    %579 = arith.addf %577, %578 : vector<8x8xf32>
    %580 = math.tanh %579 : vector<8x8xf32>
    %581 = arith.mulf %576, %580 : vector<8x8xf32>
    %582 = tpu.concatenate %581, %561 in 1 : vector<8x8xf32>, vector<8x8xf32> -> vector<8x16xf32>
    %cst_116 = arith.constant dense<0.000000e+00> : vector<8x64xf32>
    %583 = tpu.matmul %582, %2, %cst_116 {dimension_numbers = #tpu.dot_dimension_numbers<[1], [0], [0], [1], [0, 0, 1, 1], [], []>} : vector<8x16xf32>, vector<16x64xf32>, vector<8x64xf32> -> vector<8x64xf32>
    %584 = vector.extract_strided_slice %583 {offsets = [0, 32], sizes = [8, 32], strides = [1, 1]} : vector<8x64xf32> to vector<8x32xf32>
    %585 = vector.broadcast %3 : vector<1x32xf32> to vector<8x32xf32>
    %586 = arith.addf %584, %585 : vector<8x32xf32>
    %587 = math.tanh %586 : vector<8x32xf32>
    %cst_117 = arith.constant 5.000000e-01 : f32
    %588 = vector.broadcast %cst_117 : f32 to vector<8x32xf32>
    %589 = arith.mulf %588, %587 : vector<8x32xf32>
    %cst_118 = arith.constant 5.000000e-01 : f32
    %590 = vector.broadcast %cst_118 : f32 to vector<8x32xf32>
    %591 = arith.addf %589, %590 : vector<8x32xf32>
    %592 = vector.extract_strided_slice %591 {offsets = [0, 0], sizes = [8, 8], strides = [1, 1]} : vector<8x32xf32> to vector<8x8xf32>
    %593 = vector.extract_strided_slice %591 {offsets = [0, 8], sizes = [8, 8], strides = [1, 1]} : vector<8x32xf32> to vector<8x8xf32>
    %594 = vector.extract_strided_slice %587 {offsets = [0, 16], sizes = [8, 8], strides = [1, 1]} : vector<8x32xf32> to vector<8x8xf32>
    %595 = vector.extract_strided_slice %591 {offsets = [0, 24], sizes = [8, 8], strides = [1, 1]} : vector<8x32xf32> to vector<8x8xf32>
    %596 = arith.mulf %593, %559 : vector<8x8xf32>
    %597 = arith.mulf %592, %594 : vector<8x8xf32>
    %598 = arith.addf %596, %597 : vector<8x8xf32>
    %599 = math.tanh %598 : vector<8x8xf32>
    %600 = arith.mulf %595, %599 : vector<8x8xf32>
    %c184 = arith.constant 184 : index
    %c0_119 = arith.constant 0 : index
    %601 = vector.load %arg1[%c184, %c0_119] : memref<224x128xf32, #tpu.memory_space<vmem>>, vector<8x72xf32>
    %cst_120 = arith.constant dense<0.000000e+00> : vector<8x72xf32>
    %602 = tpu.matmul %600, %601, %cst_120 {dimension_numbers = #tpu.dot_dimension_numbers<[1], [0], [0], [1], [0, 0, 1, 1], [], []>} : vector<8x8xf32>, vector<8x72xf32>, vector<8x72xf32> -> vector<8x72xf32>
    %603 = arith.addf %564, %602 : vector<8x72xf32>
    %604 = vector.extract_strided_slice %10 {offsets = [120, 0], sizes = [8, 32], strides = [1, 1]} : vector<144x32xf32> to vector<8x32xf32>
    %605 = vector.extract_strided_slice %583 {offsets = [0, 0], sizes = [8, 32], strides = [1, 1]} : vector<8x64xf32> to vector<8x32xf32>
    %606 = arith.addf %604, %605 : vector<8x32xf32>
    %607 = math.tanh %606 : vector<8x32xf32>
    %cst_121 = arith.constant 5.000000e-01 : f32
    %608 = vector.broadcast %cst_121 : f32 to vector<8x32xf32>
    %609 = arith.mulf %608, %607 : vector<8x32xf32>
    %cst_122 = arith.constant 5.000000e-01 : f32
    %610 = vector.broadcast %cst_122 : f32 to vector<8x32xf32>
    %611 = arith.addf %609, %610 : vector<8x32xf32>
    %612 = vector.extract_strided_slice %611 {offsets = [0, 0], sizes = [8, 8], strides = [1, 1]} : vector<8x32xf32> to vector<8x8xf32>
    %613 = vector.extract_strided_slice %611 {offsets = [0, 8], sizes = [8, 8], strides = [1, 1]} : vector<8x32xf32> to vector<8x8xf32>
    %614 = vector.extract_strided_slice %607 {offsets = [0, 16], sizes = [8, 8], strides = [1, 1]} : vector<8x32xf32> to vector<8x8xf32>
    %615 = vector.extract_strided_slice %611 {offsets = [0, 24], sizes = [8, 8], strides = [1, 1]} : vector<8x32xf32> to vector<8x8xf32>
    %616 = arith.mulf %613, %579 : vector<8x8xf32>
    %617 = arith.mulf %612, %614 : vector<8x8xf32>
    %618 = arith.addf %616, %617 : vector<8x8xf32>
    %619 = math.tanh %618 : vector<8x8xf32>
    %620 = arith.mulf %615, %619 : vector<8x8xf32>
    %621 = tpu.concatenate %620, %600 in 1 : vector<8x8xf32>, vector<8x8xf32> -> vector<8x16xf32>
    %cst_123 = arith.constant dense<0.000000e+00> : vector<8x64xf32>
    %622 = tpu.matmul %621, %2, %cst_123 {dimension_numbers = #tpu.dot_dimension_numbers<[1], [0], [0], [1], [0, 0, 1, 1], [], []>} : vector<8x16xf32>, vector<16x64xf32>, vector<8x64xf32> -> vector<8x64xf32>
    %623 = vector.extract_strided_slice %622 {offsets = [0, 32], sizes = [8, 32], strides = [1, 1]} : vector<8x64xf32> to vector<8x32xf32>
    %624 = vector.broadcast %3 : vector<1x32xf32> to vector<8x32xf32>
    %625 = arith.addf %623, %624 : vector<8x32xf32>
    %626 = math.tanh %625 : vector<8x32xf32>
    %cst_124 = arith.constant 5.000000e-01 : f32
    %627 = vector.broadcast %cst_124 : f32 to vector<8x32xf32>
    %628 = arith.mulf %627, %626 : vector<8x32xf32>
    %cst_125 = arith.constant 5.000000e-01 : f32
    %629 = vector.broadcast %cst_125 : f32 to vector<8x32xf32>
    %630 = arith.addf %628, %629 : vector<8x32xf32>
    %631 = vector.extract_strided_slice %630 {offsets = [0, 0], sizes = [8, 8], strides = [1, 1]} : vector<8x32xf32> to vector<8x8xf32>
    %632 = vector.extract_strided_slice %630 {offsets = [0, 8], sizes = [8, 8], strides = [1, 1]} : vector<8x32xf32> to vector<8x8xf32>
    %633 = vector.extract_strided_slice %626 {offsets = [0, 16], sizes = [8, 8], strides = [1, 1]} : vector<8x32xf32> to vector<8x8xf32>
    %634 = vector.extract_strided_slice %630 {offsets = [0, 24], sizes = [8, 8], strides = [1, 1]} : vector<8x32xf32> to vector<8x8xf32>
    %635 = arith.mulf %632, %598 : vector<8x8xf32>
    %636 = arith.mulf %631, %633 : vector<8x8xf32>
    %637 = arith.addf %635, %636 : vector<8x8xf32>
    %638 = math.tanh %637 : vector<8x8xf32>
    %639 = arith.mulf %634, %638 : vector<8x8xf32>
    %c192 = arith.constant 192 : index
    %c0_126 = arith.constant 0 : index
    %640 = vector.load %arg1[%c192, %c0_126] : memref<224x128xf32, #tpu.memory_space<vmem>>, vector<8x72xf32>
    %cst_127 = arith.constant dense<0.000000e+00> : vector<8x72xf32>
    %641 = tpu.matmul %639, %640, %cst_127 {dimension_numbers = #tpu.dot_dimension_numbers<[1], [0], [0], [1], [0, 0, 1, 1], [], []>} : vector<8x8xf32>, vector<8x72xf32>, vector<8x72xf32> -> vector<8x72xf32>
    %642 = arith.addf %603, %641 : vector<8x72xf32>
    %643 = vector.extract_strided_slice %10 {offsets = [128, 0], sizes = [8, 32], strides = [1, 1]} : vector<144x32xf32> to vector<8x32xf32>
    %644 = vector.extract_strided_slice %622 {offsets = [0, 0], sizes = [8, 32], strides = [1, 1]} : vector<8x64xf32> to vector<8x32xf32>
    %645 = arith.addf %643, %644 : vector<8x32xf32>
    %646 = math.tanh %645 : vector<8x32xf32>
    %cst_128 = arith.constant 5.000000e-01 : f32
    %647 = vector.broadcast %cst_128 : f32 to vector<8x32xf32>
    %648 = arith.mulf %647, %646 : vector<8x32xf32>
    %cst_129 = arith.constant 5.000000e-01 : f32
    %649 = vector.broadcast %cst_129 : f32 to vector<8x32xf32>
    %650 = arith.addf %648, %649 : vector<8x32xf32>
    %651 = vector.extract_strided_slice %650 {offsets = [0, 0], sizes = [8, 8], strides = [1, 1]} : vector<8x32xf32> to vector<8x8xf32>
    %652 = vector.extract_strided_slice %650 {offsets = [0, 8], sizes = [8, 8], strides = [1, 1]} : vector<8x32xf32> to vector<8x8xf32>
    %653 = vector.extract_strided_slice %646 {offsets = [0, 16], sizes = [8, 8], strides = [1, 1]} : vector<8x32xf32> to vector<8x8xf32>
    %654 = vector.extract_strided_slice %650 {offsets = [0, 24], sizes = [8, 8], strides = [1, 1]} : vector<8x32xf32> to vector<8x8xf32>
    %655 = arith.mulf %652, %618 : vector<8x8xf32>
    %656 = arith.mulf %651, %653 : vector<8x8xf32>
    %657 = arith.addf %655, %656 : vector<8x8xf32>
    %658 = math.tanh %657 : vector<8x8xf32>
    %659 = arith.mulf %654, %658 : vector<8x8xf32>
    %660 = tpu.concatenate %659, %639 in 1 : vector<8x8xf32>, vector<8x8xf32> -> vector<8x16xf32>
    %cst_130 = arith.constant dense<0.000000e+00> : vector<8x64xf32>
    %661 = tpu.matmul %660, %2, %cst_130 {dimension_numbers = #tpu.dot_dimension_numbers<[1], [0], [0], [1], [0, 0, 1, 1], [], []>} : vector<8x16xf32>, vector<16x64xf32>, vector<8x64xf32> -> vector<8x64xf32>
    %662 = vector.extract_strided_slice %661 {offsets = [0, 32], sizes = [8, 32], strides = [1, 1]} : vector<8x64xf32> to vector<8x32xf32>
    %663 = vector.broadcast %3 : vector<1x32xf32> to vector<8x32xf32>
    %664 = arith.addf %662, %663 : vector<8x32xf32>
    %665 = math.tanh %664 : vector<8x32xf32>
    %cst_131 = arith.constant 5.000000e-01 : f32
    %666 = vector.broadcast %cst_131 : f32 to vector<8x32xf32>
    %667 = arith.mulf %666, %665 : vector<8x32xf32>
    %cst_132 = arith.constant 5.000000e-01 : f32
    %668 = vector.broadcast %cst_132 : f32 to vector<8x32xf32>
    %669 = arith.addf %667, %668 : vector<8x32xf32>
    %670 = vector.extract_strided_slice %669 {offsets = [0, 0], sizes = [8, 8], strides = [1, 1]} : vector<8x32xf32> to vector<8x8xf32>
    %671 = vector.extract_strided_slice %669 {offsets = [0, 8], sizes = [8, 8], strides = [1, 1]} : vector<8x32xf32> to vector<8x8xf32>
    %672 = vector.extract_strided_slice %665 {offsets = [0, 16], sizes = [8, 8], strides = [1, 1]} : vector<8x32xf32> to vector<8x8xf32>
    %673 = vector.extract_strided_slice %669 {offsets = [0, 24], sizes = [8, 8], strides = [1, 1]} : vector<8x32xf32> to vector<8x8xf32>
    %674 = arith.mulf %671, %637 : vector<8x8xf32>
    %675 = arith.mulf %670, %672 : vector<8x8xf32>
    %676 = arith.addf %674, %675 : vector<8x8xf32>
    %677 = math.tanh %676 : vector<8x8xf32>
    %678 = arith.mulf %673, %677 : vector<8x8xf32>
    %c200 = arith.constant 200 : index
    %c0_133 = arith.constant 0 : index
    %679 = vector.load %arg1[%c200, %c0_133] : memref<224x128xf32, #tpu.memory_space<vmem>>, vector<8x72xf32>
    %cst_134 = arith.constant dense<0.000000e+00> : vector<8x72xf32>
    %680 = tpu.matmul %678, %679, %cst_134 {dimension_numbers = #tpu.dot_dimension_numbers<[1], [0], [0], [1], [0, 0, 1, 1], [], []>} : vector<8x8xf32>, vector<8x72xf32>, vector<8x72xf32> -> vector<8x72xf32>
    %681 = arith.addf %642, %680 : vector<8x72xf32>
    %682 = vector.extract_strided_slice %10 {offsets = [136, 0], sizes = [8, 32], strides = [1, 1]} : vector<144x32xf32> to vector<8x32xf32>
    %683 = vector.extract_strided_slice %661 {offsets = [0, 0], sizes = [8, 32], strides = [1, 1]} : vector<8x64xf32> to vector<8x32xf32>
    %684 = arith.addf %682, %683 : vector<8x32xf32>
    %685 = math.tanh %684 : vector<8x32xf32>
    %cst_135 = arith.constant 5.000000e-01 : f32
    %686 = vector.broadcast %cst_135 : f32 to vector<8x32xf32>
    %687 = arith.mulf %686, %685 : vector<8x32xf32>
    %cst_136 = arith.constant 5.000000e-01 : f32
    %688 = vector.broadcast %cst_136 : f32 to vector<8x32xf32>
    %689 = arith.addf %687, %688 : vector<8x32xf32>
    %690 = vector.extract_strided_slice %689 {offsets = [0, 0], sizes = [8, 8], strides = [1, 1]} : vector<8x32xf32> to vector<8x8xf32>
    %691 = vector.extract_strided_slice %689 {offsets = [0, 8], sizes = [8, 8], strides = [1, 1]} : vector<8x32xf32> to vector<8x8xf32>
    %692 = vector.extract_strided_slice %685 {offsets = [0, 16], sizes = [8, 8], strides = [1, 1]} : vector<8x32xf32> to vector<8x8xf32>
    %693 = vector.extract_strided_slice %689 {offsets = [0, 24], sizes = [8, 8], strides = [1, 1]} : vector<8x32xf32> to vector<8x8xf32>
    %694 = arith.mulf %691, %657 : vector<8x8xf32>
    %695 = arith.mulf %690, %692 : vector<8x8xf32>
    %696 = arith.addf %694, %695 : vector<8x8xf32>
    %697 = math.tanh %696 : vector<8x8xf32>
    %698 = arith.mulf %693, %697 : vector<8x8xf32>
    %699 = tpu.concatenate %698, %678 in 1 : vector<8x8xf32>, vector<8x8xf32> -> vector<8x16xf32>
    %cst_137 = arith.constant dense<0.000000e+00> : vector<8x64xf32>
    %700 = tpu.matmul %699, %2, %cst_137 {dimension_numbers = #tpu.dot_dimension_numbers<[1], [0], [0], [1], [0, 0, 1, 1], [], []>} : vector<8x16xf32>, vector<16x64xf32>, vector<8x64xf32> -> vector<8x64xf32>
    %701 = vector.extract_strided_slice %700 {offsets = [0, 32], sizes = [8, 32], strides = [1, 1]} : vector<8x64xf32> to vector<8x32xf32>
    %702 = vector.broadcast %3 : vector<1x32xf32> to vector<8x32xf32>
    %703 = arith.addf %701, %702 : vector<8x32xf32>
    %704 = math.tanh %703 : vector<8x32xf32>
    %cst_138 = arith.constant 5.000000e-01 : f32
    %705 = vector.broadcast %cst_138 : f32 to vector<8x32xf32>
    %706 = arith.mulf %705, %704 : vector<8x32xf32>
    %cst_139 = arith.constant 5.000000e-01 : f32
    %707 = vector.broadcast %cst_139 : f32 to vector<8x32xf32>
    %708 = arith.addf %706, %707 : vector<8x32xf32>
    %709 = vector.extract_strided_slice %708 {offsets = [0, 0], sizes = [8, 8], strides = [1, 1]} : vector<8x32xf32> to vector<8x8xf32>
    %710 = vector.extract_strided_slice %708 {offsets = [0, 8], sizes = [8, 8], strides = [1, 1]} : vector<8x32xf32> to vector<8x8xf32>
    %711 = vector.extract_strided_slice %704 {offsets = [0, 16], sizes = [8, 8], strides = [1, 1]} : vector<8x32xf32> to vector<8x8xf32>
    %712 = vector.extract_strided_slice %708 {offsets = [0, 24], sizes = [8, 8], strides = [1, 1]} : vector<8x32xf32> to vector<8x8xf32>
    %713 = arith.mulf %710, %676 : vector<8x8xf32>
    %714 = arith.mulf %709, %711 : vector<8x8xf32>
    %715 = arith.addf %713, %714 : vector<8x8xf32>
    %716 = math.tanh %715 : vector<8x8xf32>
    %717 = arith.mulf %712, %716 : vector<8x8xf32>
    %c208 = arith.constant 208 : index
    %c0_140 = arith.constant 0 : index
    %718 = vector.load %arg1[%c208, %c0_140] : memref<224x128xf32, #tpu.memory_space<vmem>>, vector<8x72xf32>
    %cst_141 = arith.constant dense<0.000000e+00> : vector<8x72xf32>
    %719 = tpu.matmul %717, %718, %cst_141 {dimension_numbers = #tpu.dot_dimension_numbers<[1], [0], [0], [1], [0, 0, 1, 1], [], []>} : vector<8x8xf32>, vector<8x72xf32>, vector<8x72xf32> -> vector<8x72xf32>
    %720 = arith.addf %681, %719 : vector<8x72xf32>
    %cst_142 = arith.constant 0.000000e+00 : f32
    %721 = vector.broadcast %cst_142 : f32 to vector<8x72xf32>
    %722 = arith.maximumf %720, %721 : vector<8x72xf32>
    %cst_143 = arith.constant dense<0.000000e+00> : vector<8x3xf32>
    %723 = tpu.matmul %722, %5, %cst_143 {dimension_numbers = #tpu.dot_dimension_numbers<[1], [0], [0], [1], [0, 0, 1, 1], [], []>} : vector<8x72xf32>, vector<72x3xf32>, vector<8x3xf32> -> vector<8x3xf32>
    %724 = vector.broadcast %6 : vector<1x3xf32> to vector<8x3xf32>
    %725 = arith.addf %723, %724 : vector<8x3xf32>
    %cst_144 = arith.constant dense<0xFF800000> : vector<8xf32>
    %726 = vector.multi_reduction <maximumf>, %725, %cst_144 [1] : vector<8x3xf32> to vector<8xf32>
    %727 = vector.shape_cast %726 : vector<8xf32> to vector<8x1xf32>
    %728 = vector.broadcast %727 : vector<8x1xf32> to vector<8x3xf32>
    %729 = arith.subf %725, %728 : vector<8x3xf32>
    %730 = math.exp %729 : vector<8x3xf32>
    %cst_145 = arith.constant dense<0.000000e+00> : vector<8xf32>
    %731 = vector.multi_reduction <add>, %730, %cst_145 [1] : vector<8x3xf32> to vector<8xf32>
    %732 = vector.shape_cast %731 : vector<8xf32> to vector<8x1xf32>
    %733 = vector.broadcast %732 : vector<8x1xf32> to vector<8x3xf32>
    %734 = arith.divf %730, %733 : vector<8x3xf32>
    %c0_146 = arith.constant 0 : index
    %c0_147 = arith.constant 0 : index
    %735 = vector.load %arg2[%c0_146, %c0_147] : memref<8x3xf32, #tpu.memory_space<vmem>>, vector<8x3xf32>
    tpu.vector_store %arg2[%c0_146, %c0_147], %734 {strides = array<i32>} : memref<8x3xf32, #tpu.memory_space<vmem>>, vector<8x3xf32>,
    return
  }
}

</mosaic_0001>

<llo_original>
// kernel: tpu_custom_call.1
$region0: #{tpu_custom_call.1}
  #allocation0 [shape = 'u32[]', space=smem, size = 0x4, offset = 0x4, fixed_abs, tag = 'smem constant byte address 0x4 - core index']
  #allocation1 [shape = 'u32[72,128]{1,0:T(1,128)}', space=vmem, size = 0x9000, scoped, tag = 'internal scratch']
  %s0 = inlined_call_operand.vmem [shape: f32[144,36], index: 0, kind: input, shape index: {}]
  %s1 = inlined_call_operand.vmem [shape: f32[224,128], index: 1, kind: input, shape index: {}]
  %s2 = inlined_call_operand.vmem [shape: f32[8,3], index: 2, kind: output, shape index: {}]
  %s3 = sld [smem:[#allocation0]]
  $region18: #{tpu_custom_call.1} parent=0
    _
  %s5 = ssub.s32 1, %s3
  %s6 = scalar_select 0, %s5, %s3
  // Predicated region
  $region2: #{tpu_custom_call.1} parent=0 // pred_check
    _
  $region3: #{tpu_custom_call.1} parent=0 // pred_check_branch
    %8 = sbr.rel (0) target = $region5
  $region4: #{tpu_custom_call.1} parent=0 // pred_region
    _
  $region5: #{tpu_custom_call.1} parent=0 // pred_fallthru
    _
  // Predicated region
  $region6: #{tpu_custom_call.1} parent=0 // pred_check
    _
  $region7: #{tpu_custom_call.1} parent=0 // pred_check_branch
    %10 = sbr.rel (0) target = $region9
  $region8: #{tpu_custom_call.1} parent=0 // pred_region
    _
  $region9: #{tpu_custom_call.1} parent=0 // pred_fallthru
    _
  %v11 = vld [vmem:[%s1] sm:$0xff]
  %v12 = vld [vmem:[%s1 + $0x8] sm:$0xff]
  %v13 = vld [vmem:[%s1 + $0x10] sm:$0xff]
  %v14 = vld [vmem:[%s1 + $0x18] sm:$0xff]
  %v15 = vld [vmem:[%s1 + $0x20] sm:$0xf]
  %v16 = vld [vmem:[%s1 + $0x28] sm:$0x1]
  %v17 = vld [vmem:[%s1 + $0x30] sm:$0xff]
  %v18 = vld [vmem:[%s1 + $0x38] sm:$0xff]
  %v19 = vld [vmem:[%s1 + $0x40] sm:$0x1]
  %v20 = vld [vmem:[%s1 + $0xd8] sm:$0x1]
  %v21 = vld [vmem:[%s1 + $0x48] sm:$0xff]
  %v22 = vld [vmem:[%s1 + $0x50] sm:$0xff]
  %v23 = vld [vmem:[%s1 + $0x58] sm:$0xff]
  %v24 = vld [vmem:[%s1 + $0x60] sm:$0xff]
  %v25 = vld [vmem:[%s1 + $0x68] sm:$0xff]
  %v26 = vld [vmem:[%s1 + $0x70] sm:$0xff]
  %v27 = vld [vmem:[%s1 + $0x78] sm:$0xff]
  %v28 = vld [vmem:[%s1 + $0x80] sm:$0xff]
  %v29 = vld [vmem:[%s1 + $0x88] sm:$0xff]
  %v30 = vld [vmem:[%s0] sm:$0xff]
  %v31 = vld [vmem:[%s0 + $0x8] sm:$0xff]
  %v32 = vld [vmem:[%s0 + $0x10] sm:$0xff]
  %v33 = vld [vmem:[%s0 + $0x18] sm:$0xff]
  %v34 = vld [vmem:[%s0 + $0x20] sm:$0xff]
  %v35 = vld [vmem:[%s0 + $0x28] sm:$0xff]
  %v36 = vld [vmem:[%s0 + $0x30] sm:$0xff]
  %v37 = vld [vmem:[%s0 + $0x38] sm:$0xff]
  %v38 = vld [vmem:[%s0 + $0x40] sm:$0xff]
  %v39 = vld [vmem:[%s0 + $0x48] sm:$0xff]
  %v40 = vld [vmem:[%s0 + $0x50] sm:$0xff]
  %v41 = vld [vmem:[%s0 + $0x58] sm:$0xff]
  %v42 = vld [vmem:[%s0 + $0x60] sm:$0xff]
  %v43 = vld [vmem:[%s0 + $0x68] sm:$0xff]
  %v44 = vld [vmem:[%s0 + $0x70] sm:$0xff]
  %v45 = vld [vmem:[%s0 + $0x78] sm:$0xff]
  %v46 = vld [vmem:[%s0 + $0x80] sm:$0xff]
  %v47 = vld [vmem:[%s0 + $0x88] sm:$0xff]
  %v48 = vperm.slane %v16, 0
  %vm49 = vcmask 293888
  %v51 = vsel %vm49, %v30, 0
  %v54 = vsel %vm49, %v31, 0
  %v57 = vsel %vm49, %v32, 0
  %v60 = vsel %vm49, %v33, 0
  %v63 = vsel %vm49, %v34, 0
  %v66 = vsel %vm49, %v35, 0
  %v69 = vsel %vm49, %v36, 0
  %v72 = vsel %vm49, %v37, 0
  %v75 = vsel %vm49, %v38, 0
  %v78 = vsel %vm49, %v39, 0
  %v81 = vsel %vm49, %v40, 0
  %v84 = vsel %vm49, %v41, 0
  %v87 = vsel %vm49, %v42, 0
  %v90 = vsel %vm49, %v43, 0
  %v93 = vsel %vm49, %v44, 0
  %v96 = vsel %vm49, %v45, 0
  %v99 = vsel %vm49, %v46, 0
  %v102 = vsel %vm49, %v47, 0
  %vm104 = vcmask 1043456
  %v106 = vsel %vm104, %v15, 0
  %108 = vmatpush.msra.mxu0 0.0
  %109 = vmatpush.msra.mxu0 0.0
  %110 = vmatpush.msra.mxu0 0.0
  %111 = vmatpush.msra.mxu0 0.0
  %112 = vmatpush.msra.mxu0 0.0
  %113 = vmatpush.msra.mxu0 0.0
  %114 = vmatpush.msra.mxu0 0.0
  %115 = vmatpush.msra.mxu0 0.0
  %116 = vmatpush.msra.mxu0 0.0
  %117 = vmatpush.msra.mxu0 0.0
  %118 = vmatpush.msra.mxu0 0.0
  %119 = vmatpush.msra.mxu0 %v106
  %120 = vmatpush.msra.mxu0 %v14
  %121 = vmatpush.msra.mxu0 %v13
  %122 = vmatpush.msra.mxu0 %v12
  %123 = vmatpush.msra.mxu0 %v11
  %124 = vmatmul.f32.gmra.mxu0 %v51
  %v125 = vpop.f32.mrf.mxu0
  %v126 = vadd.f32 %v48, %v125
  %127 = vmatmul.f32.gmra.mxu0 %v54
  %v128 = vpop.f32.mrf.mxu0
  %v129 = vadd.f32 %v48, %v128
  %130 = vmatmul.f32.gmra.mxu0 %v57
  %v131 = vpop.f32.mrf.mxu0
  %v132 = vadd.f32 %v48, %v131
  %133 = vmatmul.f32.gmra.mxu0 %v60
  %v134 = vpop.f32.mrf.mxu0
  %v135 = vadd.f32 %v48, %v134
  %136 = vmatmul.f32.gmra.mxu0 %v63
  %v137 = vpop.f32.mrf.mxu0
  %v138 = vadd.f32 %v48, %v137
  %139 = vmatmul.f32.gmra.mxu0 %v66
  %v140 = vpop.f32.mrf.mxu0
  %v141 = vadd.f32 %v48, %v140
  %142 = vmatmul.f32.gmra.mxu0 %v69
  %v143 = vpop.f32.mrf.mxu0
  %v144 = vadd.f32 %v48, %v143
  %145 = vmatmul.f32.gmra.mxu0 %v72
  %v146 = vpop.f32.mrf.mxu0
  %v147 = vadd.f32 %v48, %v146
  %148 = vmatmul.f32.gmra.mxu0 %v75
  %v149 = vpop.f32.mrf.mxu0
  %v150 = vadd.f32 %v48, %v149
  %151 = vmatmul.f32.gmra.mxu0 %v78
  %v152 = vpop.f32.mrf.mxu0
  %v153 = vadd.f32 %v48, %v152
  %154 = vmatmul.f32.gmra.mxu0 %v81
  %v155 = vpop.f32.mrf.mxu0
  %v156 = vadd.f32 %v48, %v155
  %157 = vmatmul.f32.gmra.mxu0 %v84
  %v158 = vpop.f32.mrf.mxu0
  %v159 = vadd.f32 %v48, %v158
  %160 = vmatmul.f32.gmra.mxu0 %v87
  %v161 = vpop.f32.mrf.mxu0
  %v162 = vadd.f32 %v48, %v161
  %163 = vmatmul.f32.gmra.mxu0 %v90
  %v164 = vpop.f32.mrf.mxu0
  %v165 = vadd.f32 %v48, %v164
  %166 = vmatmul.f32.gmra.mxu0 %v93
  %v167 = vpop.f32.mrf.mxu0
  %v168 = vadd.f32 %v48, %v167
  %169 = vmatmul.f32.gmra.mxu0 %v96
  %v170 = vpop.f32.mrf.mxu0
  %v171 = vadd.f32 %v48, %v170
  %172 = vmatmul.f32.gmra.mxu0 %v99
  %v173 = vpop.f32.mrf.mxu0
  %v174 = vadd.f32 %v48, %v173
  %175 = vmatmul.f32.gmra.mxu0 %v102
  %v176 = vpop.f32.mrf.mxu0
  %v177 = vadd.f32 %v48, %v176
  %178 = vdwg.mxu0
  %v179 = vperm.slane %v20, 0
  %vm180 = vcmask 130048
  %v182 = vsel %vm180, 0.0, 0
  %184 = vmatpush.msra.mxu0 0.0
  %185 = vmatpush.msra.mxu0 0.0
  %186 = vmatpush.msra.mxu0 0.0
  %187 = vmatpush.msra.mxu0 0.0
  %188 = vmatpush.msra.mxu0 0.0
  %189 = vmatpush.msra.mxu0 0.0
  %190 = vmatpush.msra.mxu0 0.0
  %191 = vmatpush.msra.mxu0 0.0
  %192 = vmatpush.msra.mxu0 0.0
  %193 = vmatpush.msra.mxu0 0.0
  %194 = vmatpush.msra.mxu0 0.0
  %195 = vmatpush.msra.mxu0 0.0
  %196 = vmatpush.msra.mxu0 0.0
  %197 = vmatpush.msra.mxu0 0.0
  %198 = vmatpush.msra.mxu0 %v18
  %199 = vmatpush.msra.mxu0 %v17
  %200 = vmatmul.f32.gmra.mxu0 %v182
  %v201 = vpop.f32.mrf.mxu0
  %v202 = vadd.f32 0.0, %v201
  %203 = vdwg.mxu0
  %v204 = vadd.f32 %v126, %v202
  %v205 = vtanh.pop %v204
  %v206 = vmul.f32 %v205, 0.5
  %v207 = vadd.f32 %v206, 0.5
  %v208 = vmul.f32 %v207, 0.0
  %210 = vrot.lane.b32.xlu0 %v205, 112
  %v211 = vpop.permute.xlu0 %210
  %v213 = vmul.f32 %v207, %v211
  %215 = vrot.lane.b32.xlu0 %v213, 8
  %v216 = vpop.permute.xlu0 %215
  %v218 = vadd.f32 %v208, %v216
  %v219 = vtanh.pop %v218
  %221 = vrot.lane.b32.xlu0 %v219, 16
  %v222 = vpop.permute.xlu0 %221
  %v224 = vmul.f32 %v207, %v222
  %226 = vrot.lane.b32.xlu0 %v224, 104
  %v227 = vpop.permute.xlu0 %226
  %vm229 = vcmask 64512
  %v230 = vsel %vm229, %v227, 0.0
  %v232 = vsel %vm180, %v230, 0
  %234 = vmatpush.msra.mxu0 0.0
  %235 = vmatpush.msra.mxu0 0.0
  %236 = vmatpush.msra.mxu0 0.0
  %237 = vmatpush.msra.mxu0 0.0
  %238 = vmatpush.msra.mxu0 0.0
  %239 = vmatpush.msra.mxu0 0.0
  %240 = vmatpush.msra.mxu0 0.0
  %241 = vmatpush.msra.mxu0 0.0
  %242 = vmatpush.msra.mxu0 0.0
  %243 = vmatpush.msra.mxu0 0.0
  %244 = vmatpush.msra.mxu0 0.0
  %245 = vmatpush.msra.mxu0 0.0
  %246 = vmatpush.msra.mxu0 0.0
  %247 = vmatpush.msra.mxu0 0.0
  %248 = vmatpush.msra.mxu0 %v18
  %249 = vmatpush.msra.mxu0 %v17
  %250 = vmatmul.f32.gmra.mxu0 %v232
  %v251 = vpop.f32.mrf.mxu0
  %v252 = vadd.f32 0.0, %v251
  %253 = vdwg.mxu0
  %v254 = vperm.slane %v19, 0
  %256 = vrot.lane.b32.xlu0 %v254, 32
  %v257 = vpop.permute.xlu0 %256
  %v259 = vadd.f32 %v252, %v257
  %v260 = vtanh.pop %v259
  %v261 = vmul.f32 %v260, 0.5
  %v262 = vadd.f32 %v261, 0.5
  %v263 = vmul.f32 %v262, 0.0
  %265 = vrot.lane.b32.xlu0 %v260, 112
  %v266 = vpop.permute.xlu0 %265
  %v268 = vmul.f32 %v262, %v266
  %270 = vrot.lane.b32.xlu0 %v268, 8
  %v271 = vpop.permute.xlu0 %270
  %v273 = vadd.f32 %v263, %v271
  %v274 = vtanh.pop %v273
  %276 = vrot.lane.b32.xlu0 %v274, 16
  %v277 = vpop.permute.xlu0 %276
  %v279 = vmul.f32 %v262, %v277
  %v280 = vld [vmem:[%s1 + $0x48] sm:$0xff]
  %282 = vrot.lane.b32.xlu0 %v279, 72
  %v283 = vpop.permute.xlu0 %282
  %v284 = vsel %vm229, %v283, 0
  %286 = vmatpush.msra.mxu0 0.0
  %287 = vmatpush.msra.mxu0 0.0
  %288 = vmatpush.msra.mxu0 0.0
  %289 = vmatpush.msra.mxu0 0.0
  %290 = vmatpush.msra.mxu0 0.0
  %291 = vmatpush.msra.mxu0 0.0
  %292 = vmatpush.msra.mxu0 0.0
  %293 = vmatpush.msra.mxu0 0.0
  %294 = vmatpush.msra.mxu0 0.0
  %295 = vmatpush.msra.mxu0 0.0
  %296 = vmatpush.msra.mxu0 0.0
  %297 = vmatpush.msra.mxu0 0.0
  %298 = vmatpush.msra.mxu0 0.0
  %299 = vmatpush.msra.mxu0 0.0
  %300 = vmatpush.msra.mxu0 0.0
  %301 = vmatpush.msra.mxu0 %v280
  %302 = vmatmul.f32.gmra.mxu0 %v284
  %v303 = vpop.f32.mrf.mxu0
  %v304 = vadd.f32 0.0, %v303
  %305 = vdwg.mxu0
  %v306 = vadd.f32 %v179, %v304
  %v307 = vadd.f32 %v129, %v252
  %v308 = vtanh.pop %v307
  %v309 = vmul.f32 %v308, 0.5
  %v310 = vadd.f32 %v309, 0.5
  %v311 = vmul.f32 %v310, %v218
  %313 = vrot.lane.b32.xlu0 %v308, 112
  %v314 = vpop.permute.xlu0 %313
  %v316 = vmul.f32 %v310, %v314
  %318 = vrot.lane.b32.xlu0 %v316, 8
  %v319 = vpop.permute.xlu0 %318
  %v321 = vadd.f32 %v311, %v319
  %v322 = vtanh.pop %v321
  %324 = vrot.lane.b32.xlu0 %v322, 16
  %v325 = vpop.permute.xlu0 %324
  %v327 = vmul.f32 %v310, %v325
  %329 = vrot.lane.b32.xlu0 %v327, 104
  %v330 = vpop.permute.xlu0 %329
  %332 = vrot.lane.b32.xlu0 %v279, 80
  %v333 = vpop.permute.xlu0 %332
  %v335 = vsel %vm229, %v330, %v333
  %v337 = vsel %vm180, %v335, 0
  %339 = vmatpush.msra.mxu0 0.0
  %340 = vmatpush.msra.mxu0 0.0
  %341 = vmatpush.msra.mxu0 0.0
  %342 = vmatpush.msra.mxu0 0.0
  %343 = vmatpush.msra.mxu0 0.0
  %344 = vmatpush.msra.mxu0 0.0
  %345 = vmatpush.msra.mxu0 0.0
  %346 = vmatpush.msra.mxu0 0.0
  %347 = vmatpush.msra.mxu0 0.0
  %348 = vmatpush.msra.mxu0 0.0
  %349 = vmatpush.msra.mxu0 0.0
  %350 = vmatpush.msra.mxu0 0.0
  %351 = vmatpush.msra.mxu0 0.0
  %352 = vmatpush.msra.mxu0 0.0
  %353 = vmatpush.msra.mxu0 %v18
  %354 = vmatpush.msra.mxu0 %v17
  %355 = vmatmul.f32.gmra.mxu0 %v337
  %v356 = vpop.f32.mrf.mxu0
  %v357 = vadd.f32 0.0, %v356
  %358 = vdwg.mxu0
  %v359 = vadd.f32 %v357, %v257
  %v360 = vtanh.pop %v359
  %v361 = vmul.f32 %v360, 0.5
  %v362 = vadd.f32 %v361, 0.5
  %v363 = vmul.f32 %v362, %v273
  %365 = vrot.lane.b32.xlu0 %v360, 112
  %v366 = vpop.permute.xlu0 %365
  %v368 = vmul.f32 %v362, %v366
  %370 = vrot.lane.b32.xlu0 %v368, 8
  %v371 = vpop.permute.xlu0 %370
  %v373 = vadd.f32 %v363, %v371
  %v374 = vtanh.pop %v373
  %376 = vrot.lane.b32.xlu0 %v374, 16
  %v377 = vpop.permute.xlu0 %376
  %v379 = vmul.f32 %v362, %v377
  %v380 = vld [vmem:[%s1 + $0x50] sm:$0xff]
  %382 = vrot.lane.b32.xlu0 %v379, 72
  %v383 = vpop.permute.xlu0 %382
  %v384 = vsel %vm229, %v383, 0
  %386 = vmatpush.msra.mxu0 0.0
  %387 = vmatpush.msra.mxu0 0.0
  %388 = vmatpush.msra.mxu0 0.0
  %389 = vmatpush.msra.mxu0 0.0
  %390 = vmatpush.msra.mxu0 0.0
  %391 = vmatpush.msra.mxu0 0.0
  %392 = vmatpush.msra.mxu0 0.0
  %393 = vmatpush.msra.mxu0 0.0
  %394 = vmatpush.msra.mxu0 0.0
  %395 = vmatpush.msra.mxu0 0.0
  %396 = vmatpush.msra.mxu0 0.0
  %397 = vmatpush.msra.mxu0 0.0
  %398 = vmatpush.msra.mxu0 0.0
  %399 = vmatpush.msra.mxu0 0.0
  %400 = vmatpush.msra.mxu0 0.0
  %401 = vmatpush.msra.mxu0 %v380
  %402 = vmatmul.f32.gmra.mxu0 %v384
  %v403 = vpop.f32.mrf.mxu0
  %v404 = vadd.f32 0.0, %v403
  %405 = vdwg.mxu0
  %v406 = vadd.f32 %v306, %v404
  %v407 = vadd.f32 %v132, %v357
  %v408 = vtanh.pop %v407
  %v409 = vmul.f32 %v408, 0.5
  %v410 = vadd.f32 %v409, 0.5
  %v411 = vmul.f32 %v410, %v321
  %413 = vrot.lane.b32.xlu0 %v408, 112
  %v414 = vpop.permute.xlu0 %413
  %v416 = vmul.f32 %v410, %v414
  %418 = vrot.lane.b32.xlu0 %v416, 8
  %v419 = vpop.permute.xlu0 %418
  %v421 = vadd.f32 %v411, %v419
  %v422 = vtanh.pop %v421
  %424 = vrot.lane.b32.xlu0 %v422, 16
  %v425 = vpop.permute.xlu0 %424
  %v427 = vmul.f32 %v410, %v425
  %429 = vrot.lane.b32.xlu0 %v427, 104
  %v430 = vpop.permute.xlu0 %429
  %432 = vrot.lane.b32.xlu0 %v379, 80
  %v433 = vpop.permute.xlu0 %432
  %v435 = vsel %vm229, %v430, %v433
  %v437 = vsel %vm180, %v435, 0
  %439 = vmatpush.msra.mxu0 0.0
  %440 = vmatpush.msra.mxu0 0.0
  %441 = vmatpush.msra.mxu0 0.0
  %442 = vmatpush.msra.mxu0 0.0
  %443 = vmatpush.msra.mxu0 0.0
  %444 = vmatpush.msra.mxu0 0.0
  %445 = vmatpush.msra.mxu0 0.0
  %446 = vmatpush.msra.mxu0 0.0
  %447 = vmatpush.msra.mxu0 0.0
  %448 = vmatpush.msra.mxu0 0.0
  %449 = vmatpush.msra.mxu0 0.0
  %450 = vmatpush.msra.mxu0 0.0
  %451 = vmatpush.msra.mxu0 0.0
  %452 = vmatpush.msra.mxu0 0.0
  %453 = vmatpush.msra.mxu0 %v18
  %454 = vmatpush.msra.mxu0 %v17
  %455 = vmatmul.f32.gmra.mxu0 %v437
  %v456 = vpop.f32.mrf.mxu0
  %v457 = vadd.f32 0.0, %v456
  %458 = vdwg.mxu0
  %v459 = vadd.f32 %v457, %v257
  %v460 = vtanh.pop %v459
  %v461 = vmul.f32 %v460, 0.5
  %v462 = vadd.f32 %v461, 0.5
  %v463 = vmul.f32 %v462, %v373
  %465 = vrot.lane.b32.xlu0 %v460, 112
  %v466 = vpop.permute.xlu0 %465
  %v468 = vmul.f32 %v462, %v466
  %470 = vrot.lane.b32.xlu0 %v468, 8
  %v471 = vpop.permute.xlu0 %470
  %v473 = vadd.f32 %v463, %v471
  %v474 = vtanh.pop %v473
  %476 = vrot.lane.b32.xlu0 %v474, 16
  %v477 = vpop.permute.xlu0 %476
  %v479 = vmul.f32 %v462, %v477
  %v480 = vld [vmem:[%s1 + $0x58] sm:$0xff]
  %482 = vrot.lane.b32.xlu0 %v479, 72
  %v483 = vpop.permute.xlu0 %482
  %v484 = vsel %vm229, %v483, 0
  %486 = vmatpush.msra.mxu0 0.0
  %487 = vmatpush.msra.mxu0 0.0
  %488 = vmatpush.msra.mxu0 0.0
  %489 = vmatpush.msra.mxu0 0.0
  %490 = vmatpush.msra.mxu0 0.0
  %491 = vmatpush.msra.mxu0 0.0
  %492 = vmatpush.msra.mxu0 0.0
  %493 = vmatpush.msra.mxu0 0.0
  %494 = vmatpush.msra.mxu0 0.0
  %495 = vmatpush.msra.mxu0 0.0
  %496 = vmatpush.msra.mxu0 0.0
  %497 = vmatpush.msra.mxu0 0.0
  %498 = vmatpush.msra.mxu0 0.0
  %499 = vmatpush.msra.mxu0 0.0
  %500 = vmatpush.msra.mxu0 0.0
  %501 = vmatpush.msra.mxu0 %v480
  %502 = vmatmul.f32.gmra.mxu0 %v484
  %v503 = vpop.f32.mrf.mxu0
  %v504 = vadd.f32 0.0, %v503
  %505 = vdwg.mxu0
  %v506 = vadd.f32 %v406, %v504
  %v507 = vadd.f32 %v135, %v457
  %v508 = vtanh.pop %v507
  %v509 = vmul.f32 %v508, 0.5
  %v510 = vadd.f32 %v509, 0.5
  %v511 = vmul.f32 %v510, %v421
  %513 = vrot.lane.b32.xlu0 %v508, 112
  %v514 = vpop.permute.xlu0 %513
  %v516 = vmul.f32 %v510, %v514
  %518 = vrot.lane.b32.xlu0 %v516, 8
  %v519 = vpop.permute.xlu0 %518
  %v521 = vadd.f32 %v511, %v519
  %v522 = vtanh.pop %v521
  %524 = vrot.lane.b32.xlu0 %v522, 16
  %v525 = vpop.permute.xlu0 %524
  %v527 = vmul.f32 %v510, %v525
  %529 = vrot.lane.b32.xlu0 %v527, 104
  %v530 = vpop.permute.xlu0 %529
  %532 = vrot.lane.b32.xlu0 %v479, 80
  %v533 = vpop.permute.xlu0 %532
  %v535 = vsel %vm229, %v530, %v533
  %v537 = vsel %vm180, %v535, 0
  %539 = vmatpush.msra.mxu0 0.0
  %540 = vmatpush.msra.mxu0 0.0
  %541 = vmatpush.msra.mxu0 0.0
  %542 = vmatpush.msra.mxu0 0.0
  %543 = vmatpush.msra.mxu0 0.0
  %544 = vmatpush.msra.mxu0 0.0
  %545 = vmatpush.msra.mxu0 0.0
  %546 = vmatpush.msra.mxu0 0.0
  %547 = vmatpush.msra.mxu0 0.0
  %548 = vmatpush.msra.mxu0 0.0
  %549 = vmatpush.msra.mxu0 0.0
  %550 = vmatpush.msra.mxu0 0.0
  %551 = vmatpush.msra.mxu0 0.0
  %552 = vmatpush.msra.mxu0 0.0
  %553 = vmatpush.msra.mxu0 %v18
  %554 = vmatpush.msra.mxu0 %v17
  %555 = vmatmul.f32.gmra.mxu0 %v537
  %v556 = vpop.f32.mrf.mxu0
  %v557 = vadd.f32 0.0, %v556
  %558 = vdwg.mxu0
  %v559 = vadd.f32 %v557, %v257
  %v560 = vtanh.pop %v559
  %v561 = vmul.f32 %v560, 0.5
  %v562 = vadd.f32 %v561, 0.5
  %v563 = vmul.f32 %v562, %v473
  %565 = vrot.lane.b32.xlu0 %v560, 112
  %v566 = vpop.permute.xlu0 %565
  %v568 = vmul.f32 %v562, %v566
  %570 = vrot.lane.b32.xlu0 %v568, 8
  %v571 = vpop.permute.xlu0 %570
  %v573 = vadd.f32 %v563, %v571
  %v574 = vtanh.pop %v573
  %576 = vrot.lane.b32.xlu0 %v574, 16
  %v577 = vpop.permute.xlu0 %576
  %v579 = vmul.f32 %v562, %v577
  %v580 = vld [vmem:[%s1 + $0x60] sm:$0xff]
  %582 = vrot.lane.b32.xlu0 %v579, 72
  %v583 = vpop.permute.xlu0 %582
  %v584 = vsel %vm229, %v583, 0
  %586 = vmatpush.msra.mxu0 0.0
  %587 = vmatpush.msra.mxu0 0.0
  %588 = vmatpush.msra.mxu0 0.0
  %589 = vmatpush.msra.mxu0 0.0
  %590 = vmatpush.msra.mxu0 0.0
  %591 = vmatpush.msra.mxu0 0.0
  %592 = vmatpush.msra.mxu0 0.0
  %593 = vmatpush.msra.mxu0 0.0
  %594 = vmatpush.msra.mxu0 0.0
  %595 = vmatpush.msra.mxu0 0.0
  %596 = vmatpush.msra.mxu0 0.0
  %597 = vmatpush.msra.mxu0 0.0
  %598 = vmatpush.msra.mxu0 0.0
  %599 = vmatpush.msra.mxu0 0.0
  %600 = vmatpush.msra.mxu0 0.0
  %601 = vmatpush.msra.mxu0 %v580
  %602 = vmatmul.f32.gmra.mxu0 %v584
  %v603 = vpop.f32.mrf.mxu0
  %v604 = vadd.f32 0.0, %v603
  %605 = vdwg.mxu0
  %v606 = vadd.f32 %v506, %v604
  %v607 = vadd.f32 %v138, %v557
  %v608 = vtanh.pop %v607
  %v609 = vmul.f32 %v608, 0.5
  %v610 = vadd.f32 %v609, 0.5
  %v611 = vmul.f32 %v610, %v521
  %613 = vrot.lane.b32.xlu0 %v608, 112
  %v614 = vpop.permute.xlu0 %613
  %v616 = vmul.f32 %v610, %v614
  %618 = vrot.lane.b32.xlu0 %v616, 8
  %v619 = vpop.permute.xlu0 %618
  %v621 = vadd.f32 %v611, %v619
  %v622 = vtanh.pop %v621
  %624 = vrot.lane.b32.xlu0 %v622, 16
  %v625 = vpop.permute.xlu0 %624
  %v627 = vmul.f32 %v610, %v625
  %629 = vrot.lane.b32.xlu0 %v627, 104
  %v630 = vpop.permute.xlu0 %629
  %632 = vrot.lane.b32.xlu0 %v579, 80
  %v633 = vpop.permute.xlu0 %632
  %v635 = vsel %vm229, %v630, %v633
  %v637 = vsel %vm180, %v635, 0
  %639 = vmatpush.msra.mxu0 0.0
  %640 = vmatpush.msra.mxu0 0.0
  %641 = vmatpush.msra.mxu0 0.0
  %642 = vmatpush.msra.mxu0 0.0
  %643 = vmatpush.msra.mxu0 0.0
  %644 = vmatpush.msra.mxu0 0.0
  %645 = vmatpush.msra.mxu0 0.0
  %646 = vmatpush.msra.mxu0 0.0
  %647 = vmatpush.msra.mxu0 0.0
  %648 = vmatpush.msra.mxu0 0.0
  %649 = vmatpush.msra.mxu0 0.0
  %650 = vmatpush.msra.mxu0 0.0
  %651 = vmatpush.msra.mxu0 0.0
  %652 = vmatpush.msra.mxu0 0.0
  %653 = vmatpush.msra.mxu0 %v18
  %654 = vmatpush.msra.mxu0 %v17
  %655 = vmatmul.f32.gmra.mxu0 %v637
  %v656 = vpop.f32.mrf.mxu0
  %v657 = vadd.f32 0.0, %v656
  %658 = vdwg.mxu0
  %v659 = vadd.f32 %v657, %v257
  %v660 = vtanh.pop %v659
  %v661 = vmul.f32 %v660, 0.5
  %v662 = vadd.f32 %v661, 0.5
  %v663 = vmul.f32 %v662, %v573
  %665 = vrot.lane.b32.xlu0 %v660, 112
  %v666 = vpop.permute.xlu0 %665
  %v668 = vmul.f32 %v662, %v666
  %670 = vrot.lane.b32.xlu0 %v668, 8
  %v671 = vpop.permute.xlu0 %670
  %v673 = vadd.f32 %v663, %v671
  %v674 = vtanh.pop %v673
  %676 = vrot.lane.b32.xlu0 %v674, 16
  %v677 = vpop.permute.xlu0 %676
  %v679 = vmul.f32 %v662, %v677
  %v680 = vld [vmem:[%s1 + $0x68] sm:$0xff]
  %682 = vrot.lane.b32.xlu0 %v679, 72
  %v683 = vpop.permute.xlu0 %682
  %v684 = vsel %vm229, %v683, 0
  %686 = vmatpush.msra.mxu0 0.0
  %687 = vmatpush.msra.mxu0 0.0
  %688 = vmatpush.msra.mxu0 0.0
  %689 = vmatpush.msra.mxu0 0.0
  %690 = vmatpush.msra.mxu0 0.0
  %691 = vmatpush.msra.mxu0 0.0
  %692 = vmatpush.msra.mxu0 0.0
  %693 = vmatpush.msra.mxu0 0.0
  %694 = vmatpush.msra.mxu0 0.0
  %695 = vmatpush.msra.mxu0 0.0
  %696 = vmatpush.msra.mxu0 0.0
  %697 = vmatpush.msra.mxu0 0.0
  %698 = vmatpush.msra.mxu0 0.0
  %699 = vmatpush.msra.mxu0 0.0
  %700 = vmatpush.msra.mxu0 0.0
  %701 = vmatpush.msra.mxu0 %v680
  %702 = vmatmul.f32.gmra.mxu0 %v684
  %v703 = vpop.f32.mrf.mxu0
  %v704 = vadd.f32 0.0, %v703
  %705 = vdwg.mxu0
  %v706 = vadd.f32 %v606, %v704
  %v707 = vadd.f32 %v141, %v657
  %v708 = vtanh.pop %v707
  %v709 = vmul.f32 %v708, 0.5
  %v710 = vadd.f32 %v709, 0.5
  %v711 = vmul.f32 %v710, %v621
  %713 = vrot.lane.b32.xlu0 %v708, 112
  %v714 = vpop.permute.xlu0 %713
  %v716 = vmul.f32 %v710, %v714
  %718 = vrot.lane.b32.xlu0 %v716, 8
  %v719 = vpop.permute.xlu0 %718
  %v721 = vadd.f32 %v711, %v719
  %v722 = vtanh.pop %v721
  %724 = vrot.lane.b32.xlu0 %v722, 16
  %v725 = vpop.permute.xlu0 %724
  %v727 = vmul.f32 %v710, %v725
  %729 = vrot.lane.b32.xlu0 %v727, 104
  %v730 = vpop.permute.xlu0 %729
  %732 = vrot.lane.b32.xlu0 %v679, 80
  %v733 = vpop.permute.xlu0 %732
  %v735 = vsel %vm229, %v730, %v733
  %v737 = vsel %vm180, %v735, 0
  %739 = vmatpush.msra.mxu0 0.0
  %740 = vmatpush.msra.mxu0 0.0
  %741 = vmatpush.msra.mxu0 0.0
  %742 = vmatpush.msra.mxu0 0.0
  %743 = vmatpush.msra.mxu0 0.0
  %744 = vmatpush.msra.mxu0 0.0
  %745 = vmatpush.msra.mxu0 0.0
  %746 = vmatpush.msra.mxu0 0.0
  %747 = vmatpush.msra.mxu0 0.0
  %748 = vmatpush.msra.mxu0 0.0
  %749 = vmatpush.msra.mxu0 0.0
  %750 = vmatpush.msra.mxu0 0.0
  %751 = vmatpush.msra.mxu0 0.0
  %752 = vmatpush.msra.mxu0 0.0
  %753 = vmatpush.msra.mxu0 %v18
  %754 = vmatpush.msra.mxu0 %v17
  %755 = vmatmul.f32.gmra.mxu0 %v737
  %v756 = vpop.f32.mrf.mxu0
  %v757 = vadd.f32 0.0, %v756
  %758 = vdwg.mxu0
  %v759 = vadd.f32 %v757, %v257
  %v760 = vtanh.pop %v759
  %v761 = vmul.f32 %v760, 0.5
  %v762 = vadd.f32 %v761, 0.5
  %v763 = vmul.f32 %v762, %v673
  %765 = vrot.lane.b32.xlu0 %v760, 112
  %v766 = vpop.permute.xlu0 %765
  %v768 = vmul.f32 %v762, %v766
  %770 = vrot.lane.b32.xlu0 %v768, 8
  %v771 = vpop.permute.xlu0 %770
  %v773 = vadd.f32 %v763, %v771
  %v774 = vtanh.pop %v773
  %776 = vrot.lane.b32.xlu0 %v774, 16
  %v777 = vpop.permute.xlu0 %776
  %v779 = vmul.f32 %v762, %v777
  %v780 = vld [vmem:[%s1 + $0x70] sm:$0xff]
  %782 = vrot.lane.b32.xlu0 %v779, 72
  %v783 = vpop.permute.xlu0 %782
  %v784 = vsel %vm229, %v783, 0
  %786 = vmatpush.msra.mxu0 0.0
  %787 = vmatpush.msra.mxu0 0.0
  %788 = vmatpush.msra.mxu0 0.0
  %789 = vmatpush.msra.mxu0 0.0
  %790 = vmatpush.msra.mxu0 0.0
  %791 = vmatpush.msra.mxu0 0.0
  %792 = vmatpush.msra.mxu0 0.0
  %793 = vmatpush.msra.mxu0 0.0
  %794 = vmatpush.msra.mxu0 0.0
  %795 = vmatpush.msra.mxu0 0.0
  %796 = vmatpush.msra.mxu0 0.0
  %797 = vmatpush.msra.mxu0 0.0
  %798 = vmatpush.msra.mxu0 0.0
  %799 = vmatpush.msra.mxu0 0.0
  %800 = vmatpush.msra.mxu0 0.0
  %801 = vmatpush.msra.mxu0 %v780
  %802 = vmatmul.f32.gmra.mxu0 %v784
  %v803 = vpop.f32.mrf.mxu0
  %v804 = vadd.f32 0.0, %v803
  %805 = vdwg.mxu0
  %v806 = vadd.f32 %v706, %v804
  %v807 = vadd.f32 %v144, %v757
  %v808 = vtanh.pop %v807
  %v809 = vmul.f32 %v808, 0.5
  %v810 = vadd.f32 %v809, 0.5
  %v811 = vmul.f32 %v810, %v721
  %813 = vrot.lane.b32.xlu0 %v808, 112
  %v814 = vpop.permute.xlu0 %813
  %v816 = vmul.f32 %v810, %v814
  %818 = vrot.lane.b32.xlu0 %v816, 8
  %v819 = vpop.permute.xlu0 %818
  %v821 = vadd.f32 %v811, %v819
  %v822 = vtanh.pop %v821
  %824 = vrot.lane.b32.xlu0 %v822, 16
  %v825 = vpop.permute.xlu0 %824
  %v827 = vmul.f32 %v810, %v825
  %829 = vrot.lane.b32.xlu0 %v827, 104
  %v830 = vpop.permute.xlu0 %829
  %832 = vrot.lane.b32.xlu0 %v779, 80
  %v833 = vpop.permute.xlu0 %832
  %v835 = vsel %vm229, %v830, %v833
  %v837 = vsel %vm180, %v835, 0
  %839 = vmatpush.msra.mxu0 0.0
  %840 = vmatpush.msra.mxu0 0.0
  %841 = vmatpush.msra.mxu0 0.0
  %842 = vmatpush.msra.mxu0 0.0
  %843 = vmatpush.msra.mxu0 0.0
  %844 = vmatpush.msra.mxu0 0.0
  %845 = vmatpush.msra.mxu0 0.0
  %846 = vmatpush.msra.mxu0 0.0
  %847 = vmatpush.msra.mxu0 0.0
  %848 = vmatpush.msra.mxu0 0.0
  %849 = vmatpush.msra.mxu0 0.0
  %850 = vmatpush.msra.mxu0 0.0
  %851 = vmatpush.msra.mxu0 0.0
  %852 = vmatpush.msra.mxu0 0.0
  %853 = vmatpush.msra.mxu0 %v18
  %854 = vmatpush.msra.mxu0 %v17
  %855 = vmatmul.f32.gmra.mxu0 %v837
  %v856 = vpop.f32.mrf.mxu0
  %v857 = vadd.f32 0.0, %v856
  %858 = vdwg.mxu0
  %v859 = vadd.f32 %v857, %v257
  %v860 = vtanh.pop %v859
  %v861 = vmul.f32 %v860, 0.5
  %v862 = vadd.f32 %v861, 0.5
  %v863 = vmul.f32 %v862, %v773
  %865 = vrot.lane.b32.xlu0 %v860, 112
  %v866 = vpop.permute.xlu0 %865
  %v868 = vmul.f32 %v862, %v866
  %870 = vrot.lane.b32.xlu0 %v868, 8
  %v871 = vpop.permute.xlu0 %870
  %v873 = vadd.f32 %v863, %v871
  %v874 = vtanh.pop %v873
  %876 = vrot.lane.b32.xlu0 %v874, 16
  %v877 = vpop.permute.xlu0 %876
  %v879 = vmul.f32 %v862, %v877
  %v880 = vld [vmem:[%s1 + $0x78] sm:$0xff]
  %882 = vrot.lane.b32.xlu0 %v879, 72
  %v883 = vpop.permute.xlu0 %882
  %v884 = vsel %vm229, %v883, 0
  %886 = vmatpush.msra.mxu0 0.0
  %887 = vmatpush.msra.mxu0 0.0
  %888 = vmatpush.msra.mxu0 0.0
  %889 = vmatpush.msra.mxu0 0.0
  %890 = vmatpush.msra.mxu0 0.0
  %891 = vmatpush.msra.mxu0 0.0
  %892 = vmatpush.msra.mxu0 0.0
  %893 = vmatpush.msra.mxu0 0.0
  %894 = vmatpush.msra.mxu0 0.0
  %895 = vmatpush.msra.mxu0 0.0
  %896 = vmatpush.msra.mxu0 0.0
  %897 = vmatpush.msra.mxu0 0.0
  %898 = vmatpush.msra.mxu0 0.0
  %899 = vmatpush.msra.mxu0 0.0
  %900 = vmatpush.msra.mxu0 0.0
  %901 = vmatpush.msra.mxu0 %v880
  %902 = vmatmul.f32.gmra.mxu0 %v884
  %v903 = vpop.f32.mrf.mxu0
  %v904 = vadd.f32 0.0, %v903
  %905 = vdwg.mxu0
  %v906 = vadd.f32 %v806, %v904
  %v907 = vadd.f32 %v147, %v857
  %v908 = vtanh.pop %v907
  %v909 = vmul.f32 %v908, 0.5
  %v910 = vadd.f32 %v909, 0.5
  %v911 = vmul.f32 %v910, %v821
  %913 = vrot.lane.b32.xlu0 %v908, 112
  %v914 = vpop.permute.xlu0 %913
  %v916 = vmul.f32 %v910, %v914
  %918 = vrot.lane.b32.xlu0 %v916, 8
  %v919 = vpop.permute.xlu0 %918
  %v921 = vadd.f32 %v911, %v919
  %v922 = vtanh.pop %v921
  %924 = vrot.lane.b32.xlu0 %v922, 16
  %v925 = vpop.permute.xlu0 %924
  %v927 = vmul.f32 %v910, %v925
  %929 = vrot.lane.b32.xlu0 %v927, 104
  %v930 = vpop.permute.xlu0 %929
  %932 = vrot.lane.b32.xlu0 %v879, 80
  %v933 = vpop.permute.xlu0 %932
  %v935 = vsel %vm229, %v930, %v933
  %v937 = vsel %vm180, %v935, 0
  %939 = vmatpush.msra.mxu0 0.0
  %940 = vmatpush.msra.mxu0 0.0
  %941 = vmatpush.msra.mxu0 0.0
  %942 = vmatpush.msra.mxu0 0.0
  %943 = vmatpush.msra.mxu0 0.0
  %944 = vmatpush.msra.mxu0 0.0
  %945 = vmatpush.msra.mxu0 0.0
  %946 = vmatpush.msra.mxu0 0.0
  %947 = vmatpush.msra.mxu0 0.0
  %948 = vmatpush.msra.mxu0 0.0
  %949 = vmatpush.msra.mxu0 0.0
  %950 = vmatpush.msra.mxu0 0.0
  %951 = vmatpush.msra.mxu0 0.0
  %952 = vmatpush.msra.mxu0 0.0
  %953 = vmatpush.msra.mxu0 %v18
  %954 = vmatpush.msra.mxu0 %v17
  %955 = vmatmul.f32.gmra.mxu0 %v937
  %v956 = vpop.f32.mrf.mxu0
  %v957 = vadd.f32 0.0, %v956
  %958 = vdwg.mxu0
  %v959 = vadd.f32 %v957, %v257
  %v960 = vtanh.pop %v959
  %v961 = vmul.f32 %v960, 0.5
  %v962 = vadd.f32 %v961, 0.5
  %v963 = vmul.f32 %v962, %v873
  %965 = vrot.lane.b32.xlu0 %v960, 112
  %v966 = vpop.permute.xlu0 %965
  %v968 = vmul.f32 %v962, %v966
  %970 = vrot.lane.b32.xlu0 %v968, 8
  %v971 = vpop.permute.xlu0 %970
  %v973 = vadd.f32 %v963, %v971
  %v974 = vtanh.pop %v973
  %976 = vrot.lane.b32.xlu0 %v974, 16
  %v977 = vpop.permute.xlu0 %976
  %v979 = vmul.f32 %v962, %v977
  %v980 = vld [vmem:[%s1 + $0x80] sm:$0xff]
  %982 = vrot.lane.b32.xlu0 %v979, 72
  %v983 = vpop.permute.xlu0 %982
  %v984 = vsel %vm229, %v983, 0
  %986 = vmatpush.msra.mxu0 0.0
  %987 = vmatpush.msra.mxu0 0.0
  %988 = vmatpush.msra.mxu0 0.0
  %989 = vmatpush.msra.mxu0 0.0
  %990 = vmatpush.msra.mxu0 0.0
  %991 = vmatpush.msra.mxu0 0.0
  %992 = vmatpush.msra.mxu0 0.0
  %993 = vmatpush.msra.mxu0 0.0
  %994 = vmatpush.msra.mxu0 0.0
  %995 = vmatpush.msra.mxu0 0.0
  %996 = vmatpush.msra.mxu0 0.0
  %997 = vmatpush.msra.mxu0 0.0
  %998 = vmatpush.msra.mxu0 0.0
  %999 = vmatpush.msra.mxu0 0.0
  %1000 = vmatpush.msra.mxu0 0.0
  %1001 = vmatpush.msra.mxu0 %v980
  %1002 = vmatmul.f32.gmra.mxu0 %v984
  %v1003 = vpop.f32.mrf.mxu0
  %v1004 = vadd.f32 0.0, %v1003
  %1005 = vdwg.mxu0
  %v1006 = vadd.f32 %v906, %v1004
  %v1007 = vadd.f32 %v150, %v957
  %v1008 = vtanh.pop %v1007
  %v1009 = vmul.f32 %v1008, 0.5
  %v1010 = vadd.f32 %v1009, 0.5
  %v1011 = vmul.f32 %v1010, %v921
  %1013 = vrot.lane.b32.xlu0 %v1008, 112
  %v1014 = vpop.permute.xlu0 %1013
  %v1016 = vmul.f32 %v1010, %v1014
  %1018 = vrot.lane.b32.xlu0 %v1016, 8
  %v1019 = vpop.permute.xlu0 %1018
  %v1021 = vadd.f32 %v1011, %v1019
  %v1022 = vtanh.pop %v1021
  %1024 = vrot.lane.b32.xlu0 %v1022, 16
  %v1025 = vpop.permute.xlu0 %1024
  %v1027 = vmul.f32 %v1010, %v1025
  %1029 = vrot.lane.b32.xlu0 %v1027, 104
  %v1030 = vpop.permute.xlu0 %1029
  %1032 = vrot.lane.b32.xlu0 %v979, 80
  %v1033 = vpop.permute.xlu0 %1032
  %v1035 = vsel %vm229, %v1030, %v1033
  %v1037 = vsel %vm180, %v1035, 0
  %1039 = vmatpush.msra.mxu0 0.0
  %1040 = vmatpush.msra.mxu0 0.0
  %1041 = vmatpush.msra.mxu0 0.0
  %1042 = vmatpush.msra.mxu0 0.0
  %1043 = vmatpush.msra.mxu0 0.0
  %1044 = vmatpush.msra.mxu0 0.0
  %1045 = vmatpush.msra.mxu0 0.0
  %1046 = vmatpush.msra.mxu0 0.0
  %1047 = vmatpush.msra.mxu0 0.0
  %1048 = vmatpush.msra.mxu0 0.0
  %1049 = vmatpush.msra.mxu0 0.0
  %1050 = vmatpush.msra.mxu0 0.0
  %1051 = vmatpush.msra.mxu0 0.0
  %1052 = vmatpush.msra.mxu0 0.0
  %1053 = vmatpush.msra.mxu0 %v18
  %1054 = vmatpush.msra.mxu0 %v17
  %1055 = vmatmul.f32.gmra.mxu0 %v1037
  %v1056 = vpop.f32.mrf.mxu0
  %v1057 = vadd.f32 0.0, %v1056
  %1058 = vdwg.mxu0
  %v1059 = vadd.f32 %v1057, %v257
  %v1060 = vtanh.pop %v1059
  %v1061 = vmul.f32 %v1060, 0.5
  %v1062 = vadd.f32 %v1061, 0.5
  %v1063 = vmul.f32 %v1062, %v973
  %1065 = vrot.lane.b32.xlu0 %v1060, 112
  %v1066 = vpop.permute.xlu0 %1065
  %v1068 = vmul.f32 %v1062, %v1066
  %1070 = vrot.lane.b32.xlu0 %v1068, 8
  %v1071 = vpop.permute.xlu0 %1070
  %v1073 = vadd.f32 %v1063, %v1071
  %v1074 = vtanh.pop %v1073
  %1076 = vrot.lane.b32.xlu0 %v1074, 16
  %v1077 = vpop.permute.xlu0 %1076
  %v1079 = vmul.f32 %v1062, %v1077
  %1081 = vrot.lane.b32.xlu0 %v1079, 72
  %v1082 = vpop.permute.xlu0 %1081
  %v1083 = vsel %vm229, %v1082, 0
  %1085 = vmatpush.msra.mxu0 0.0
  %1086 = vmatpush.msra.mxu0 0.0
  %1087 = vmatpush.msra.mxu0 0.0
  %1088 = vmatpush.msra.mxu0 0.0
  %1089 = vmatpush.msra.mxu0 0.0
  %1090 = vmatpush.msra.mxu0 0.0
  %1091 = vmatpush.msra.mxu0 0.0
  %1092 = vmatpush.msra.mxu0 0.0
  %1093 = vmatpush.msra.mxu0 0.0
  %1094 = vmatpush.msra.mxu0 0.0
  %1095 = vmatpush.msra.mxu0 0.0
  %1096 = vmatpush.msra.mxu0 0.0
  %1097 = vmatpush.msra.mxu0 0.0
  %1098 = vmatpush.msra.mxu0 0.0
  %1099 = vmatpush.msra.mxu0 0.0
  %1100 = vmatpush.msra.mxu0 %v29
  %1101 = vmatmul.f32.gmra.mxu0 %v1083
  %v1102 = vpop.f32.mrf.mxu0
  %v1103 = vadd.f32 0.0, %v1102
  %1104 = vdwg.mxu0
  %v1105 = vadd.f32 %v1006, %v1103
  %v1106 = vadd.f32 %v153, %v1057
  %v1107 = vtanh.pop %v1106
  %v1108 = vmul.f32 %v1107, 0.5
  %v1109 = vadd.f32 %v1108, 0.5
  %v1110 = vmul.f32 %v1109, %v1021
  %1112 = vrot.lane.b32.xlu0 %v1107, 112
  %v1113 = vpop.permute.xlu0 %1112
  %v1115 = vmul.f32 %v1109, %v1113
  %1117 = vrot.lane.b32.xlu0 %v1115, 8
  %v1118 = vpop.permute.xlu0 %1117
  %v1120 = vadd.f32 %v1110, %v1118
  %v1121 = vtanh.pop %v1120
  %1123 = vrot.lane.b32.xlu0 %v1121, 16
  %v1124 = vpop.permute.xlu0 %1123
  %v1126 = vmul.f32 %v1109, %v1124
  %1128 = vrot.lane.b32.xlu0 %v1126, 104
  %v1129 = vpop.permute.xlu0 %1128
  %1131 = vrot.lane.b32.xlu0 %v1079, 80
  %v1132 = vpop.permute.xlu0 %1131
  %v1134 = vsel %vm229, %v1129, %v1132
  %v1136 = vsel %vm180, %v1134, 0
  %1138 = vmatpush.msra.mxu0 0.0
  %1139 = vmatpush.msra.mxu0 0.0
  %1140 = vmatpush.msra.mxu0 0.0
  %1141 = vmatpush.msra.mxu0 0.0
  %1142 = vmatpush.msra.mxu0 0.0
  %1143 = vmatpush.msra.mxu0 0.0
  %1144 = vmatpush.msra.mxu0 0.0
  %1145 = vmatpush.msra.mxu0 0.0
  %1146 = vmatpush.msra.mxu0 0.0
  %1147 = vmatpush.msra.mxu0 0.0
  %1148 = vmatpush.msra.mxu0 0.0
  %1149 = vmatpush.msra.mxu0 0.0
  %1150 = vmatpush.msra.mxu0 0.0
  %1151 = vmatpush.msra.mxu0 0.0
  %1152 = vmatpush.msra.mxu0 %v18
  %1153 = vmatpush.msra.mxu0 %v17
  %1154 = vmatmul.f32.gmra.mxu0 %v1136
  %v1155 = vpop.f32.mrf.mxu0
  %v1156 = vadd.f32 0.0, %v1155
  %1157 = vdwg.mxu0
  %v1158 = vadd.f32 %v1156, %v257
  %v1159 = vtanh.pop %v1158
  %v1160 = vmul.f32 %v1159, 0.5
  %v1161 = vadd.f32 %v1160, 0.5
  %v1162 = vmul.f32 %v1161, %v1073
  %1164 = vrot.lane.b32.xlu0 %v1159, 112
  %v1165 = vpop.permute.xlu0 %1164
  %v1167 = vmul.f32 %v1161, %v1165
  %1169 = vrot.lane.b32.xlu0 %v1167, 8
  %v1170 = vpop.permute.xlu0 %1169
  %v1172 = vadd.f32 %v1162, %v1170
  %v1173 = vtanh.pop %v1172
  %1175 = vrot.lane.b32.xlu0 %v1173, 16
  %v1176 = vpop.permute.xlu0 %1175
  %v1178 = vmul.f32 %v1161, %v1176
  %v1179 = vld [vmem:[%s1 + $0x90] sm:$0xff]
  %1181 = vrot.lane.b32.xlu0 %v1178, 72
  %v1182 = vpop.permute.xlu0 %1181
  %v1183 = vsel %vm229, %v1182, 0
  %1185 = vmatpush.msra.mxu0 0.0
  %1186 = vmatpush.msra.mxu0 0.0
  %1187 = vmatpush.msra.mxu0 0.0
  %1188 = vmatpush.msra.mxu0 0.0
  %1189 = vmatpush.msra.mxu0 0.0
  %1190 = vmatpush.msra.mxu0 0.0
  %1191 = vmatpush.msra.mxu0 0.0
  %1192 = vmatpush.msra.mxu0 0.0
  %1193 = vmatpush.msra.mxu0 0.0
  %1194 = vmatpush.msra.mxu0 0.0
  %1195 = vmatpush.msra.mxu0 0.0
  %1196 = vmatpush.msra.mxu0 0.0
  %1197 = vmatpush.msra.mxu0 0.0
  %1198 = vmatpush.msra.mxu0 0.0
  %1199 = vmatpush.msra.mxu0 0.0
  %1200 = vmatpush.msra.mxu0 %v1179
  %1201 = vmatmul.f32.gmra.mxu0 %v1183
  %v1202 = vpop.f32.mrf.mxu0
  %v1203 = vadd.f32 0.0, %v1202
  %1204 = vdwg.mxu0
  %v1205 = vadd.f32 %v1105, %v1203
  %v1206 = vadd.f32 %v156, %v1156
  %v1207 = vtanh.pop %v1206
  %v1208 = vmul.f32 %v1207, 0.5
  %v1209 = vadd.f32 %v1208, 0.5
  %v1210 = vmul.f32 %v1209, %v1120
  %1212 = vrot.lane.b32.xlu0 %v1207, 112
  %v1213 = vpop.permute.xlu0 %1212
  %v1215 = vmul.f32 %v1209, %v1213
  %1217 = vrot.lane.b32.xlu0 %v1215, 8
  %v1218 = vpop.permute.xlu0 %1217
  %v1220 = vadd.f32 %v1210, %v1218
  %v1221 = vtanh.pop %v1220
  %1223 = vrot.lane.b32.xlu0 %v1221, 16
  %v1224 = vpop.permute.xlu0 %1223
  %v1226 = vmul.f32 %v1209, %v1224
  %1228 = vrot.lane.b32.xlu0 %v1226, 104
  %v1229 = vpop.permute.xlu0 %1228
  %1231 = vrot.lane.b32.xlu0 %v1178, 80
  %v1232 = vpop.permute.xlu0 %1231
  %v1234 = vsel %vm229, %v1229, %v1232
  %v1236 = vsel %vm180, %v1234, 0
  %1238 = vmatpush.msra.mxu0 0.0
  %1239 = vmatpush.msra.mxu0 0.0
  %1240 = vmatpush.msra.mxu0 0.0
  %1241 = vmatpush.msra.mxu0 0.0
  %1242 = vmatpush.msra.mxu0 0.0
  %1243 = vmatpush.msra.mxu0 0.0
  %1244 = vmatpush.msra.mxu0 0.0
  %1245 = vmatpush.msra.mxu0 0.0
  %1246 = vmatpush.msra.mxu0 0.0
  %1247 = vmatpush.msra.mxu0 0.0
  %1248 = vmatpush.msra.mxu0 0.0
  %1249 = vmatpush.msra.mxu0 0.0
  %1250 = vmatpush.msra.mxu0 0.0
  %1251 = vmatpush.msra.mxu0 0.0
  %1252 = vmatpush.msra.mxu0 %v18
  %1253 = vmatpush.msra.mxu0 %v17
  %1254 = vmatmul.f32.gmra.mxu0 %v1236
  %v1255 = vpop.f32.mrf.mxu0
  %v1256 = vadd.f32 0.0, %v1255
  %1257 = vdwg.mxu0
  %v1258 = vadd.f32 %v1256, %v257
  %v1259 = vtanh.pop %v1258
  %v1260 = vmul.f32 %v1259, 0.5
  %v1261 = vadd.f32 %v1260, 0.5
  %v1262 = vmul.f32 %v1261, %v1172
  %1264 = vrot.lane.b32.xlu0 %v1259, 112
  %v1265 = vpop.permute.xlu0 %1264
  %v1267 = vmul.f32 %v1261, %v1265
  %1269 = vrot.lane.b32.xlu0 %v1267, 8
  %v1270 = vpop.permute.xlu0 %1269
  %v1272 = vadd.f32 %v1262, %v1270
  %v1273 = vtanh.pop %v1272
  %1275 = vrot.lane.b32.xlu0 %v1273, 16
  %v1276 = vpop.permute.xlu0 %1275
  %v1278 = vmul.f32 %v1261, %v1276
  %v1279 = vld [vmem:[%s1 + $0x98] sm:$0xff]
  %1281 = vrot.lane.b32.xlu0 %v1278, 72
  %v1282 = vpop.permute.xlu0 %1281
  %v1283 = vsel %vm229, %v1282, 0
  %1285 = vmatpush.msra.mxu0 0.0
  %1286 = vmatpush.msra.mxu0 0.0
  %1287 = vmatpush.msra.mxu0 0.0
  %1288 = vmatpush.msra.mxu0 0.0
  %1289 = vmatpush.msra.mxu0 0.0
  %1290 = vmatpush.msra.mxu0 0.0
  %1291 = vmatpush.msra.mxu0 0.0
  %1292 = vmatpush.msra.mxu0 0.0
  %1293 = vmatpush.msra.mxu0 0.0
  %1294 = vmatpush.msra.mxu0 0.0
  %1295 = vmatpush.msra.mxu0 0.0
  %1296 = vmatpush.msra.mxu0 0.0
  %1297 = vmatpush.msra.mxu0 0.0
  %1298 = vmatpush.msra.mxu0 0.0
  %1299 = vmatpush.msra.mxu0 0.0
  %1300 = vmatpush.msra.mxu0 %v1279
  %1301 = vmatmul.f32.gmra.mxu0 %v1283
  %v1302 = vpop.f32.mrf.mxu0
  %v1303 = vadd.f32 0.0, %v1302
  %1304 = vdwg.mxu0
  %v1305 = vadd.f32 %v1205, %v1303
  %v1306 = vadd.f32 %v159, %v1256
  %v1307 = vtanh.pop %v1306
  %v1308 = vmul.f32 %v1307, 0.5
  %v1309 = vadd.f32 %v1308, 0.5
  %v1310 = vmul.f32 %v1309, %v1220
  %1312 = vrot.lane.b32.xlu0 %v1307, 112
  %v1313 = vpop.permute.xlu0 %1312
  %v1315 = vmul.f32 %v1309, %v1313
  %1317 = vrot.lane.b32.xlu0 %v1315, 8
  %v1318 = vpop.permute.xlu0 %1317
  %v1320 = vadd.f32 %v1310, %v1318
  %v1321 = vtanh.pop %v1320
  %1323 = vrot.lane.b32.xlu0 %v1321, 16
  %v1324 = vpop.permute.xlu0 %1323
  %v1326 = vmul.f32 %v1309, %v1324
  %1328 = vrot.lane.b32.xlu0 %v1326, 104
  %v1329 = vpop.permute.xlu0 %1328
  %1331 = vrot.lane.b32.xlu0 %v1278, 80
  %v1332 = vpop.permute.xlu0 %1331
  %v1334 = vsel %vm229, %v1329, %v1332
  %v1336 = vsel %vm180, %v1334, 0
  %1338 = vmatpush.msra.mxu0 0.0
  %1339 = vmatpush.msra.mxu0 0.0
  %1340 = vmatpush.msra.mxu0 0.0
  %1341 = vmatpush.msra.mxu0 0.0
  %1342 = vmatpush.msra.mxu0 0.0
  %1343 = vmatpush.msra.mxu0 0.0
  %1344 = vmatpush.msra.mxu0 0.0
  %1345 = vmatpush.msra.mxu0 0.0
  %1346 = vmatpush.msra.mxu0 0.0
  %1347 = vmatpush.msra.mxu0 0.0
  %1348 = vmatpush.msra.mxu0 0.0
  %1349 = vmatpush.msra.mxu0 0.0
  %1350 = vmatpush.msra.mxu0 0.0
  %1351 = vmatpush.msra.mxu0 0.0
  %1352 = vmatpush.msra.mxu0 %v18
  %1353 = vmatpush.msra.mxu0 %v17
  %1354 = vmatmul.f32.gmra.mxu0 %v1336
  %v1355 = vpop.f32.mrf.mxu0
  %v1356 = vadd.f32 0.0, %v1355
  %1357 = vdwg.mxu0
  %v1358 = vadd.f32 %v1356, %v257
  %v1359 = vtanh.pop %v1358
  %v1360 = vmul.f32 %v1359, 0.5
  %v1361 = vadd.f32 %v1360, 0.5
  %v1362 = vmul.f32 %v1361, %v1272
  %1364 = vrot.lane.b32.xlu0 %v1359, 112
  %v1365 = vpop.permute.xlu0 %1364
  %v1367 = vmul.f32 %v1361, %v1365
  %1369 = vrot.lane.b32.xlu0 %v1367, 8
  %v1370 = vpop.permute.xlu0 %1369
  %v1372 = vadd.f32 %v1362, %v1370
  %v1373 = vtanh.pop %v1372
  %1375 = vrot.lane.b32.xlu0 %v1373, 16
  %v1376 = vpop.permute.xlu0 %1375
  %v1378 = vmul.f32 %v1361, %v1376
  %v1379 = vld [vmem:[%s1 + $0xa0] sm:$0xff]
  %1381 = vrot.lane.b32.xlu0 %v1378, 72
  %v1382 = vpop.permute.xlu0 %1381
  %v1383 = vsel %vm229, %v1382, 0
  %1385 = vmatpush.msra.mxu0 0.0
  %1386 = vmatpush.msra.mxu0 0.0
  %1387 = vmatpush.msra.mxu0 0.0
  %1388 = vmatpush.msra.mxu0 0.0
  %1389 = vmatpush.msra.mxu0 0.0
  %1390 = vmatpush.msra.mxu0 0.0
  %1391 = vmatpush.msra.mxu0 0.0
  %1392 = vmatpush.msra.mxu0 0.0
  %1393 = vmatpush.msra.mxu0 0.0
  %1394 = vmatpush.msra.mxu0 0.0
  %1395 = vmatpush.msra.mxu0 0.0
  %1396 = vmatpush.msra.mxu0 0.0
  %1397 = vmatpush.msra.mxu0 0.0
  %1398 = vmatpush.msra.mxu0 0.0
  %1399 = vmatpush.msra.mxu0 0.0
  %1400 = vmatpush.msra.mxu0 %v1379
  %1401 = vmatmul.f32.gmra.mxu0 %v1383
  %v1402 = vpop.f32.mrf.mxu0
  %v1403 = vadd.f32 0.0, %v1402
  %1404 = vdwg.mxu0
  %v1405 = vadd.f32 %v1305, %v1403
  %v1406 = vadd.f32 %v162, %v1356
  %v1407 = vtanh.pop %v1406
  %v1408 = vmul.f32 %v1407, 0.5
  %v1409 = vadd.f32 %v1408, 0.5
  %v1410 = vmul.f32 %v1409, %v1320
  %1412 = vrot.lane.b32.xlu0 %v1407, 112
  %v1413 = vpop.permute.xlu0 %1412
  %v1415 = vmul.f32 %v1409, %v1413
  %1417 = vrot.lane.b32.xlu0 %v1415, 8
  %v1418 = vpop.permute.xlu0 %1417
  %v1420 = vadd.f32 %v1410, %v1418
  %v1421 = vtanh.pop %v1420
  %1423 = vrot.lane.b32.xlu0 %v1421, 16
  %v1424 = vpop.permute.xlu0 %1423
  %v1426 = vmul.f32 %v1409, %v1424
  %1428 = vrot.lane.b32.xlu0 %v1426, 104
  %v1429 = vpop.permute.xlu0 %1428
  %1431 = vrot.lane.b32.xlu0 %v1378, 80
  %v1432 = vpop.permute.xlu0 %1431
  %v1434 = vsel %vm229, %v1429, %v1432
  %v1436 = vsel %vm180, %v1434, 0
  %1438 = vmatpush.msra.mxu0 0.0
  %1439 = vmatpush.msra.mxu0 0.0
  %1440 = vmatpush.msra.mxu0 0.0
  %1441 = vmatpush.msra.mxu0 0.0
  %1442 = vmatpush.msra.mxu0 0.0
  %1443 = vmatpush.msra.mxu0 0.0
  %1444 = vmatpush.msra.mxu0 0.0
  %1445 = vmatpush.msra.mxu0 0.0
  %1446 = vmatpush.msra.mxu0 0.0
  %1447 = vmatpush.msra.mxu0 0.0
  %1448 = vmatpush.msra.mxu0 0.0
  %1449 = vmatpush.msra.mxu0 0.0
  %1450 = vmatpush.msra.mxu0 0.0
  %1451 = vmatpush.msra.mxu0 0.0
  %1452 = vmatpush.msra.mxu0 %v18
  %1453 = vmatpush.msra.mxu0 %v17
  %1454 = vmatmul.f32.gmra.mxu0 %v1436
  %v1455 = vpop.f32.mrf.mxu0
  %v1456 = vadd.f32 0.0, %v1455
  %1457 = vdwg.mxu0
  %v1458 = vadd.f32 %v1456, %v257
  %v1459 = vtanh.pop %v1458
  %v1460 = vmul.f32 %v1459, 0.5
  %v1461 = vadd.f32 %v1460, 0.5
  %v1462 = vmul.f32 %v1461, %v1372
  %1464 = vrot.lane.b32.xlu0 %v1459, 112
  %v1465 = vpop.permute.xlu0 %1464
  %v1467 = vmul.f32 %v1461, %v1465
  %1469 = vrot.lane.b32.xlu0 %v1467, 8
  %v1470 = vpop.permute.xlu0 %1469
  %v1472 = vadd.f32 %v1462, %v1470
  %v1473 = vtanh.pop %v1472
  %1475 = vrot.lane.b32.xlu0 %v1473, 16
  %v1476 = vpop.permute.xlu0 %1475
  %v1478 = vmul.f32 %v1461, %v1476
  %v1479 = vld [vmem:[%s1 + $0xa8] sm:$0xff]
  %1481 = vrot.lane.b32.xlu0 %v1478, 72
  %v1482 = vpop.permute.xlu0 %1481
  %v1483 = vsel %vm229, %v1482, 0
  %1485 = vmatpush.msra.mxu0 0.0
  %1486 = vmatpush.msra.mxu0 0.0
  %1487 = vmatpush.msra.mxu0 0.0
  %1488 = vmatpush.msra.mxu0 0.0
  %1489 = vmatpush.msra.mxu0 0.0
  %1490 = vmatpush.msra.mxu0 0.0
  %1491 = vmatpush.msra.mxu0 0.0
  %1492 = vmatpush.msra.mxu0 0.0
  %1493 = vmatpush.msra.mxu0 0.0
  %1494 = vmatpush.msra.mxu0 0.0
  %1495 = vmatpush.msra.mxu0 0.0
  %1496 = vmatpush.msra.mxu0 0.0
  %1497 = vmatpush.msra.mxu0 0.0
  %1498 = vmatpush.msra.mxu0 0.0
  %1499 = vmatpush.msra.mxu0 0.0
  %1500 = vmatpush.msra.mxu0 %v1479
  %1501 = vmatmul.f32.gmra.mxu0 %v1483
  %v1502 = vpop.f32.mrf.mxu0
  %v1503 = vadd.f32 0.0, %v1502
  %1504 = vdwg.mxu0
  %v1505 = vadd.f32 %v1405, %v1503
  %v1506 = vadd.f32 %v165, %v1456
  %v1507 = vtanh.pop %v1506
  %v1508 = vmul.f32 %v1507, 0.5
  %v1509 = vadd.f32 %v1508, 0.5
  %v1510 = vmul.f32 %v1509, %v1420
  %1512 = vrot.lane.b32.xlu0 %v1507, 112
  %v1513 = vpop.permute.xlu0 %1512
  %v1515 = vmul.f32 %v1509, %v1513
  %1517 = vrot.lane.b32.xlu0 %v1515, 8
  %v1518 = vpop.permute.xlu0 %1517
  %v1520 = vadd.f32 %v1510, %v1518
  %v1521 = vtanh.pop %v1520
  %1523 = vrot.lane.b32.xlu0 %v1521, 16
  %v1524 = vpop.permute.xlu0 %1523
  %v1526 = vmul.f32 %v1509, %v1524
  %1528 = vrot.lane.b32.xlu0 %v1526, 104
  %v1529 = vpop.permute.xlu0 %1528
  %1531 = vrot.lane.b32.xlu0 %v1478, 80
  %v1532 = vpop.permute.xlu0 %1531
  %v1534 = vsel %vm229, %v1529, %v1532
  %v1536 = vsel %vm180, %v1534, 0
  %1538 = vmatpush.msra.mxu0 0.0
  %1539 = vmatpush.msra.mxu0 0.0
  %1540 = vmatpush.msra.mxu0 0.0
  %1541 = vmatpush.msra.mxu0 0.0
  %1542 = vmatpush.msra.mxu0 0.0
  %1543 = vmatpush.msra.mxu0 0.0
  %1544 = vmatpush.msra.mxu0 0.0
  %1545 = vmatpush.msra.mxu0 0.0
  %1546 = vmatpush.msra.mxu0 0.0
  %1547 = vmatpush.msra.mxu0 0.0
  %1548 = vmatpush.msra.mxu0 0.0
  %1549 = vmatpush.msra.mxu0 0.0
  %1550 = vmatpush.msra.mxu0 0.0
  %1551 = vmatpush.msra.mxu0 0.0
  %1552 = vmatpush.msra.mxu0 %v18
  %1553 = vmatpush.msra.mxu0 %v17
  %1554 = vmatmul.f32.gmra.mxu0 %v1536
  %v1555 = vpop.f32.mrf.mxu0
  %v1556 = vadd.f32 0.0, %v1555
  %1557 = vdwg.mxu0
  %v1558 = vadd.f32 %v1556, %v257
  %v1559 = vtanh.pop %v1558
  %v1560 = vmul.f32 %v1559, 0.5
  %v1561 = vadd.f32 %v1560, 0.5
  %v1562 = vmul.f32 %v1561, %v1472
  %1564 = vrot.lane.b32.xlu0 %v1559, 112
  %v1565 = vpop.permute.xlu0 %1564
  %v1567 = vmul.f32 %v1561, %v1565
  %1569 = vrot.lane.b32.xlu0 %v1567, 8
  %v1570 = vpop.permute.xlu0 %1569
  %v1572 = vadd.f32 %v1562, %v1570
  %v1573 = vtanh.pop %v1572
  %1575 = vrot.lane.b32.xlu0 %v1573, 16
  %v1576 = vpop.permute.xlu0 %1575
  %v1578 = vmul.f32 %v1561, %v1576
  %v1579 = vld [vmem:[%s1 + $0xb0] sm:$0xff]
  %1581 = vrot.lane.b32.xlu0 %v1578, 72
  %v1582 = vpop.permute.xlu0 %1581
  %v1583 = vsel %vm229, %v1582, 0
  %1585 = vmatpush.msra.mxu0 0.0
  %1586 = vmatpush.msra.mxu0 0.0
  %1587 = vmatpush.msra.mxu0 0.0
  %1588 = vmatpush.msra.mxu0 0.0
  %1589 = vmatpush.msra.mxu0 0.0
  %1590 = vmatpush.msra.mxu0 0.0
  %1591 = vmatpush.msra.mxu0 0.0
  %1592 = vmatpush.msra.mxu0 0.0
  %1593 = vmatpush.msra.mxu0 0.0
  %1594 = vmatpush.msra.mxu0 0.0
  %1595 = vmatpush.msra.mxu0 0.0
  %1596 = vmatpush.msra.mxu0 0.0
  %1597 = vmatpush.msra.mxu0 0.0
  %1598 = vmatpush.msra.mxu0 0.0
  %1599 = vmatpush.msra.mxu0 0.0
  %1600 = vmatpush.msra.mxu0 %v1579
  %1601 = vmatmul.f32.gmra.mxu0 %v1583
  %v1602 = vpop.f32.mrf.mxu0
  %v1603 = vadd.f32 0.0, %v1602
  %1604 = vdwg.mxu0
  %v1605 = vadd.f32 %v1505, %v1603
  %v1606 = vadd.f32 %v168, %v1556
  %v1607 = vtanh.pop %v1606
  %v1608 = vmul.f32 %v1607, 0.5
  %v1609 = vadd.f32 %v1608, 0.5
  %v1610 = vmul.f32 %v1609, %v1520
  %1612 = vrot.lane.b32.xlu0 %v1607, 112
  %v1613 = vpop.permute.xlu0 %1612
  %v1615 = vmul.f32 %v1609, %v1613
  %1617 = vrot.lane.b32.xlu0 %v1615, 8
  %v1618 = vpop.permute.xlu0 %1617
  %v1620 = vadd.f32 %v1610, %v1618
  %v1621 = vtanh.pop %v1620
  %1623 = vrot.lane.b32.xlu0 %v1621, 16
  %v1624 = vpop.permute.xlu0 %1623
  %v1626 = vmul.f32 %v1609, %v1624
  %1628 = vrot.lane.b32.xlu0 %v1626, 104
  %v1629 = vpop.permute.xlu0 %1628
  %1631 = vrot.lane.b32.xlu0 %v1578, 80
  %v1632 = vpop.permute.xlu0 %1631
  %v1634 = vsel %vm229, %v1629, %v1632
  %v1636 = vsel %vm180, %v1634, 0
  %1638 = vmatpush.msra.mxu0 0.0
  %1639 = vmatpush.msra.mxu0 0.0
  %1640 = vmatpush.msra.mxu0 0.0
  %1641 = vmatpush.msra.mxu0 0.0
  %1642 = vmatpush.msra.mxu0 0.0
  %1643 = vmatpush.msra.mxu0 0.0
  %1644 = vmatpush.msra.mxu0 0.0
  %1645 = vmatpush.msra.mxu0 0.0
  %1646 = vmatpush.msra.mxu0 0.0
  %1647 = vmatpush.msra.mxu0 0.0
  %1648 = vmatpush.msra.mxu0 0.0
  %1649 = vmatpush.msra.mxu0 0.0
  %1650 = vmatpush.msra.mxu0 0.0
  %1651 = vmatpush.msra.mxu0 0.0
  %1652 = vmatpush.msra.mxu0 %v18
  %1653 = vmatpush.msra.mxu0 %v17
  %1654 = vmatmul.f32.gmra.mxu0 %v1636
  %v1655 = vpop.f32.mrf.mxu0
  %v1656 = vadd.f32 0.0, %v1655
  %1657 = vdwg.mxu0
  %v1658 = vadd.f32 %v1656, %v257
  %v1659 = vtanh.pop %v1658
  %v1660 = vmul.f32 %v1659, 0.5
  %v1661 = vadd.f32 %v1660, 0.5
  %v1662 = vmul.f32 %v1661, %v1572
  %1664 = vrot.lane.b32.xlu0 %v1659, 112
  %v1665 = vpop.permute.xlu0 %1664
  %v1667 = vmul.f32 %v1661, %v1665
  %1669 = vrot.lane.b32.xlu0 %v1667, 8
  %v1670 = vpop.permute.xlu0 %1669
  %v1672 = vadd.f32 %v1662, %v1670
  %v1673 = vtanh.pop %v1672
  %1675 = vrot.lane.b32.xlu0 %v1673, 16
  %v1676 = vpop.permute.xlu0 %1675
  %v1678 = vmul.f32 %v1661, %v1676
  %v1679 = vld [vmem:[%s1 + $0xb8] sm:$0xff]
  %1681 = vrot.lane.b32.xlu0 %v1678, 72
  %v1682 = vpop.permute.xlu0 %1681
  %v1683 = vsel %vm229, %v1682, 0
  %1685 = vmatpush.msra.mxu0 0.0
  %1686 = vmatpush.msra.mxu0 0.0
  %1687 = vmatpush.msra.mxu0 0.0
  %1688 = vmatpush.msra.mxu0 0.0
  %1689 = vmatpush.msra.mxu0 0.0
  %1690 = vmatpush.msra.mxu0 0.0
  %1691 = vmatpush.msra.mxu0 0.0
  %1692 = vmatpush.msra.mxu0 0.0
  %1693 = vmatpush.msra.mxu0 0.0
  %1694 = vmatpush.msra.mxu0 0.0
  %1695 = vmatpush.msra.mxu0 0.0
  %1696 = vmatpush.msra.mxu0 0.0
  %1697 = vmatpush.msra.mxu0 0.0
  %1698 = vmatpush.msra.mxu0 0.0
  %1699 = vmatpush.msra.mxu0 0.0
  %1700 = vmatpush.msra.mxu0 %v1679
  %1701 = vmatmul.f32.gmra.mxu0 %v1683
  %v1702 = vpop.f32.mrf.mxu0
  %v1703 = vadd.f32 0.0, %v1702
  %1704 = vdwg.mxu0
  %v1705 = vadd.f32 %v1605, %v1703
  %v1706 = vadd.f32 %v171, %v1656
  %v1707 = vtanh.pop %v1706
  %v1708 = vmul.f32 %v1707, 0.5
  %v1709 = vadd.f32 %v1708, 0.5
  %v1710 = vmul.f32 %v1709, %v1620
  %1712 = vrot.lane.b32.xlu0 %v1707, 112
  %v1713 = vpop.permute.xlu0 %1712
  %v1715 = vmul.f32 %v1709, %v1713
  %1717 = vrot.lane.b32.xlu0 %v1715, 8
  %v1718 = vpop.permute.xlu0 %1717
  %v1720 = vadd.f32 %v1710, %v1718
  %v1721 = vtanh.pop %v1720
  %1723 = vrot.lane.b32.xlu0 %v1721, 16
  %v1724 = vpop.permute.xlu0 %1723
  %v1726 = vmul.f32 %v1709, %v1724
  %1728 = vrot.lane.b32.xlu0 %v1726, 104
  %v1729 = vpop.permute.xlu0 %1728
  %1731 = vrot.lane.b32.xlu0 %v1678, 80
  %v1732 = vpop.permute.xlu0 %1731
  %v1734 = vsel %vm229, %v1729, %v1732
  %v1736 = vsel %vm180, %v1734, 0
  %1738 = vmatpush.msra.mxu0 0.0
  %1739 = vmatpush.msra.mxu0 0.0
  %1740 = vmatpush.msra.mxu0 0.0
  %1741 = vmatpush.msra.mxu0 0.0
  %1742 = vmatpush.msra.mxu0 0.0
  %1743 = vmatpush.msra.mxu0 0.0
  %1744 = vmatpush.msra.mxu0 0.0
  %1745 = vmatpush.msra.mxu0 0.0
  %1746 = vmatpush.msra.mxu0 0.0
  %1747 = vmatpush.msra.mxu0 0.0
  %1748 = vmatpush.msra.mxu0 0.0
  %1749 = vmatpush.msra.mxu0 0.0
  %1750 = vmatpush.msra.mxu0 0.0
  %1751 = vmatpush.msra.mxu0 0.0
  %1752 = vmatpush.msra.mxu0 %v18
  %1753 = vmatpush.msra.mxu0 %v17
  %1754 = vmatmul.f32.gmra.mxu0 %v1736
  %v1755 = vpop.f32.mrf.mxu0
  %v1756 = vadd.f32 0.0, %v1755
  %1757 = vdwg.mxu0
  %v1758 = vadd.f32 %v1756, %v257
  %v1759 = vtanh.pop %v1758
  %v1760 = vmul.f32 %v1759, 0.5
  %v1761 = vadd.f32 %v1760, 0.5
  %v1762 = vmul.f32 %v1761, %v1672
  %1764 = vrot.lane.b32.xlu0 %v1759, 112
  %v1765 = vpop.permute.xlu0 %1764
  %v1767 = vmul.f32 %v1761, %v1765
  %1769 = vrot.lane.b32.xlu0 %v1767, 8
  %v1770 = vpop.permute.xlu0 %1769
  %v1772 = vadd.f32 %v1762, %v1770
  %v1773 = vtanh.pop %v1772
  %1775 = vrot.lane.b32.xlu0 %v1773, 16
  %v1776 = vpop.permute.xlu0 %1775
  %v1778 = vmul.f32 %v1761, %v1776
  %v1779 = vld [vmem:[%s1 + $0xc0] sm:$0xff]
  %1781 = vrot.lane.b32.xlu0 %v1778, 72
  %v1782 = vpop.permute.xlu0 %1781
  %v1783 = vsel %vm229, %v1782, 0
  %1785 = vmatpush.msra.mxu0 0.0
  %1786 = vmatpush.msra.mxu0 0.0
  %1787 = vmatpush.msra.mxu0 0.0
  %1788 = vmatpush.msra.mxu0 0.0
  %1789 = vmatpush.msra.mxu0 0.0
  %1790 = vmatpush.msra.mxu0 0.0
  %1791 = vmatpush.msra.mxu0 0.0
  %1792 = vmatpush.msra.mxu0 0.0
  %1793 = vmatpush.msra.mxu0 0.0
  %1794 = vmatpush.msra.mxu0 0.0
  %1795 = vmatpush.msra.mxu0 0.0
  %1796 = vmatpush.msra.mxu0 0.0
  %1797 = vmatpush.msra.mxu0 0.0
  %1798 = vmatpush.msra.mxu0 0.0
  %1799 = vmatpush.msra.mxu0 0.0
  %1800 = vmatpush.msra.mxu0 %v1779
  %1801 = vmatmul.f32.gmra.mxu0 %v1783
  %v1802 = vpop.f32.mrf.mxu0
  %v1803 = vadd.f32 0.0, %v1802
  %1804 = vdwg.mxu0
  %v1805 = vadd.f32 %v1705, %v1803
  %v1806 = vadd.f32 %v174, %v1756
  %v1807 = vtanh.pop %v1806
  %v1808 = vmul.f32 %v1807, 0.5
  %v1809 = vadd.f32 %v1808, 0.5
  %v1810 = vmul.f32 %v1809, %v1720
  %1812 = vrot.lane.b32.xlu0 %v1807, 112
  %v1813 = vpop.permute.xlu0 %1812
  %v1815 = vmul.f32 %v1809, %v1813
  %1817 = vrot.lane.b32.xlu0 %v1815, 8
  %v1818 = vpop.permute.xlu0 %1817
  %v1820 = vadd.f32 %v1810, %v1818
  %v1821 = vtanh.pop %v1820
  %1823 = vrot.lane.b32.xlu0 %v1821, 16
  %v1824 = vpop.permute.xlu0 %1823
  %v1826 = vmul.f32 %v1809, %v1824
  %1828 = vrot.lane.b32.xlu0 %v1826, 104
  %v1829 = vpop.permute.xlu0 %1828
  %1831 = vrot.lane.b32.xlu0 %v1778, 80
  %v1832 = vpop.permute.xlu0 %1831
  %v1834 = vsel %vm229, %v1829, %v1832
  %v1836 = vsel %vm180, %v1834, 0
  %1838 = vmatpush.msra.mxu0 0.0
  %1839 = vmatpush.msra.mxu0 0.0
  %1840 = vmatpush.msra.mxu0 0.0
  %1841 = vmatpush.msra.mxu0 0.0
  %1842 = vmatpush.msra.mxu0 0.0
  %1843 = vmatpush.msra.mxu0 0.0
  %1844 = vmatpush.msra.mxu0 0.0
  %1845 = vmatpush.msra.mxu0 0.0
  %1846 = vmatpush.msra.mxu0 0.0
  %1847 = vmatpush.msra.mxu0 0.0
  %1848 = vmatpush.msra.mxu0 0.0
  %1849 = vmatpush.msra.mxu0 0.0
  %1850 = vmatpush.msra.mxu0 0.0
  %1851 = vmatpush.msra.mxu0 0.0
  %1852 = vmatpush.msra.mxu0 %v18
  %1853 = vmatpush.msra.mxu0 %v17
  %1854 = vmatmul.f32.gmra.mxu0 %v1836
  %v1855 = vpop.f32.mrf.mxu0
  %v1856 = vadd.f32 0.0, %v1855
  %1857 = vdwg.mxu0
  %v1858 = vadd.f32 %v1856, %v257
  %v1859 = vtanh.pop %v1858
  %v1860 = vmul.f32 %v1859, 0.5
  %v1861 = vadd.f32 %v1860, 0.5
  %v1862 = vmul.f32 %v1861, %v1772
  %1864 = vrot.lane.b32.xlu0 %v1859, 112
  %v1865 = vpop.permute.xlu0 %1864
  %v1867 = vmul.f32 %v1861, %v1865
  %1869 = vrot.lane.b32.xlu0 %v1867, 8
  %v1870 = vpop.permute.xlu0 %1869
  %v1872 = vadd.f32 %v1862, %v1870
  %v1873 = vtanh.pop %v1872
  %1875 = vrot.lane.b32.xlu0 %v1873, 16
  %v1876 = vpop.permute.xlu0 %1875
  %v1878 = vmul.f32 %v1861, %v1876
  %v1879 = vld [vmem:[%s1 + $0xc8] sm:$0xff]
  %1881 = vrot.lane.b32.xlu0 %v1878, 72
  %v1882 = vpop.permute.xlu0 %1881
  %v1883 = vsel %vm229, %v1882, 0
  %1885 = vmatpush.msra.mxu0 0.0
  %1886 = vmatpush.msra.mxu0 0.0
  %1887 = vmatpush.msra.mxu0 0.0
  %1888 = vmatpush.msra.mxu0 0.0
  %1889 = vmatpush.msra.mxu0 0.0
  %1890 = vmatpush.msra.mxu0 0.0
  %1891 = vmatpush.msra.mxu0 0.0
  %1892 = vmatpush.msra.mxu0 0.0
  %1893 = vmatpush.msra.mxu0 0.0
  %1894 = vmatpush.msra.mxu0 0.0
  %1895 = vmatpush.msra.mxu0 0.0
  %1896 = vmatpush.msra.mxu0 0.0
  %1897 = vmatpush.msra.mxu0 0.0
  %1898 = vmatpush.msra.mxu0 0.0
  %1899 = vmatpush.msra.mxu0 0.0
  %1900 = vmatpush.msra.mxu0 %v1879
  %1901 = vmatmul.f32.gmra.mxu0 %v1883
  %v1902 = vpop.f32.mrf.mxu0
  %v1903 = vadd.f32 0.0, %v1902
  %1904 = vdwg.mxu0
  %v1905 = vadd.f32 %v1805, %v1903
  %v1906 = vadd.f32 %v177, %v1856
  %v1907 = vtanh.pop %v1906
  %v1908 = vmul.f32 %v1907, 0.5
  %v1909 = vadd.f32 %v1908, 0.5
  %v1910 = vmul.f32 %v1909, %v1820
  %1912 = vrot.lane.b32.xlu0 %v1907, 112
  %v1913 = vpop.permute.xlu0 %1912
  %v1915 = vmul.f32 %v1909, %v1913
  %1917 = vrot.lane.b32.xlu0 %v1915, 8
  %v1918 = vpop.permute.xlu0 %1917
  %v1920 = vadd.f32 %v1910, %v1918
  %v1921 = vtanh.pop %v1920
  %1923 = vrot.lane.b32.xlu0 %v1921, 16
  %v1924 = vpop.permute.xlu0 %1923
  %v1926 = vmul.f32 %v1909, %v1924
  %1928 = vrot.lane.b32.xlu0 %v1926, 104
  %v1929 = vpop.permute.xlu0 %1928
  %1931 = vrot.lane.b32.xlu0 %v1878, 80
  %v1932 = vpop.permute.xlu0 %1931
  %v1934 = vsel %vm229, %v1929, %v1932
  %v1936 = vsel %vm180, %v1934, 0
  %1938 = vmatpush.msra.mxu0 0.0
  %1939 = vmatpush.msra.mxu0 0.0
  %1940 = vmatpush.msra.mxu0 0.0
  %1941 = vmatpush.msra.mxu0 0.0
  %1942 = vmatpush.msra.mxu0 0.0
  %1943 = vmatpush.msra.mxu0 0.0
  %1944 = vmatpush.msra.mxu0 0.0
  %1945 = vmatpush.msra.mxu0 0.0
  %1946 = vmatpush.msra.mxu0 0.0
  %1947 = vmatpush.msra.mxu0 0.0
  %1948 = vmatpush.msra.mxu0 0.0
  %1949 = vmatpush.msra.mxu0 0.0
  %1950 = vmatpush.msra.mxu0 0.0
  %1951 = vmatpush.msra.mxu0 0.0
  %1952 = vmatpush.msra.mxu0 %v18
  %1953 = vmatpush.msra.mxu0 %v17
  %1954 = vmatmul.f32.gmra.mxu0 %v1936
  %v1955 = vpop.f32.mrf.mxu0
  %v1956 = vadd.f32 0.0, %v1955
  %1957 = vdwg.mxu0
  %v1958 = vadd.f32 %v1956, %v257
  %v1959 = vtanh.pop %v1958
  %v1960 = vmul.f32 %v1959, 0.5
  %v1961 = vadd.f32 %v1960, 0.5
  %v1962 = vmul.f32 %v1961, %v1872
  %1964 = vrot.lane.b32.xlu0 %v1959, 112
  %v1965 = vpop.permute.xlu0 %1964
  %v1967 = vmul.f32 %v1961, %v1965
  %1969 = vrot.lane.b32.xlu0 %v1967, 8
  %v1970 = vpop.permute.xlu0 %1969
  %v1972 = vadd.f32 %v1962, %v1970
  %v1973 = vtanh.pop %v1972
  %1975 = vrot.lane.b32.xlu0 %v1973, 16
  %v1976 = vpop.permute.xlu0 %1975
  %v1978 = vmul.f32 %v1961, %v1976
  %v1979 = vld [vmem:[%s1 + $0xd0] sm:$0xff]
  %1981 = vrot.lane.b32.xlu0 %v1978, 72
  %v1982 = vpop.permute.xlu0 %1981
  %v1983 = vsel %vm229, %v1982, 0
  %1985 = vmatpush.msra.mxu0 0.0
  %1986 = vmatpush.msra.mxu0 0.0
  %1987 = vmatpush.msra.mxu0 0.0
  %1988 = vmatpush.msra.mxu0 0.0
  %1989 = vmatpush.msra.mxu0 0.0
  %1990 = vmatpush.msra.mxu0 0.0
  %1991 = vmatpush.msra.mxu0 0.0
  %1992 = vmatpush.msra.mxu0 0.0
  %1993 = vmatpush.msra.mxu0 0.0
  %1994 = vmatpush.msra.mxu0 0.0
  %1995 = vmatpush.msra.mxu0 0.0
  %1996 = vmatpush.msra.mxu0 0.0
  %1997 = vmatpush.msra.mxu0 0.0
  %1998 = vmatpush.msra.mxu0 0.0
  %1999 = vmatpush.msra.mxu0 0.0
  %2000 = vmatpush.msra.mxu0 %v1979
  %2001 = vmatmul.f32.gmra.mxu0 %v1983
  %v2002 = vpop.f32.mrf.mxu0
  %v2003 = vadd.f32 0.0, %v2002
  %2004 = vdwg.mxu0
  %v2005 = vadd.f32 %v1905, %v2003
  %v2006 = vmax.f32 %v2005, 0.0
  %2016 = vrot.lane.b32.xlu0 %v21, 56
  %v2017 = vpop.permute.xlu0 %2016
  %2018 = vrot.lane.b32.xlu0 %v22, 56
  %v2019 = vpop.permute.xlu0 %2018
  %2020 = vrot.lane.b32.xlu0 %v23, 56
  %v2021 = vpop.permute.xlu0 %2020
  %2022 = vrot.lane.b32.xlu0 %v24, 56
  %v2023 = vpop.permute.xlu0 %2022
  %2024 = vrot.lane.b32.xlu0 %v25, 56
  %v2025 = vpop.permute.xlu0 %2024
  %2026 = vrot.lane.b32.xlu0 %v26, 56
  %v2027 = vpop.permute.xlu0 %2026
  %2028 = vrot.lane.b32.xlu0 %v27, 56
  %v2029 = vpop.permute.xlu0 %2028
  %2030 = vrot.lane.b32.xlu0 %v28, 56
  %v2031 = vpop.permute.xlu0 %2030
  %2032 = vrot.lane.b32.xlu0 %v29, 56
  %v2033 = vpop.permute.xlu0 %2032
  %2044 = vrot.lane.b32.xlu0 %v179, 56
  %v2045 = vpop.permute.xlu0 %2044
  %vm2047 = vcmask 588800
  %v2049 = vsel %vm2047, %v2006, 0
  %2051 = vmatpush.msra.mxu0 0.0
  %2052 = vmatpush.msra.mxu0 0.0
  %2053 = vmatpush.msra.mxu0 0.0
  %2054 = vmatpush.msra.mxu0 0.0
  %2055 = vmatpush.msra.mxu0 0.0
  %2056 = vmatpush.msra.mxu0 0.0
  %2057 = vmatpush.msra.mxu0 0.0
  %2058 = vmatpush.msra.mxu0 %v2033
  %2059 = vmatpush.msra.mxu0 %v2031
  %2060 = vmatpush.msra.mxu0 %v2029
  %2061 = vmatpush.msra.mxu0 %v2027
  %2062 = vmatpush.msra.mxu0 %v2025
  %2063 = vmatpush.msra.mxu0 %v2023
  %2064 = vmatpush.msra.mxu0 %v2021
  %2065 = vmatpush.msra.mxu0 %v2019
  %2066 = vmatpush.msra.mxu0 %v2017
  %2067 = vmatmul.f32.gmra.mxu0 %v2049
  %v2068 = vpop.f32.mrf.mxu0
  %v2069 = vadd.f32 %v2045, %v2068
  %2070 = vdwg.mxu0
  %vm2071 = vcmask 23552
  %v2072 = vsel %vm2071, %v2069, -inf
  %2073 = vmax.xlane.f32.xlu0 %v2072
  %v2074 = vpop.xlane.xlu0 %2073
  %v2075 = vsub.f32 %v2069, %v2074
  %v2076 = vmul.f32 %v2075, 1.442695
  %v2077 = vpow.pop %v2076
  %v2078 = vsel %vm2071, %v2077, 0.0
  %2079 = vadd.xlane.f32.xlu0 %v2078
  %v2080 = vpop.xlane.xlu0 %2079
  %v2081 = vrcp.pop %v2080
  %v2082 = vmul.f32 %v2080, %v2081
  %v2083 = vsub.f32 1.0, %v2082
  %v2084 = vmul.f32 %v2081, %v2083
  %v2085 = vadd.f32 %v2081, %v2084
  %vm2086 = vweird.f32 %v2080
  %vm2087 = vweird.f32 %v2081
  %vm2088 = vmor %vm2086, %vm2087
  %v2089 = vsel %vm2088, %v2081, %v2085
  %v2090 = vand.u32 2147483647, %v2080
  %vm2091 = vcmp.eq.f32.partialorder %v2090, 8.507059e+37
  %v2092 = vand.u32 %v2080, 2147483648
  %v2093 = vor.u32 1.1754944e-38, %v2092
  %v2094 = vsel %vm2091, %v2093, %v2089
  %v2095 = vmul.f32 %v2077, %v2094
  %2096 = vst.msk [vmem:[%s2] sm:$0xff] %vm2071, %v2095
  // Predicated region
  $region10: #{tpu_custom_call.1} parent=0 // pred_check
    _
  $region11: #{tpu_custom_call.1} parent=0 // pred_check_branch
    %2098 = sbr.rel (0) target = $region13
  $region12: #{tpu_custom_call.1} parent=0 // pred_region
    _
  $region13: #{tpu_custom_call.1} parent=0 // pred_fallthru
    _
  // Predicated region
  $region14: #{tpu_custom_call.1} parent=0 // pred_check
    _
  $region15: #{tpu_custom_call.1} parent=0 // pred_check_branch
    %2100 = sbr.rel (0) target = $region17
  $region16: #{tpu_custom_call.1} parent=0 // pred_region
    _
  $region17: #{tpu_custom_call.1} parent=0 // pred_fallthru
    _

</llo_original>
